<compile_context>
chip_gen: v7x
topology: tpu7x:2x2x1
jax: 0.10.0
libtpu: 0.0.40
codegen_flags: <defaults>
</compile_context>

<pallas_src>
import functools

import jax
import jax.numpy as jnp
from jax import lax
from jax.experimental import pallas as pl
from jax.experimental.pallas import tpu as pltpu

_C = 64       # conv channels
_K = 5        # conv kernel size
_PAD = _K // 2
_H1 = 512     # fc1 width (500 lane-padded)
_H2 = 128     # fc2 width (100 lane-padded)


def _round_up(x, m):
    return (x + m - 1) // m * m


# ----------------------------------------------------------------------------
# Fused conv stack: 3 x [Conv1d+ReLU -> Conv1d+Dropout(eval)+ReLU -> MaxPool1d(3,2,1)]
# ----------------------------------------------------------------------------
def _conv_stack_kernel(x_ref, wf_ref, bf_ref, wr_ref, br_ref, o_ref,
                       padA, padB, padC, padD, colA, colB, poolS,
                       *, L, Cin, Bt):
    """Whole conv stack for Bt samples, entirely in VMEM.

    x_ref:  (Bt, L, Cin)           wf_ref: (K*Cin, 64)   bf_ref: (1, 64)
    wr_ref: (5, K*64, 64)          br_ref: (5, 1, 64)    o_ref:  (Bt, L//8, 64)
    padA: (L+4, Cin)  padB: (L+4, 64)  padC: (L//2+4, 64)  padD: (L//4+4, 64)
    colA: (L, K*Cin)  colB: (L, K*64)  poolS: (L+1, 64)
    """
    f32 = jnp.float32

    # Zero ONLY the pad rows (not whole scratches).  Interior rows are fully overwritten
    # on every use.  Done every grid step (cheap) so it stays correct when the "parallel"
    # batch axis is split across TensorCores (a program_id==0 guard would not be).
    zc_in = jnp.zeros((_PAD, Cin), f32)
    zc = jnp.zeros((_PAD, _C), f32)
    padA[0:_PAD, :] = zc_in
    padA[L + _PAD:L + 2 * _PAD, :] = zc_in
    padB[0:_PAD, :] = zc
    padB[L + _PAD:L + 2 * _PAD, :] = zc
    padC[0:_PAD, :] = zc
    padC[L // 2 + _PAD:L // 2 + 2 * _PAD, :] = zc
    padD[0:_PAD, :] = zc
    padD[L // 4 + _PAD:L // 4 + 2 * _PAD, :] = zc
    poolS[0:1, :] = jnp.zeros((1, _C), f32)

    def conv_relu(pad_ref, col_ref, Lc, Cc, src, w, b):
        # "same" Conv1d(k=5, p=2) + ReLU as ONE MXU matmul over an in-VMEM im2col slab.
        pad_ref[pl.ds(_PAD, Lc), :] = src
        for k in range(_K):
            col_ref[0:Lc, k * Cc:(k + 1) * Cc] = pad_ref[pl.ds(k, Lc), :]
        acc = jnp.dot(col_ref[0:Lc, 0:_K * Cc], w,
                      preferred_element_type=jnp.float32)
        return jnp.maximum(acc + b, 0.0)

    def pool(Lc, src):
        # MaxPool1d(kernel=3, stride=2, padding=1); src >= 0 (post-ReLU) so the zero pad
        # row is neutral for the max.
        Lo = Lc // 2
        poolS[pl.ds(1, Lc), :] = src
        a = poolS[pl.ds(0, Lo, stride=2), :]   # positions 2i-1 (row 0 = zero pad at i=0)
        b = poolS[pl.ds(1, Lo, stride=2), :]   # positions 2i
        c = poolS[pl.ds(2, Lo, stride=2), :]   # positions 2i+1
        return jnp.maximum(jnp.maximum(a, b), c)

    for s in range(Bt):                        # static unroll over samples in this tile
        # ---- Block 1 ----
        h = conv_relu(padA, colA, L, Cin, x_ref[s], wf_ref[...], bf_ref[...])
        h = conv_relu(padB, colB, L, _C, h, wr_ref[0], br_ref[0])
        h = pool(L, h)                         # (L/2, 64)
        # ---- Block 2 ----
        h = conv_relu(padC, colB, L // 2, _C, h, wr_ref[1], br_ref[1])
        h = conv_relu(padC, colB, L // 2, _C, h, wr_ref[2], br_ref[2])
        h = pool(L // 2, h)                    # (L/4, 64)
        # ---- Block 3 ----
        h = conv_relu(padD, colB, L // 4, _C, h, wr_ref[3], br_ref[3])
        h = conv_relu(padD, colB, L // 4, _C, h, wr_ref[4], br_ref[4])
        h = pool(L // 4, h)                    # (L/8, 64)
        o_ref[s] = h.astype(o_ref.dtype)


def _pick_batch_tile(n):
    # Largest divisor of n in {8,4,2} that still leaves >= 2 grid steps (so both
    # TensorCores get work on megacore parts); otherwise 1 sample per step.
    for bt in (8, 4, 2):
        if n % bt == 0 and n // bt >= 2:
            return bt
    return 1


def conv_stack_pallas(x_nlc, conv_params):
    """x_nlc: (N, L, Cin) channels-last -> (N, L//8, 64).  One fused pallas_call."""
    N, L, Cin = x_nlc.shape
    assert L % 8 == 0, "input_size must be divisible by 8 (three stride-2 pools)"
    wf, bf = conv_params["w_first"], conv_params["b_first"]
    wr, br = conv_params["w_rest"], conv_params["b_rest"]
    L8 = L // 8
    Bt = _pick_batch_tile(N)

    flops = 2 * N * _K * _C * (L * Cin + L * _C + 2 * (L // 2) * _C + 2 * (L // 4) * _C)
    bytes_accessed = 4 * (N * L * Cin + N * L8 * _C
                          + wf.size + bf.size + wr.size + br.size)

    return pl.pallas_call(
        functools.partial(_conv_stack_kernel, L=L, Cin=Cin, Bt=Bt),
        out_shape=jax.ShapeDtypeStruct((N, L8, _C), jnp.float32),
        grid=(N // Bt,),
        in_specs=[
            pl.BlockSpec((Bt, L, Cin), lambda n: (n, 0, 0)),
            pl.BlockSpec((_K * Cin, _C), lambda n: (0, 0)),      # weights stay resident
            pl.BlockSpec((1, _C), lambda n: (0, 0)),
            pl.BlockSpec((5, _K * _C, _C), lambda n: (0, 0, 0)),
            pl.BlockSpec((5, 1, _C), lambda n: (0, 0, 0)),
        ],
        out_specs=pl.BlockSpec((Bt, L8, _C), lambda n: (n, 0, 0)),
        scratch_shapes=[
            pltpu.VMEM((L + _K - 1, Cin), jnp.float32),       # padA: block1 conv1 input
            pltpu.VMEM((L + _K - 1, _C), jnp.float32),        # padB: block1 conv2 input
            pltpu.VMEM((L // 2 + _K - 1, _C), jnp.float32),   # padC: block2 convs
            pltpu.VMEM((L // 4 + _K - 1, _C), jnp.float32),   # padD: block3 convs
            pltpu.VMEM((L, _K * Cin), jnp.float32),           # colA: im2col, block1 conv1
            pltpu.VMEM((L, _K * _C), jnp.float32),            # colB: im2col, 64-ch convs
            pltpu.VMEM((L + 1, _C), jnp.float32),             # poolS: padded pool input
        ],
        compiler_params=pltpu.CompilerParams(
            dimension_semantics=("parallel",),
            vmem_limit_bytes=32 * 1024 * 1024),                # safe on v5e/v6e/v7x
        cost_estimate=pl.CostEstimate(flops=flops, transcendentals=0,
                                      bytes_accessed=bytes_accessed),
    )(x_nlc, wf, bf, wr, br)


# ----------------------------------------------------------------------------
# Fused FC head: Linear(Din,500)+ReLU -> Linear(500,100)+ReLU -> Linear(100,n_classes)
# ----------------------------------------------------------------------------
def _fc_head_kernel(x_ref, w1_ref, b1_ref, w2_ref, b2_ref, w3_ref, b3_ref,
                    o_ref, acc_ref):
    """fc1 (K-tiled, f32 accumulator) -> ReLU -> fc2 -> ReLU -> fc3, all in VMEM."""
    k = pl.program_id(1)

    @pl.when(k == 0)
    def _():
        acc_ref[...] = jnp.zeros_like(acc_ref)

    acc_ref[...] += jnp.dot(x_ref[...], w1_ref[...],
                            preferred_element_type=jnp.float32)

    @pl.when(k == pl.num_programs(1) - 1)
    def _():
        h = jnp.maximum(acc_ref[...] + b1_ref[...], 0.0)
        h = jnp.dot(h, w2_ref[...], preferred_element_type=jnp.float32) + b2_ref[...]
        h = jnp.maximum(h, 0.0)
        h = jnp.dot(h, w3_ref[...], preferred_element_type=jnp.float32) + b3_ref[...]
        o_ref[...] = h.astype(o_ref.dtype)


def _pick_m_tile(m):
    if m <= 8:
        return m
    # >= 2 grid steps when possible (megacore), row tiles multiple of 8, capped at 256.
    return min(m, min(256, _round_up(pl.cdiv(m, 2), 8)))


def _pick_k_tile(din):
    # Exact divisor so the reduction axis never has a partial (garbage-padded) tile.
    if din <= 4096:
        return din
    for cand in (4096, 2048, 1024, 512, 256, 128, 64, 8):
        if din % cand == 0:
            return cand
    return din


def fc_head_pallas(x, fc):
    """x: (M, Din) -> (M, 128-padded logits).  All three Linear layers in one call."""
    M, Din = x.shape
    w1, b1 = fc["w1"], fc["b1"]
    w2, b2 = fc["w2"], fc["b2"]
    w3, b3 = fc["w3"], fc["b3"]
    NOUT = w3.shape[1]
    assert w1.shape[0] == Din
    TM = _pick_m_tile(M)
    TK = _pick_k_tile(Din)

    flops = 2 * M * (Din * _H1 + _H1 * _H2 + _H2 * NOUT)
    bytes_accessed = 4 * (M * Din + M * NOUT + w1.size + w2.size + w3.size
                          + b1.size + b2.size + b3.size)

    return pl.pallas_call(
        _fc_head_kernel,
        out_shape=jax.ShapeDtypeStruct((M, NOUT), jnp.float32),
        grid=(pl.cdiv(M, TM), Din // TK),
        in_specs=[
            pl.BlockSpec((TM, TK), lambda i, kk: (i, kk)),
            pl.BlockSpec((TK, _H1), lambda i, kk: (kk, 0)),     # fc1 weight, K-tiled
            pl.BlockSpec((1, _H1), lambda i, kk: (0, 0)),
            pl.BlockSpec((_H1, _H2), lambda i, kk: (0, 0)),     # small weights resident
            pl.BlockSpec((1, _H2), lambda i, kk: (0, 0)),
            pl.BlockSpec((_H2, NOUT), lambda i, kk: (0, 0)),
            pl.BlockSpec((1, NOUT), lambda i, kk: (0, 0)),
        ],
        out_specs=pl.BlockSpec((TM, NOUT), lambda i, kk: (i, 0)),
        scratch_shapes=[pltpu.VMEM((TM, _H1), jnp.float32)],    # fc1 accumulator
        compiler_params=pltpu.CompilerParams(
            dimension_semantics=("parallel", "arbitrary"),
            vmem_limit_bytes=32 * 1024 * 1024),
        cost_estimate=pl.CostEstimate(flops=flops, transcendentals=0,
                                      bytes_accessed=bytes_accessed),
    )(x, w1, b1, w2, b2, w3, b3)


# ----------------------------------------------------------------------------
# Parameter construction (deterministic, synthetic)
# ----------------------------------------------------------------------------
def make_params(key, in_channels, input_size, n_classes):
    assert input_size % 8 == 0
    ks = jax.random.split(key, 16)

    def rnd(k, shape, scale=0.05):
        return scale * jax.random.normal(k, shape, jnp.float32)

    # Conv weights in im2col-matmul layout: row index = tap_k * Cin + ci.
    # TODO(synk): real torch Conv1d weights are (Cout, Cin, K); transpose to (K, Cin, Cout)
    # before the reshape below when loading a checkpoint.
    w_first = rnd(ks[0], (_K, in_channels, _C)).reshape(_K * in_channels, _C)
    b_first = rnd(ks[1], (1, _C), 0.02)
    w_rest = jnp.stack(
        [rnd(ks[2 + i], (_K, _C, _C)).reshape(_K * _C, _C) for i in range(5)])
    b_rest = rnd(ks[7], (5, 1, _C), 0.02)

    L8 = input_size // 8
    din = _C * L8
    # fc1 generated in torch flatten order (row = c*L8 + l) then row-permuted ONCE to the
    # channels-last flatten order (row = l*C + c) emitted by the conv stack, so the forward
    # pass needs no activation transpose before Flatten.
    w_fc1 = rnd(ks[8], (din, 500))
    w_fc1 = w_fc1.reshape(_C, L8, 500).transpose(1, 0, 2).reshape(din, 500)
    b_fc1 = rnd(ks[9], (500,), 0.02)
    w_fc2 = rnd(ks[10], (500, 100))
    b_fc2 = rnd(ks[11], (100,), 0.02)
    w_fc3 = rnd(ks[12], (100, n_classes))
    b_fc3 = rnd(ks[13], (n_classes,), 0.02)

    # Lane-dense padding: 500->512, 100->128, n_classes->multiple of 128.
    # Extra rows/cols are zero, so the first n_classes logits are unchanged.
    nout = _round_up(max(n_classes, 1), 128)
    fc = {
        "w1": jnp.pad(w_fc1, ((0, 0), (0, _H1 - 500))),
        "b1": jnp.pad(b_fc1, (0, _H1 - 500)).reshape(1, _H1),
        "w2": jnp.pad(w_fc2, ((0, _H1 - 500), (0, _H2 - 100))),
        "b2": jnp.pad(b_fc2, (0, _H2 - 100)).reshape(1, _H2),
        "w3": jnp.pad(w_fc3, ((0, _H2 - 100), (0, nout - n_classes))),
        "b3": jnp.pad(b_fc3, (0, nout - n_classes)).reshape(1, nout),
    }
    conv = {"w_first": w_first, "b_first": b_first, "w_rest": w_rest, "b_rest": b_rest}
    return {"conv": conv, "fc": fc}


# ----------------------------------------------------------------------------
# Forward pass (Pallas) and pure-JAX reference
# ----------------------------------------------------------------------------
def yaonet_forward(params, x_ncl, *, n_classes):
    # PyTorch NCL -> channels-last NLC once, on the small raw input.
    x = jnp.transpose(x_ncl, (0, 2, 1)).astype(jnp.float32)
    feats = conv_stack_pallas(x, params["conv"])            # (N, L/8, 64)
    feats = feats.reshape(feats.shape[0], -1)               # channels-last flatten
    logits = fc_head_pallas(feats, params["fc"])            # (N, 128-padded)
    return logits[:, :n_classes]


def _ref_conv_relu(x, w2d, b):
    n, l, cc = x.shape
    k = w2d.shape[0] // cc
    xp = jnp.pad(x, ((0, 0), (k // 2, k // 2), (0, 0)))
    cols = jnp.concatenate([xp[:, i:i + l, :] for i in range(k)], axis=-1)
    out = jnp.dot(cols.reshape(n * l, k * cc), w2d,
                  precision=lax.Precision.HIGHEST) + b.reshape(1, -1)
    return jnp.maximum(out, 0.0).reshape(n, l, -1)


def _ref_pool(x):
    n, l, c = x.shape
    lo = l // 2
    xp = jnp.pad(x, ((0, 0), (1, 1), (0, 0)))    # zero pad safe post-ReLU
    a = xp[:, 0:2 * lo:2, :]
    b = xp[:, 1:2 * lo + 1:2, :]
    cc = xp[:, 2:2 * lo + 2:2, :]
    return jnp.maximum(jnp.maximum(a, b), cc)


def reference_forward(params, x_ncl, *, n_classes):
    conv, fc = params["conv"], params["fc"]
    x = jnp.transpose(x_ncl, (0, 2, 1)).astype(jnp.float32)
    x = _ref_conv_relu(x, conv["w_first"], conv["b_first"])
    x = _ref_conv_relu(x, conv["w_rest"][0], conv["b_rest"][0])
    x = _ref_pool(x)
    x = _ref_conv_relu(x, conv["w_rest"][1], conv["b_rest"][1])
    x = _ref_conv_relu(x, conv["w_rest"][2], conv["b_rest"][2])
    x = _ref_pool(x)
    x = _ref_conv_relu(x, conv["w_rest"][3], conv["b_rest"][3])
    x = _ref_conv_relu(x, conv["w_rest"][4], conv["b_rest"][4])
    x = _ref_pool(x)
    x = x.reshape(x.shape[0], -1)
    h = jnp.maximum(jnp.dot(x, fc["w1"], precision=lax.Precision.HIGHEST) + fc["b1"], 0.0)
    h = jnp.maximum(jnp.dot(h, fc["w2"], precision=lax.Precision.HIGHEST) + fc["b2"], 0.0)
    h = jnp.dot(h, fc["w3"], precision=lax.Precision.HIGHEST) + fc["b3"]
    return h[:, :n_classes]


if __name__ == "__main__":
    N, Cin, L, n_classes = 2, 4, 16, 10
    key = jax.random.PRNGKey(0)
    k_param, k_x = jax.random.split(key)
    params = make_params(k_param, Cin, L, n_classes)
    x = jax.random.normal(k_x, (N, Cin, L), jnp.float32)   # NCL, like PyTorch Conv1d input

    fwd = jax.jit(functools.partial(yaonet_forward, n_classes=n_classes))
    out = jax.block_until_ready(fwd(params, x))
    assert out.shape == (N, n_classes), out.shape
    assert bool(jnp.all(jnp.isfinite(out)))

    ref = reference_forward(params, x, n_classes=n_classes)
    err = float(jnp.max(jnp.abs(out - ref)))
    # In-kernel f32 dots run through bf16 MXU passes at default precision; allow for that
    # against the HIGHEST-precision reference.
    tol = 3e-3 + 3e-2 * float(jnp.max(jnp.abs(ref)))
    assert err < tol, f"max abs error vs reference = {err} (tol {tol})"
    print("KERNEL_OK")
</pallas_src>

<mosaic_0001>
module attributes {stable_mosaic.version = 11 : i64} {
  func.func @_conv_stack_kernel(%arg0: i32, %arg1: memref<1x16x4xf32, #tpu.memory_space<vmem>>, %arg2: memref<20x64xf32, #tpu.memory_space<vmem>>, %arg3: memref<1x64xf32, #tpu.memory_space<vmem>>, %arg4: memref<5x320x64xf32, #tpu.memory_space<vmem>>, %arg5: memref<5x1x64xf32, #tpu.memory_space<vmem>>, %arg6: memref<1x2x64xf32, #tpu.memory_space<vmem>>, %arg7: memref<20x4xf32, #tpu.memory_space<vmem>>, %arg8: memref<20x64xf32, #tpu.memory_space<vmem>>, %arg9: memref<12x64xf32, #tpu.memory_space<vmem>>, %arg10: memref<8x64xf32, #tpu.memory_space<vmem>>, %arg11: memref<16x20xf32, #tpu.memory_space<vmem>>, %arg12: memref<16x320xf32, #tpu.memory_space<vmem>>, %arg13: memref<17x64xf32, #tpu.memory_space<vmem>>) attributes {dimension_semantics = [#tpu.dimension_semantics<parallel>], iteration_bounds = array<i64: 2>, scalar_prefetch = 0 : i64, scratch_operands = 7 : i64, tpu.core_type = #tpu.core_type<tc>, window_params = [{transform_indices = @transform_0, window_bounds = array<i64: 1, 16, 4>}, {pipeline_mode = #tpu.pipeline_mode<synchronous>, transform_indices = @transform_1, window_bounds = array<i64: 20, 64>}, {pipeline_mode = #tpu.pipeline_mode<synchronous>, transform_indices = @transform_2, window_bounds = array<i64: 1, 64>}, {pipeline_mode = #tpu.pipeline_mode<synchronous>, transform_indices = @transform_3, window_bounds = array<i64: 5, 320, 64>}, {pipeline_mode = #tpu.pipeline_mode<synchronous>, transform_indices = @transform_4, window_bounds = array<i64: 5, 1, 64>}, {transform_indices = @transform_5, window_bounds = array<i64: 1, 2, 64>}]} {
    %cst = arith.constant 0.000000e+00 : f32
    %0 = vector.broadcast %cst : f32 to vector<2x4xf32>
    %cst_0 = arith.constant 0.000000e+00 : f32
    %1 = vector.broadcast %cst_0 : f32 to vector<2x64xf32>
    %c0 = arith.constant 0 : index
    %c0_1 = arith.constant 0 : index
    %2 = vector.load %arg7[%c0, %c0_1] : memref<20x4xf32, #tpu.memory_space<vmem>>, vector<2x4xf32>
    tpu.vector_store %arg7[%c0, %c0_1], %0 {strides = array<i32>} : memref<20x4xf32, #tpu.memory_space<vmem>>, vector<2x4xf32>,
    %c18 = arith.constant 18 : index
    %c0_2 = arith.constant 0 : index
    %3 = vector.load %arg7[%c18, %c0_2] : memref<20x4xf32, #tpu.memory_space<vmem>>, vector<2x4xf32>
    tpu.vector_store %arg7[%c18, %c0_2], %0 {strides = array<i32>} : memref<20x4xf32, #tpu.memory_space<vmem>>, vector<2x4xf32>,
    %c0_3 = arith.constant 0 : index
    %c0_4 = arith.constant 0 : index
    %4 = vector.load %arg8[%c0_3, %c0_4] : memref<20x64xf32, #tpu.memory_space<vmem>>, vector<2x64xf32>
    tpu.vector_store %arg8[%c0_3, %c0_4], %1 {strides = array<i32>} : memref<20x64xf32, #tpu.memory_space<vmem>>, vector<2x64xf32>,
    %c18_5 = arith.constant 18 : index
    %c0_6 = arith.constant 0 : index
    %5 = vector.load %arg8[%c18_5, %c0_6] : memref<20x64xf32, #tpu.memory_space<vmem>>, vector<2x64xf32>
    tpu.vector_store %arg8[%c18_5, %c0_6], %1 {strides = array<i32>} : memref<20x64xf32, #tpu.memory_space<vmem>>, vector<2x64xf32>,
    %c0_7 = arith.constant 0 : index
    %c0_8 = arith.constant 0 : index
    %6 = vector.load %arg9[%c0_7, %c0_8] : memref<12x64xf32, #tpu.memory_space<vmem>>, vector<2x64xf32>
    tpu.vector_store %arg9[%c0_7, %c0_8], %1 {strides = array<i32>} : memref<12x64xf32, #tpu.memory_space<vmem>>, vector<2x64xf32>,
    %c10 = arith.constant 10 : index
    %c0_9 = arith.constant 0 : index
    %7 = vector.load %arg9[%c10, %c0_9] : memref<12x64xf32, #tpu.memory_space<vmem>>, vector<2x64xf32>
    tpu.vector_store %arg9[%c10, %c0_9], %1 {strides = array<i32>} : memref<12x64xf32, #tpu.memory_space<vmem>>, vector<2x64xf32>,
    %c0_10 = arith.constant 0 : index
    %c0_11 = arith.constant 0 : index
    %8 = vector.load %arg10[%c0_10, %c0_11] : memref<8x64xf32, #tpu.memory_space<vmem>>, vector<2x64xf32>
    tpu.vector_store %arg10[%c0_10, %c0_11], %1 {strides = array<i32>} : memref<8x64xf32, #tpu.memory_space<vmem>>, vector<2x64xf32>,
    %c6 = arith.constant 6 : index
    %c0_12 = arith.constant 0 : index
    %9 = vector.load %arg10[%c6, %c0_12] : memref<8x64xf32, #tpu.memory_space<vmem>>, vector<2x64xf32>
    tpu.vector_store %arg10[%c6, %c0_12], %1 {strides = array<i32>} : memref<8x64xf32, #tpu.memory_space<vmem>>, vector<2x64xf32>,
    %cst_13 = arith.constant 0.000000e+00 : f32
    %10 = vector.broadcast %cst_13 : f32 to vector<1x64xf32>
    %c0_14 = arith.constant 0 : index
    %c0_15 = arith.constant 0 : index
    %11 = vector.load %arg13[%c0_14, %c0_15] : memref<17x64xf32, #tpu.memory_space<vmem>>, vector<1x64xf32>
    tpu.vector_store %arg13[%c0_14, %c0_15], %10 {strides = array<i32>} : memref<17x64xf32, #tpu.memory_space<vmem>>, vector<1x64xf32>,
    %c0_16 = arith.constant 0 : index
    %c0_17 = arith.constant 0 : index
    %c0_18 = arith.constant 0 : index
    %12 = vector.load %arg1[%c0_16, %c0_17, %c0_18] : memref<1x16x4xf32, #tpu.memory_space<vmem>>, vector<1x16x4xf32>
    %13 = vector.shape_cast %12 : vector<1x16x4xf32> to vector<16x4xf32>
    %c0_19 = arith.constant 0 : index
    %c0_20 = arith.constant 0 : index
    %14 = vector.load %arg2[%c0_19, %c0_20] : memref<20x64xf32, #tpu.memory_space<vmem>>, vector<20x64xf32>
    %c0_21 = arith.constant 0 : index
    %c0_22 = arith.constant 0 : index
    %15 = vector.load %arg3[%c0_21, %c0_22] : memref<1x64xf32, #tpu.memory_space<vmem>>, vector<1x64xf32>
    %c2 = arith.constant 2 : index
    %c0_23 = arith.constant 0 : index
    %16 = vector.load %arg7[%c2, %c0_23] : memref<20x4xf32, #tpu.memory_space<vmem>>, vector<16x4xf32>
    tpu.vector_store %arg7[%c2, %c0_23], %13 {strides = array<i32>} : memref<20x4xf32, #tpu.memory_space<vmem>>, vector<16x4xf32>,
    %c0_24 = arith.constant 0 : index
    %c0_25 = arith.constant 0 : index
    %17 = vector.load %arg7[%c0_24, %c0_25] : memref<20x4xf32, #tpu.memory_space<vmem>>, vector<16x4xf32>
    %c0_26 = arith.constant 0 : index
    %c0_27 = arith.constant 0 : index
    %18 = vector.load %arg11[%c0_26, %c0_27] : memref<16x20xf32, #tpu.memory_space<vmem>>, vector<16x4xf32>
    tpu.vector_store %arg11[%c0_26, %c0_27], %17 {strides = array<i32>} : memref<16x20xf32, #tpu.memory_space<vmem>>, vector<16x4xf32>,
    %c1 = arith.constant 1 : index
    %c0_28 = arith.constant 0 : index
    %19 = vector.load %arg7[%c1, %c0_28] : memref<20x4xf32, #tpu.memory_space<vmem>>, vector<16x4xf32>
    %c0_29 = arith.constant 0 : index
    %c4 = arith.constant 4 : index
    %20 = vector.load %arg11[%c0_29, %c4] : memref<16x20xf32, #tpu.memory_space<vmem>>, vector<16x4xf32>
    tpu.vector_store %arg11[%c0_29, %c4], %19 {strides = array<i32>} : memref<16x20xf32, #tpu.memory_space<vmem>>, vector<16x4xf32>,
    %c2_30 = arith.constant 2 : index
    %c0_31 = arith.constant 0 : index
    %21 = vector.load %arg7[%c2_30, %c0_31] : memref<20x4xf32, #tpu.memory_space<vmem>>, vector<16x4xf32>
    %c0_32 = arith.constant 0 : index
    %c8 = arith.constant 8 : index
    %22 = vector.load %arg11[%c0_32, %c8] : memref<16x20xf32, #tpu.memory_space<vmem>>, vector<16x4xf32>
    tpu.vector_store %arg11[%c0_32, %c8], %21 {strides = array<i32>} : memref<16x20xf32, #tpu.memory_space<vmem>>, vector<16x4xf32>,
    %c3 = arith.constant 3 : index
    %c0_33 = arith.constant 0 : index
    %23 = vector.load %arg7[%c3, %c0_33] : memref<20x4xf32, #tpu.memory_space<vmem>>, vector<16x4xf32>
    %c0_34 = arith.constant 0 : index
    %c12 = arith.constant 12 : index
    %24 = vector.load %arg11[%c0_34, %c12] : memref<16x20xf32, #tpu.memory_space<vmem>>, vector<16x4xf32>
    tpu.vector_store %arg11[%c0_34, %c12], %23 {strides = array<i32>} : memref<16x20xf32, #tpu.memory_space<vmem>>, vector<16x4xf32>,
    %c4_35 = arith.constant 4 : index
    %c0_36 = arith.constant 0 : index
    %25 = vector.load %arg7[%c4_35, %c0_36] : memref<20x4xf32, #tpu.memory_space<vmem>>, vector<16x4xf32>
    %c0_37 = arith.constant 0 : index
    %c16 = arith.constant 16 : index
    %26 = vector.load %arg11[%c0_37, %c16] : memref<16x20xf32, #tpu.memory_space<vmem>>, vector<16x4xf32>
    tpu.vector_store %arg11[%c0_37, %c16], %25 {strides = array<i32>} : memref<16x20xf32, #tpu.memory_space<vmem>>, vector<16x4xf32>,
    %c0_38 = arith.constant 0 : index
    %c0_39 = arith.constant 0 : index
    %27 = vector.load %arg11[%c0_38, %c0_39] : memref<16x20xf32, #tpu.memory_space<vmem>>, vector<16x20xf32>
    %cst_40 = arith.constant dense<0.000000e+00> : vector<16x64xf32>
    %28 = tpu.matmul %27, %14, %cst_40 {dimension_numbers = #tpu.dot_dimension_numbers<[1], [0], [0], [1], [0, 0, 1, 1], [], []>} : vector<16x20xf32>, vector<20x64xf32>, vector<16x64xf32> -> vector<16x64xf32>
    %29 = vector.broadcast %15 : vector<1x64xf32> to vector<16x64xf32>
    %30 = arith.addf %28, %29 : vector<16x64xf32>
    %cst_41 = arith.constant 0.000000e+00 : f32
    %31 = vector.broadcast %cst_41 : f32 to vector<16x64xf32>
    %32 = arith.maximumf %30, %31 : vector<16x64xf32>
    %c0_42 = arith.constant 0 : index
    %c0_43 = arith.constant 0 : index
    %c0_44 = arith.constant 0 : index
    %33 = vector.load %arg4[%c0_42, %c0_43, %c0_44] : memref<5x320x64xf32, #tpu.memory_space<vmem>>, vector<1x320x64xf32>
    %34 = vector.shape_cast %33 : vector<1x320x64xf32> to vector<320x64xf32>
    %c0_45 = arith.constant 0 : index
    %c0_46 = arith.constant 0 : index
    %c0_47 = arith.constant 0 : index
    %35 = vector.load %arg5[%c0_45, %c0_46, %c0_47] : memref<5x1x64xf32, #tpu.memory_space<vmem>>, vector<1x1x64xf32>
    %36 = vector.shape_cast %35 : vector<1x1x64xf32> to vector<1x64xf32>
    %c2_48 = arith.constant 2 : index
    %c0_49 = arith.constant 0 : index
    %37 = vector.load %arg8[%c2_48, %c0_49] : memref<20x64xf32, #tpu.memory_space<vmem>>, vector<16x64xf32>
    tpu.vector_store %arg8[%c2_48, %c0_49], %32 {strides = array<i32>} : memref<20x64xf32, #tpu.memory_space<vmem>>, vector<16x64xf32>,
    %c0_50 = arith.constant 0 : index
    %c0_51 = arith.constant 0 : index
    %38 = vector.load %arg8[%c0_50, %c0_51] : memref<20x64xf32, #tpu.memory_space<vmem>>, vector<16x64xf32>
    %c0_52 = arith.constant 0 : index
    %c0_53 = arith.constant 0 : index
    %39 = vector.load %arg12[%c0_52, %c0_53] : memref<16x320xf32, #tpu.memory_space<vmem>>, vector<16x64xf32>
    tpu.vector_store %arg12[%c0_52, %c0_53], %38 {strides = array<i32>} : memref<16x320xf32, #tpu.memory_space<vmem>>, vector<16x64xf32>,
    %c1_54 = arith.constant 1 : index
    %c0_55 = arith.constant 0 : index
    %40 = vector.load %arg8[%c1_54, %c0_55] : memref<20x64xf32, #tpu.memory_space<vmem>>, vector<16x64xf32>
    %c0_56 = arith.constant 0 : index
    %c64 = arith.constant 64 : index
    %41 = vector.load %arg12[%c0_56, %c64] : memref<16x320xf32, #tpu.memory_space<vmem>>, vector<16x64xf32>
    tpu.vector_store %arg12[%c0_56, %c64], %40 {strides = array<i32>} : memref<16x320xf32, #tpu.memory_space<vmem>>, vector<16x64xf32>,
    %c2_57 = arith.constant 2 : index
    %c0_58 = arith.constant 0 : index
    %42 = vector.load %arg8[%c2_57, %c0_58] : memref<20x64xf32, #tpu.memory_space<vmem>>, vector<16x64xf32>
    %c0_59 = arith.constant 0 : index
    %c128 = arith.constant 128 : index
    %43 = vector.load %arg12[%c0_59, %c128] : memref<16x320xf32, #tpu.memory_space<vmem>>, vector<16x64xf32>
    tpu.vector_store %arg12[%c0_59, %c128], %42 {strides = array<i32>} : memref<16x320xf32, #tpu.memory_space<vmem>>, vector<16x64xf32>,
    %c3_60 = arith.constant 3 : index
    %c0_61 = arith.constant 0 : index
    %44 = vector.load %arg8[%c3_60, %c0_61] : memref<20x64xf32, #tpu.memory_space<vmem>>, vector<16x64xf32>
    %c0_62 = arith.constant 0 : index
    %c192 = arith.constant 192 : index
    %45 = vector.load %arg12[%c0_62, %c192] : memref<16x320xf32, #tpu.memory_space<vmem>>, vector<16x64xf32>
    tpu.vector_store %arg12[%c0_62, %c192], %44 {strides = array<i32>} : memref<16x320xf32, #tpu.memory_space<vmem>>, vector<16x64xf32>,
    %c4_63 = arith.constant 4 : index
    %c0_64 = arith.constant 0 : index
    %46 = vector.load %arg8[%c4_63, %c0_64] : memref<20x64xf32, #tpu.memory_space<vmem>>, vector<16x64xf32>
    %c0_65 = arith.constant 0 : index
    %c256 = arith.constant 256 : index
    %47 = vector.load %arg12[%c0_65, %c256] : memref<16x320xf32, #tpu.memory_space<vmem>>, vector<16x64xf32>
    tpu.vector_store %arg12[%c0_65, %c256], %46 {strides = array<i32>} : memref<16x320xf32, #tpu.memory_space<vmem>>, vector<16x64xf32>,
    %c0_66 = arith.constant 0 : index
    %c0_67 = arith.constant 0 : index
    %48 = vector.load %arg12[%c0_66, %c0_67] : memref<16x320xf32, #tpu.memory_space<vmem>>, vector<16x320xf32>
    %cst_68 = arith.constant dense<0.000000e+00> : vector<16x64xf32>
    %49 = tpu.matmul %48, %34, %cst_68 {dimension_numbers = #tpu.dot_dimension_numbers<[1], [0], [0], [1], [0, 0, 1, 1], [], []>} : vector<16x320xf32>, vector<320x64xf32>, vector<16x64xf32> -> vector<16x64xf32>
    %50 = vector.broadcast %36 : vector<1x64xf32> to vector<16x64xf32>
    %51 = arith.addf %49, %50 : vector<16x64xf32>
    %cst_69 = arith.constant 0.000000e+00 : f32
    %52 = vector.broadcast %cst_69 : f32 to vector<16x64xf32>
    %53 = arith.maximumf %51, %52 : vector<16x64xf32>
    %c1_70 = arith.constant 1 : index
    %c0_71 = arith.constant 0 : index
    %54 = vector.load %arg13[%c1_70, %c0_71] : memref<17x64xf32, #tpu.memory_space<vmem>>, vector<16x64xf32>
    tpu.vector_store %arg13[%c1_70, %c0_71], %53 {strides = array<i32>} : memref<17x64xf32, #tpu.memory_space<vmem>>, vector<16x64xf32>,
    %c0_72 = arith.constant 0 : index
    %c0_73 = arith.constant 0 : index
    %55 = tpu.strided_load %arg13[%c0_72, %c0_73] {strides = array<i32: 2, 1>} : memref<17x64xf32, #tpu.memory_space<vmem>>, vector<8x64xf32>
    %c1_74 = arith.constant 1 : index
    %c0_75 = arith.constant 0 : index
    %56 = tpu.strided_load %arg13[%c1_74, %c0_75] {strides = array<i32: 2, 1>} : memref<17x64xf32, #tpu.memory_space<vmem>>, vector<8x64xf32>
    %c2_76 = arith.constant 2 : index
    %c0_77 = arith.constant 0 : index
    %57 = tpu.strided_load %arg13[%c2_76, %c0_77] {strides = array<i32: 2, 1>} : memref<17x64xf32, #tpu.memory_space<vmem>>, vector<8x64xf32>
    %58 = arith.maximumf %55, %56 : vector<8x64xf32>
    %59 = arith.maximumf %58, %57 : vector<8x64xf32>
    %c1_78 = arith.constant 1 : index
    %c0_79 = arith.constant 0 : index
    %c0_80 = arith.constant 0 : index
    %60 = vector.load %arg4[%c1_78, %c0_79, %c0_80] : memref<5x320x64xf32, #tpu.memory_space<vmem>>, vector<1x320x64xf32>
    %61 = vector.shape_cast %60 : vector<1x320x64xf32> to vector<320x64xf32>
    %c1_81 = arith.constant 1 : index
    %c0_82 = arith.constant 0 : index
    %c0_83 = arith.constant 0 : index
    %62 = vector.load %arg5[%c1_81, %c0_82, %c0_83] : memref<5x1x64xf32, #tpu.memory_space<vmem>>, vector<1x1x64xf32>
    %63 = vector.shape_cast %62 : vector<1x1x64xf32> to vector<1x64xf32>
    %c2_84 = arith.constant 2 : index
    %c0_85 = arith.constant 0 : index
    %64 = vector.load %arg9[%c2_84, %c0_85] : memref<12x64xf32, #tpu.memory_space<vmem>>, vector<8x64xf32>
    tpu.vector_store %arg9[%c2_84, %c0_85], %59 {strides = array<i32>} : memref<12x64xf32, #tpu.memory_space<vmem>>, vector<8x64xf32>,
    %c0_86 = arith.constant 0 : index
    %c0_87 = arith.constant 0 : index
    %65 = vector.load %arg9[%c0_86, %c0_87] : memref<12x64xf32, #tpu.memory_space<vmem>>, vector<8x64xf32>
    %c0_88 = arith.constant 0 : index
    %c0_89 = arith.constant 0 : index
    %66 = vector.load %arg12[%c0_88, %c0_89] : memref<16x320xf32, #tpu.memory_space<vmem>>, vector<8x64xf32>
    tpu.vector_store %arg12[%c0_88, %c0_89], %65 {strides = array<i32>} : memref<16x320xf32, #tpu.memory_space<vmem>>, vector<8x64xf32>,
    %c1_90 = arith.constant 1 : index
    %c0_91 = arith.constant 0 : index
    %67 = vector.load %arg9[%c1_90, %c0_91] : memref<12x64xf32, #tpu.memory_space<vmem>>, vector<8x64xf32>
    %c0_92 = arith.constant 0 : index
    %c64_93 = arith.constant 64 : index
    %68 = vector.load %arg12[%c0_92, %c64_93] : memref<16x320xf32, #tpu.memory_space<vmem>>, vector<8x64xf32>
    tpu.vector_store %arg12[%c0_92, %c64_93], %67 {strides = array<i32>} : memref<16x320xf32, #tpu.memory_space<vmem>>, vector<8x64xf32>,
    %c2_94 = arith.constant 2 : index
    %c0_95 = arith.constant 0 : index
    %69 = vector.load %arg9[%c2_94, %c0_95] : memref<12x64xf32, #tpu.memory_space<vmem>>, vector<8x64xf32>
    %c0_96 = arith.constant 0 : index
    %c128_97 = arith.constant 128 : index
    %70 = vector.load %arg12[%c0_96, %c128_97] : memref<16x320xf32, #tpu.memory_space<vmem>>, vector<8x64xf32>
    tpu.vector_store %arg12[%c0_96, %c128_97], %69 {strides = array<i32>} : memref<16x320xf32, #tpu.memory_space<vmem>>, vector<8x64xf32>,
    %c3_98 = arith.constant 3 : index
    %c0_99 = arith.constant 0 : index
    %71 = vector.load %arg9[%c3_98, %c0_99] : memref<12x64xf32, #tpu.memory_space<vmem>>, vector<8x64xf32>
    %c0_100 = arith.constant 0 : index
    %c192_101 = arith.constant 192 : index
    %72 = vector.load %arg12[%c0_100, %c192_101] : memref<16x320xf32, #tpu.memory_space<vmem>>, vector<8x64xf32>
    tpu.vector_store %arg12[%c0_100, %c192_101], %71 {strides = array<i32>} : memref<16x320xf32, #tpu.memory_space<vmem>>, vector<8x64xf32>,
    %c4_102 = arith.constant 4 : index
    %c0_103 = arith.constant 0 : index
    %73 = vector.load %arg9[%c4_102, %c0_103] : memref<12x64xf32, #tpu.memory_space<vmem>>, vector<8x64xf32>
    %c0_104 = arith.constant 0 : index
    %c256_105 = arith.constant 256 : index
    %74 = vector.load %arg12[%c0_104, %c256_105] : memref<16x320xf32, #tpu.memory_space<vmem>>, vector<8x64xf32>
    tpu.vector_store %arg12[%c0_104, %c256_105], %73 {strides = array<i32>} : memref<16x320xf32, #tpu.memory_space<vmem>>, vector<8x64xf32>,
    %c0_106 = arith.constant 0 : index
    %c0_107 = arith.constant 0 : index
    %75 = vector.load %arg12[%c0_106, %c0_107] : memref<16x320xf32, #tpu.memory_space<vmem>>, vector<8x320xf32>
    %cst_108 = arith.constant dense<0.000000e+00> : vector<8x64xf32>
    %76 = tpu.matmul %75, %61, %cst_108 {dimension_numbers = #tpu.dot_dimension_numbers<[1], [0], [0], [1], [0, 0, 1, 1], [], []>} : vector<8x320xf32>, vector<320x64xf32>, vector<8x64xf32> -> vector<8x64xf32>
    %77 = vector.broadcast %63 : vector<1x64xf32> to vector<8x64xf32>
    %78 = arith.addf %76, %77 : vector<8x64xf32>
    %cst_109 = arith.constant 0.000000e+00 : f32
    %79 = vector.broadcast %cst_109 : f32 to vector<8x64xf32>
    %80 = arith.maximumf %78, %79 : vector<8x64xf32>
    %c2_110 = arith.constant 2 : index
    %c0_111 = arith.constant 0 : index
    %c0_112 = arith.constant 0 : index
    %81 = vector.load %arg4[%c2_110, %c0_111, %c0_112] : memref<5x320x64xf32, #tpu.memory_space<vmem>>, vector<1x320x64xf32>
    %82 = vector.shape_cast %81 : vector<1x320x64xf32> to vector<320x64xf32>
    %c2_113 = arith.constant 2 : index
    %c0_114 = arith.constant 0 : index
    %c0_115 = arith.constant 0 : index
    %83 = vector.load %arg5[%c2_113, %c0_114, %c0_115] : memref<5x1x64xf32, #tpu.memory_space<vmem>>, vector<1x1x64xf32>
    %84 = vector.shape_cast %83 : vector<1x1x64xf32> to vector<1x64xf32>
    %c2_116 = arith.constant 2 : index
    %c0_117 = arith.constant 0 : index
    %85 = vector.load %arg9[%c2_116, %c0_117] : memref<12x64xf32, #tpu.memory_space<vmem>>, vector<8x64xf32>
    tpu.vector_store %arg9[%c2_116, %c0_117], %80 {strides = array<i32>} : memref<12x64xf32, #tpu.memory_space<vmem>>, vector<8x64xf32>,
    %c0_118 = arith.constant 0 : index
    %c0_119 = arith.constant 0 : index
    %86 = vector.load %arg9[%c0_118, %c0_119] : memref<12x64xf32, #tpu.memory_space<vmem>>, vector<8x64xf32>
    %c0_120 = arith.constant 0 : index
    %c0_121 = arith.constant 0 : index
    %87 = vector.load %arg12[%c0_120, %c0_121] : memref<16x320xf32, #tpu.memory_space<vmem>>, vector<8x64xf32>
    tpu.vector_store %arg12[%c0_120, %c0_121], %86 {strides = array<i32>} : memref<16x320xf32, #tpu.memory_space<vmem>>, vector<8x64xf32>,
    %c1_122 = arith.constant 1 : index
    %c0_123 = arith.constant 0 : index
    %88 = vector.load %arg9[%c1_122, %c0_123] : memref<12x64xf32, #tpu.memory_space<vmem>>, vector<8x64xf32>
    %c0_124 = arith.constant 0 : index
    %c64_125 = arith.constant 64 : index
    %89 = vector.load %arg12[%c0_124, %c64_125] : memref<16x320xf32, #tpu.memory_space<vmem>>, vector<8x64xf32>
    tpu.vector_store %arg12[%c0_124, %c64_125], %88 {strides = array<i32>} : memref<16x320xf32, #tpu.memory_space<vmem>>, vector<8x64xf32>,
    %c2_126 = arith.constant 2 : index
    %c0_127 = arith.constant 0 : index
    %90 = vector.load %arg9[%c2_126, %c0_127] : memref<12x64xf32, #tpu.memory_space<vmem>>, vector<8x64xf32>
    %c0_128 = arith.constant 0 : index
    %c128_129 = arith.constant 128 : index
    %91 = vector.load %arg12[%c0_128, %c128_129] : memref<16x320xf32, #tpu.memory_space<vmem>>, vector<8x64xf32>
    tpu.vector_store %arg12[%c0_128, %c128_129], %90 {strides = array<i32>} : memref<16x320xf32, #tpu.memory_space<vmem>>, vector<8x64xf32>,
    %c3_130 = arith.constant 3 : index
    %c0_131 = arith.constant 0 : index
    %92 = vector.load %arg9[%c3_130, %c0_131] : memref<12x64xf32, #tpu.memory_space<vmem>>, vector<8x64xf32>
    %c0_132 = arith.constant 0 : index
    %c192_133 = arith.constant 192 : index
    %93 = vector.load %arg12[%c0_132, %c192_133] : memref<16x320xf32, #tpu.memory_space<vmem>>, vector<8x64xf32>
    tpu.vector_store %arg12[%c0_132, %c192_133], %92 {strides = array<i32>} : memref<16x320xf32, #tpu.memory_space<vmem>>, vector<8x64xf32>,
    %c4_134 = arith.constant 4 : index
    %c0_135 = arith.constant 0 : index
    %94 = vector.load %arg9[%c4_134, %c0_135] : memref<12x64xf32, #tpu.memory_space<vmem>>, vector<8x64xf32>
    %c0_136 = arith.constant 0 : index
    %c256_137 = arith.constant 256 : index
    %95 = vector.load %arg12[%c0_136, %c256_137] : memref<16x320xf32, #tpu.memory_space<vmem>>, vector<8x64xf32>
    tpu.vector_store %arg12[%c0_136, %c256_137], %94 {strides = array<i32>} : memref<16x320xf32, #tpu.memory_space<vmem>>, vector<8x64xf32>,
    %c0_138 = arith.constant 0 : index
    %c0_139 = arith.constant 0 : index
    %96 = vector.load %arg12[%c0_138, %c0_139] : memref<16x320xf32, #tpu.memory_space<vmem>>, vector<8x320xf32>
    %cst_140 = arith.constant dense<0.000000e+00> : vector<8x64xf32>
    %97 = tpu.matmul %96, %82, %cst_140 {dimension_numbers = #tpu.dot_dimension_numbers<[1], [0], [0], [1], [0, 0, 1, 1], [], []>} : vector<8x320xf32>, vector<320x64xf32>, vector<8x64xf32> -> vector<8x64xf32>
    %98 = vector.broadcast %84 : vector<1x64xf32> to vector<8x64xf32>
    %99 = arith.addf %97, %98 : vector<8x64xf32>
    %cst_141 = arith.constant 0.000000e+00 : f32
    %100 = vector.broadcast %cst_141 : f32 to vector<8x64xf32>
    %101 = arith.maximumf %99, %100 : vector<8x64xf32>
    %c1_142 = arith.constant 1 : index
    %c0_143 = arith.constant 0 : index
    %102 = vector.load %arg13[%c1_142, %c0_143] : memref<17x64xf32, #tpu.memory_space<vmem>>, vector<8x64xf32>
    tpu.vector_store %arg13[%c1_142, %c0_143], %101 {strides = array<i32>} : memref<17x64xf32, #tpu.memory_space<vmem>>, vector<8x64xf32>,
    %c0_144 = arith.constant 0 : index
    %c0_145 = arith.constant 0 : index
    %103 = tpu.strided_load %arg13[%c0_144, %c0_145] {strides = array<i32: 2, 1>} : memref<17x64xf32, #tpu.memory_space<vmem>>, vector<4x64xf32>
    %c1_146 = arith.constant 1 : index
    %c0_147 = arith.constant 0 : index
    %104 = tpu.strided_load %arg13[%c1_146, %c0_147] {strides = array<i32: 2, 1>} : memref<17x64xf32, #tpu.memory_space<vmem>>, vector<4x64xf32>
    %c2_148 = arith.constant 2 : index
    %c0_149 = arith.constant 0 : index
    %105 = tpu.strided_load %arg13[%c2_148, %c0_149] {strides = array<i32: 2, 1>} : memref<17x64xf32, #tpu.memory_space<vmem>>, vector<4x64xf32>
    %106 = arith.maximumf %103, %104 : vector<4x64xf32>
    %107 = arith.maximumf %106, %105 : vector<4x64xf32>
    %c3_150 = arith.constant 3 : index
    %c0_151 = arith.constant 0 : index
    %c0_152 = arith.constant 0 : index
    %108 = vector.load %arg4[%c3_150, %c0_151, %c0_152] : memref<5x320x64xf32, #tpu.memory_space<vmem>>, vector<1x320x64xf32>
    %109 = vector.shape_cast %108 : vector<1x320x64xf32> to vector<320x64xf32>
    %c3_153 = arith.constant 3 : index
    %c0_154 = arith.constant 0 : index
    %c0_155 = arith.constant 0 : index
    %110 = vector.load %arg5[%c3_153, %c0_154, %c0_155] : memref<5x1x64xf32, #tpu.memory_space<vmem>>, vector<1x1x64xf32>
    %111 = vector.shape_cast %110 : vector<1x1x64xf32> to vector<1x64xf32>
    %c2_156 = arith.constant 2 : index
    %c0_157 = arith.constant 0 : index
    %112 = vector.load %arg10[%c2_156, %c0_157] : memref<8x64xf32, #tpu.memory_space<vmem>>, vector<4x64xf32>
    tpu.vector_store %arg10[%c2_156, %c0_157], %107 {strides = array<i32>} : memref<8x64xf32, #tpu.memory_space<vmem>>, vector<4x64xf32>,
    %c0_158 = arith.constant 0 : index
    %c0_159 = arith.constant 0 : index
    %113 = vector.load %arg10[%c0_158, %c0_159] : memref<8x64xf32, #tpu.memory_space<vmem>>, vector<4x64xf32>
    %c0_160 = arith.constant 0 : index
    %c0_161 = arith.constant 0 : index
    %114 = vector.load %arg12[%c0_160, %c0_161] : memref<16x320xf32, #tpu.memory_space<vmem>>, vector<4x64xf32>
    tpu.vector_store %arg12[%c0_160, %c0_161], %113 {strides = array<i32>} : memref<16x320xf32, #tpu.memory_space<vmem>>, vector<4x64xf32>,
    %c1_162 = arith.constant 1 : index
    %c0_163 = arith.constant 0 : index
    %115 = vector.load %arg10[%c1_162, %c0_163] : memref<8x64xf32, #tpu.memory_space<vmem>>, vector<4x64xf32>
    %c0_164 = arith.constant 0 : index
    %c64_165 = arith.constant 64 : index
    %116 = vector.load %arg12[%c0_164, %c64_165] : memref<16x320xf32, #tpu.memory_space<vmem>>, vector<4x64xf32>
    tpu.vector_store %arg12[%c0_164, %c64_165], %115 {strides = array<i32>} : memref<16x320xf32, #tpu.memory_space<vmem>>, vector<4x64xf32>,
    %c2_166 = arith.constant 2 : index
    %c0_167 = arith.constant 0 : index
    %117 = vector.load %arg10[%c2_166, %c0_167] : memref<8x64xf32, #tpu.memory_space<vmem>>, vector<4x64xf32>
    %c0_168 = arith.constant 0 : index
    %c128_169 = arith.constant 128 : index
    %118 = vector.load %arg12[%c0_168, %c128_169] : memref<16x320xf32, #tpu.memory_space<vmem>>, vector<4x64xf32>
    tpu.vector_store %arg12[%c0_168, %c128_169], %117 {strides = array<i32>} : memref<16x320xf32, #tpu.memory_space<vmem>>, vector<4x64xf32>,
    %c3_170 = arith.constant 3 : index
    %c0_171 = arith.constant 0 : index
    %119 = vector.load %arg10[%c3_170, %c0_171] : memref<8x64xf32, #tpu.memory_space<vmem>>, vector<4x64xf32>
    %c0_172 = arith.constant 0 : index
    %c192_173 = arith.constant 192 : index
    %120 = vector.load %arg12[%c0_172, %c192_173] : memref<16x320xf32, #tpu.memory_space<vmem>>, vector<4x64xf32>
    tpu.vector_store %arg12[%c0_172, %c192_173], %119 {strides = array<i32>} : memref<16x320xf32, #tpu.memory_space<vmem>>, vector<4x64xf32>,
    %c4_174 = arith.constant 4 : index
    %c0_175 = arith.constant 0 : index
    %121 = vector.load %arg10[%c4_174, %c0_175] : memref<8x64xf32, #tpu.memory_space<vmem>>, vector<4x64xf32>
    %c0_176 = arith.constant 0 : index
    %c256_177 = arith.constant 256 : index
    %122 = vector.load %arg12[%c0_176, %c256_177] : memref<16x320xf32, #tpu.memory_space<vmem>>, vector<4x64xf32>
    tpu.vector_store %arg12[%c0_176, %c256_177], %121 {strides = array<i32>} : memref<16x320xf32, #tpu.memory_space<vmem>>, vector<4x64xf32>,
    %c0_178 = arith.constant 0 : index
    %c0_179 = arith.constant 0 : index
    %123 = vector.load %arg12[%c0_178, %c0_179] : memref<16x320xf32, #tpu.memory_space<vmem>>, vector<4x320xf32>
    %cst_180 = arith.constant dense<0.000000e+00> : vector<4x64xf32>
    %124 = tpu.matmul %123, %109, %cst_180 {dimension_numbers = #tpu.dot_dimension_numbers<[1], [0], [0], [1], [0, 0, 1, 1], [], []>} : vector<4x320xf32>, vector<320x64xf32>, vector<4x64xf32> -> vector<4x64xf32>
    %125 = vector.broadcast %111 : vector<1x64xf32> to vector<4x64xf32>
    %126 = arith.addf %124, %125 : vector<4x64xf32>
    %cst_181 = arith.constant 0.000000e+00 : f32
    %127 = vector.broadcast %cst_181 : f32 to vector<4x64xf32>
    %128 = arith.maximumf %126, %127 : vector<4x64xf32>
    %c4_182 = arith.constant 4 : index
    %c0_183 = arith.constant 0 : index
    %c0_184 = arith.constant 0 : index
    %129 = vector.load %arg4[%c4_182, %c0_183, %c0_184] : memref<5x320x64xf32, #tpu.memory_space<vmem>>, vector<1x320x64xf32>
    %130 = vector.shape_cast %129 : vector<1x320x64xf32> to vector<320x64xf32>
    %c4_185 = arith.constant 4 : index
    %c0_186 = arith.constant 0 : index
    %c0_187 = arith.constant 0 : index
    %131 = vector.load %arg5[%c4_185, %c0_186, %c0_187] : memref<5x1x64xf32, #tpu.memory_space<vmem>>, vector<1x1x64xf32>
    %132 = vector.shape_cast %131 : vector<1x1x64xf32> to vector<1x64xf32>
    %c2_188 = arith.constant 2 : index
    %c0_189 = arith.constant 0 : index
    %133 = vector.load %arg10[%c2_188, %c0_189] : memref<8x64xf32, #tpu.memory_space<vmem>>, vector<4x64xf32>
    tpu.vector_store %arg10[%c2_188, %c0_189], %128 {strides = array<i32>} : memref<8x64xf32, #tpu.memory_space<vmem>>, vector<4x64xf32>,
    %c0_190 = arith.constant 0 : index
    %c0_191 = arith.constant 0 : index
    %134 = vector.load %arg10[%c0_190, %c0_191] : memref<8x64xf32, #tpu.memory_space<vmem>>, vector<4x64xf32>
    %c0_192 = arith.constant 0 : index
    %c0_193 = arith.constant 0 : index
    %135 = vector.load %arg12[%c0_192, %c0_193] : memref<16x320xf32, #tpu.memory_space<vmem>>, vector<4x64xf32>
    tpu.vector_store %arg12[%c0_192, %c0_193], %134 {strides = array<i32>} : memref<16x320xf32, #tpu.memory_space<vmem>>, vector<4x64xf32>,
    %c1_194 = arith.constant 1 : index
    %c0_195 = arith.constant 0 : index
    %136 = vector.load %arg10[%c1_194, %c0_195] : memref<8x64xf32, #tpu.memory_space<vmem>>, vector<4x64xf32>
    %c0_196 = arith.constant 0 : index
    %c64_197 = arith.constant 64 : index
    %137 = vector.load %arg12[%c0_196, %c64_197] : memref<16x320xf32, #tpu.memory_space<vmem>>, vector<4x64xf32>
    tpu.vector_store %arg12[%c0_196, %c64_197], %136 {strides = array<i32>} : memref<16x320xf32, #tpu.memory_space<vmem>>, vector<4x64xf32>,
    %c2_198 = arith.constant 2 : index
    %c0_199 = arith.constant 0 : index
    %138 = vector.load %arg10[%c2_198, %c0_199] : memref<8x64xf32, #tpu.memory_space<vmem>>, vector<4x64xf32>
    %c0_200 = arith.constant 0 : index
    %c128_201 = arith.constant 128 : index
    %139 = vector.load %arg12[%c0_200, %c128_201] : memref<16x320xf32, #tpu.memory_space<vmem>>, vector<4x64xf32>
    tpu.vector_store %arg12[%c0_200, %c128_201], %138 {strides = array<i32>} : memref<16x320xf32, #tpu.memory_space<vmem>>, vector<4x64xf32>,
    %c3_202 = arith.constant 3 : index
    %c0_203 = arith.constant 0 : index
    %140 = vector.load %arg10[%c3_202, %c0_203] : memref<8x64xf32, #tpu.memory_space<vmem>>, vector<4x64xf32>
    %c0_204 = arith.constant 0 : index
    %c192_205 = arith.constant 192 : index
    %141 = vector.load %arg12[%c0_204, %c192_205] : memref<16x320xf32, #tpu.memory_space<vmem>>, vector<4x64xf32>
    tpu.vector_store %arg12[%c0_204, %c192_205], %140 {strides = array<i32>} : memref<16x320xf32, #tpu.memory_space<vmem>>, vector<4x64xf32>,
    %c4_206 = arith.constant 4 : index
    %c0_207 = arith.constant 0 : index
    %142 = vector.load %arg10[%c4_206, %c0_207] : memref<8x64xf32, #tpu.memory_space<vmem>>, vector<4x64xf32>
    %c0_208 = arith.constant 0 : index
    %c256_209 = arith.constant 256 : index
    %143 = vector.load %arg12[%c0_208, %c256_209] : memref<16x320xf32, #tpu.memory_space<vmem>>, vector<4x64xf32>
    tpu.vector_store %arg12[%c0_208, %c256_209], %142 {strides = array<i32>} : memref<16x320xf32, #tpu.memory_space<vmem>>, vector<4x64xf32>,
    %c0_210 = arith.constant 0 : index
    %c0_211 = arith.constant 0 : index
    %144 = vector.load %arg12[%c0_210, %c0_211] : memref<16x320xf32, #tpu.memory_space<vmem>>, vector<4x320xf32>
    %cst_212 = arith.constant dense<0.000000e+00> : vector<4x64xf32>
    %145 = tpu.matmul %144, %130, %cst_212 {dimension_numbers = #tpu.dot_dimension_numbers<[1], [0], [0], [1], [0, 0, 1, 1], [], []>} : vector<4x320xf32>, vector<320x64xf32>, vector<4x64xf32> -> vector<4x64xf32>
    %146 = vector.broadcast %132 : vector<1x64xf32> to vector<4x64xf32>
    %147 = arith.addf %145, %146 : vector<4x64xf32>
    %cst_213 = arith.constant 0.000000e+00 : f32
    %148 = vector.broadcast %cst_213 : f32 to vector<4x64xf32>
    %149 = arith.maximumf %147, %148 : vector<4x64xf32>
    %c1_214 = arith.constant 1 : index
    %c0_215 = arith.constant 0 : index
    %150 = vector.load %arg13[%c1_214, %c0_215] : memref<17x64xf32, #tpu.memory_space<vmem>>, vector<4x64xf32>
    tpu.vector_store %arg13[%c1_214, %c0_215], %149 {strides = array<i32>} : memref<17x64xf32, #tpu.memory_space<vmem>>, vector<4x64xf32>,
    %c0_216 = arith.constant 0 : index
    %c0_217 = arith.constant 0 : index
    %151 = tpu.strided_load %arg13[%c0_216, %c0_217] {strides = array<i32: 2, 1>} : memref<17x64xf32, #tpu.memory_space<vmem>>, vector<2x64xf32>
    %c1_218 = arith.constant 1 : index
    %c0_219 = arith.constant 0 : index
    %152 = tpu.strided_load %arg13[%c1_218, %c0_219] {strides = array<i32: 2, 1>} : memref<17x64xf32, #tpu.memory_space<vmem>>, vector<2x64xf32>
    %c2_220 = arith.constant 2 : index
    %c0_221 = arith.constant 0 : index
    %153 = tpu.strided_load %arg13[%c2_220, %c0_221] {strides = array<i32: 2, 1>} : memref<17x64xf32, #tpu.memory_space<vmem>>, vector<2x64xf32>
    %154 = arith.maximumf %151, %152 : vector<2x64xf32>
    %155 = arith.maximumf %154, %153 : vector<2x64xf32>
    %c0_222 = arith.constant 0 : index
    %c0_223 = arith.constant 0 : index
    %c0_224 = arith.constant 0 : index
    %156 = vector.load %arg6[%c0_222, %c0_223, %c0_224] : memref<1x2x64xf32, #tpu.memory_space<vmem>>, vector<1x2x64xf32>
    %157 = vector.shape_cast %156 : vector<1x2x64xf32> to vector<2x64xf32>
    %158 = vector.shape_cast %155 : vector<2x64xf32> to vector<1x2x64xf32>
    tpu.vector_store %arg6[%c0_222, %c0_223, %c0_224], %158 {strides = array<i32>} : memref<1x2x64xf32, #tpu.memory_space<vmem>>, vector<1x2x64xf32>,
    return
  }
  func.func @transform_0(%arg0: i32) -> (i32, i32, i32) {
    %c0_i32 = arith.constant 0 : i32
    %c0_i32_0 = arith.constant 0 : i32
    %c0_i32_1 = arith.constant 0 : i32
    return %arg0, %c0_i32, %c0_i32_0 : i32, i32, i32
  }
  func.func @transform_1(%arg0: i32) -> (i32, i32) {
    %c0_i32 = arith.constant 0 : i32
    %c0_i32_0 = arith.constant 0 : i32
    %c0_i32_1 = arith.constant 0 : i32
    return %c0_i32, %c0_i32_0 : i32, i32
  }
  func.func @transform_2(%arg0: i32) -> (i32, i32) {
    %c0_i32 = arith.constant 0 : i32
    %c0_i32_0 = arith.constant 0 : i32
    %c0_i32_1 = arith.constant 0 : i32
    return %c0_i32, %c0_i32_0 : i32, i32
  }
  func.func @transform_3(%arg0: i32) -> (i32, i32, i32) {
    %c0_i32 = arith.constant 0 : i32
    %c0_i32_0 = arith.constant 0 : i32
    %c0_i32_1 = arith.constant 0 : i32
    %c0_i32_2 = arith.constant 0 : i32
    return %c0_i32, %c0_i32_0, %c0_i32_1 : i32, i32, i32
  }
  func.func @transform_4(%arg0: i32) -> (i32, i32, i32) {
    %c0_i32 = arith.constant 0 : i32
    %c0_i32_0 = arith.constant 0 : i32
    %c0_i32_1 = arith.constant 0 : i32
    %c0_i32_2 = arith.constant 0 : i32
    return %c0_i32, %c0_i32_0, %c0_i32_1 : i32, i32, i32
  }
  func.func @transform_5(%arg0: i32) -> (i32, i32, i32) {
    %c0_i32 = arith.constant 0 : i32
    %c0_i32_0 = arith.constant 0 : i32
    %c0_i32_1 = arith.constant 0 : i32
    return %arg0, %c0_i32, %c0_i32_0 : i32, i32, i32
  }
}

module attributes {stable_mosaic.version = 11 : i64} {
  func.func @_fc_head_kernel(%arg0: i32, %arg1: i32, %arg2: memref<2x128xf32, #tpu.memory_space<vmem>>, %arg3: memref<128x512xf32, #tpu.memory_space<vmem>>, %arg4: memref<1x512xf32, #tpu.memory_space<vmem>>, %arg5: memref<512x128xf32, #tpu.memory_space<vmem>>, %arg6: memref<1x128xf32, #tpu.memory_space<vmem>>, %arg7: memref<128x128xf32, #tpu.memory_space<vmem>>, %arg8: memref<1x128xf32, #tpu.memory_space<vmem>>, %arg9: memref<2x128xf32, #tpu.memory_space<vmem>>, %arg10: memref<2x512xf32, #tpu.memory_space<vmem>>) attributes {dimension_semantics = [#tpu.dimension_semantics<parallel>, #tpu.dimension_semantics<arbitrary>], iteration_bounds = array<i64: 1, 1>, scalar_prefetch = 0 : i64, scratch_operands = 1 : i64, tpu.core_type = #tpu.core_type<tc>, window_params = [{transform_indices = @transform_0, window_bounds = array<i64: 2, 128>}, {transform_indices = @transform_1, window_bounds = array<i64: 128, 512>}, {pipeline_mode = #tpu.pipeline_mode<synchronous>, transform_indices = @transform_2, window_bounds = array<i64: 1, 512>}, {pipeline_mode = #tpu.pipeline_mode<synchronous>, transform_indices = @transform_3, window_bounds = array<i64: 512, 128>}, {pipeline_mode = #tpu.pipeline_mode<synchronous>, transform_indices = @transform_4, window_bounds = array<i64: 1, 128>}, {pipeline_mode = #tpu.pipeline_mode<synchronous>, transform_indices = @transform_5, window_bounds = array<i64: 128, 128>}, {pipeline_mode = #tpu.pipeline_mode<synchronous>, transform_indices = @transform_6, window_bounds = array<i64: 1, 128>}, {transform_indices = @transform_7, window_bounds = array<i64: 2, 128>}]} {
    %c0_i32 = arith.constant 0 : i32
    %0 = arith.cmpi eq, %arg1, %c0_i32 : i32
    %1 = arith.extui %0 : i1 to i32
    %c0_i32_0 = arith.constant 0 : i32
    %2 = arith.cmpi ne, %1, %c0_i32_0 : i32
    scf.if %2 {
      %cst_10 = arith.constant 0.000000e+00 : f32
      %12 = vector.broadcast %cst_10 : f32 to vector<2x512xf32>
      %c0_11 = arith.constant 0 : index
      %c0_12 = arith.constant 0 : index
      %13 = vector.load %arg10[%c0_11, %c0_12] : memref<2x512xf32, #tpu.memory_space<vmem>>, vector<2x512xf32>
      tpu.vector_store %arg10[%c0_11, %c0_12], %12 {strides = array<i32>} : memref<2x512xf32, #tpu.memory_space<vmem>>, vector<2x512xf32>,
    } else {
    }
    %c0 = arith.constant 0 : index
    %c0_1 = arith.constant 0 : index
    %3 = vector.load %arg10[%c0, %c0_1] : memref<2x512xf32, #tpu.memory_space<vmem>>, vector<2x512xf32>
    %c0_2 = arith.constant 0 : index
    %c0_3 = arith.constant 0 : index
    %4 = vector.load %arg2[%c0_2, %c0_3] : memref<2x128xf32, #tpu.memory_space<vmem>>, vector<2x128xf32>
    %c0_4 = arith.constant 0 : index
    %c0_5 = arith.constant 0 : index
    %5 = vector.load %arg3[%c0_4, %c0_5] : memref<128x512xf32, #tpu.memory_space<vmem>>, vector<128x512xf32>
    %cst = arith.constant dense<0.000000e+00> : vector<2x512xf32>
    %6 = tpu.matmul %4, %5, %cst {dimension_numbers = #tpu.dot_dimension_numbers<[1], [0], [0], [1], [0, 0, 1, 1], [], []>} : vector<2x128xf32>, vector<128x512xf32>, vector<2x512xf32> -> vector<2x512xf32>
    %7 = arith.addf %3, %6 : vector<2x512xf32>
    %c0_6 = arith.constant 0 : index
    %c0_7 = arith.constant 0 : index
    %8 = vector.load %arg10[%c0_6, %c0_7] : memref<2x512xf32, #tpu.memory_space<vmem>>, vector<2x512xf32>
    tpu.vector_store %arg10[%c0_6, %c0_7], %7 {strides = array<i32>} : memref<2x512xf32, #tpu.memory_space<vmem>>, vector<2x512xf32>,
    %c0_i32_8 = arith.constant 0 : i32
    %9 = arith.cmpi eq, %arg1, %c0_i32_8 : i32
    %10 = arith.extui %9 : i1 to i32
    %c0_i32_9 = arith.constant 0 : i32
    %11 = arith.cmpi ne, %10, %c0_i32_9 : i32
    scf.if %11 {
      %c0_10 = arith.constant 0 : index
      %c0_11 = arith.constant 0 : index
      %12 = vector.load %arg10[%c0_10, %c0_11] : memref<2x512xf32, #tpu.memory_space<vmem>>, vector<2x512xf32>
      %c0_12 = arith.constant 0 : index
      %c0_13 = arith.constant 0 : index
      %13 = vector.load %arg4[%c0_12, %c0_13] : memref<1x512xf32, #tpu.memory_space<vmem>>, vector<1x512xf32>
      %14 = vector.broadcast %13 : vector<1x512xf32> to vector<2x512xf32>
      %15 = arith.addf %12, %14 : vector<2x512xf32>
      %cst_14 = arith.constant 0.000000e+00 : f32
      %16 = vector.broadcast %cst_14 : f32 to vector<2x512xf32>
      %17 = arith.maximumf %15, %16 : vector<2x512xf32>
      %c0_15 = arith.constant 0 : index
      %c0_16 = arith.constant 0 : index
      %18 = vector.load %arg5[%c0_15, %c0_16] : memref<512x128xf32, #tpu.memory_space<vmem>>, vector<512x128xf32>
      %cst_17 = arith.constant dense<0.000000e+00> : vector<2x128xf32>
      %19 = tpu.matmul %17, %18, %cst_17 {dimension_numbers = #tpu.dot_dimension_numbers<[1], [0], [0], [1], [0, 0, 1, 1], [], []>} : vector<2x512xf32>, vector<512x128xf32>, vector<2x128xf32> -> vector<2x128xf32>
      %c0_18 = arith.constant 0 : index
      %c0_19 = arith.constant 0 : index
      %20 = vector.load %arg6[%c0_18, %c0_19] : memref<1x128xf32, #tpu.memory_space<vmem>>, vector<1x128xf32>
      %21 = vector.broadcast %20 : vector<1x128xf32> to vector<2x128xf32>
      %22 = arith.addf %19, %21 : vector<2x128xf32>
      %cst_20 = arith.constant 0.000000e+00 : f32
      %23 = vector.broadcast %cst_20 : f32 to vector<2x128xf32>
      %24 = arith.maximumf %22, %23 : vector<2x128xf32>
      %c0_21 = arith.constant 0 : index
      %c0_22 = arith.constant 0 : index
      %25 = vector.load %arg7[%c0_21, %c0_22] : memref<128x128xf32, #tpu.memory_space<vmem>>, vector<128x128xf32>
      %cst_23 = arith.constant dense<0.000000e+00> : vector<2x128xf32>
      %26 = tpu.matmul %24, %25, %cst_23 {dimension_numbers = #tpu.dot_dimension_numbers<[1], [0], [0], [1], [0, 0, 1, 1], [], []>} : vector<2x128xf32>, vector<128x128xf32>, vector<2x128xf32> -> vector<2x128xf32>
      %c0_24 = arith.constant 0 : index
      %c0_25 = arith.constant 0 : index
      %27 = vector.load %arg8[%c0_24, %c0_25] : memref<1x128xf32, #tpu.memory_space<vmem>>, vector<1x128xf32>
      %28 = vector.broadcast %27 : vector<1x128xf32> to vector<2x128xf32>
      %29 = arith.addf %26, %28 : vector<2x128xf32>
      %c0_26 = arith.constant 0 : index
      %c0_27 = arith.constant 0 : index
      %30 = vector.load %arg9[%c0_26, %c0_27] : memref<2x128xf32, #tpu.memory_space<vmem>>, vector<2x128xf32>
      tpu.vector_store %arg9[%c0_26, %c0_27], %29 {strides = array<i32>} : memref<2x128xf32, #tpu.memory_space<vmem>>, vector<2x128xf32>,
    } else {
    }
    return
  }
  func.func @transform_0(%arg0: i32, %arg1: i32) -> (i32, i32) {
    %c0_i32 = arith.constant 0 : i32
    return %arg0, %arg1 : i32, i32
  }
  func.func @transform_1(%arg0: i32, %arg1: i32) -> (i32, i32) {
    %c0_i32 = arith.constant 0 : i32
    %c0_i32_0 = arith.constant 0 : i32
    return %arg1, %c0_i32 : i32, i32
  }
  func.func @transform_2(%arg0: i32, %arg1: i32) -> (i32, i32) {
    %c0_i32 = arith.constant 0 : i32
    %c0_i32_0 = arith.constant 0 : i32
    %c0_i32_1 = arith.constant 0 : i32
    return %c0_i32, %c0_i32_0 : i32, i32
  }
  func.func @transform_3(%arg0: i32, %arg1: i32) -> (i32, i32) {
    %c0_i32 = arith.constant 0 : i32
    %c0_i32_0 = arith.constant 0 : i32
    %c0_i32_1 = arith.constant 0 : i32
    return %c0_i32, %c0_i32_0 : i32, i32
  }
  func.func @transform_4(%arg0: i32, %arg1: i32) -> (i32, i32) {
    %c0_i32 = arith.constant 0 : i32
    %c0_i32_0 = arith.constant 0 : i32
    %c0_i32_1 = arith.constant 0 : i32
    return %c0_i32, %c0_i32_0 : i32, i32
  }
  func.func @transform_5(%arg0: i32, %arg1: i32) -> (i32, i32) {
    %c0_i32 = arith.constant 0 : i32
    %c0_i32_0 = arith.constant 0 : i32
    %c0_i32_1 = arith.constant 0 : i32
    return %c0_i32, %c0_i32_0 : i32, i32
  }
  func.func @transform_6(%arg0: i32, %arg1: i32) -> (i32, i32) {
    %c0_i32 = arith.constant 0 : i32
    %c0_i32_0 = arith.constant 0 : i32
    %c0_i32_1 = arith.constant 0 : i32
    return %c0_i32, %c0_i32_0 : i32, i32
  }
  func.func @transform_7(%arg0: i32, %arg1: i32) -> (i32, i32) {
    %c0_i32 = arith.constant 0 : i32
    %c0_i32_0 = arith.constant 0 : i32
    return %arg0, %c0_i32 : i32, i32
  }
}

</mosaic_0001>

<llo_original>
// kernel: yaonet_forward.3
$region0: #{yaonet_forward.3}
  #allocation0 [shape = 'u32[]', space=smem, size = 0x4, offset = 0x4, fixed_abs, tag = 'smem constant byte address 0x4 - core index']
  #allocation1 [shape = 'u32[144,128]{1,0:T(1,128)}', space=vmem, size = 0x12000, scoped, tag = 'internal scratch']
  #allocation2 [shape = 'f32[2,512]{1,0:T(2,128)}', space=vmem, size = 0x1000, scoped, tag = 'scratch operand']
  %s0 = inlined_call_operand.vmem [shape: f32[2,128], index: 0, kind: input, shape index: {}]
  %s1 = inlined_call_operand.vmem [shape: f32[128,512], index: 1, kind: input, shape index: {}]
  %s2 = inlined_call_operand.vmem [shape: f32[1,512], index: 2, kind: input, shape index: {}]
  %s3 = inlined_call_operand.vmem [shape: f32[512,128], index: 3, kind: input, shape index: {}]
  %s4 = inlined_call_operand.vmem [shape: f32[1,128], index: 4, kind: input, shape index: {}]
  %s5 = inlined_call_operand.vmem [shape: f32[128,128], index: 5, kind: input, shape index: {}]
  %s6 = inlined_call_operand.vmem [shape: f32[1,128], index: 6, kind: input, shape index: {}]
  %s7 = inlined_call_operand.hbm [shape: f32[2,128], index: 7, kind: output, shape index: {}]
  %s8 = sld [smem:[#allocation0]]
  $region46: #{yaonet_forward.3} parent=0
    _
  %s10 = ssub.s32 1, %s8
  %s11 = scalar_select 0, %s10, %s8
  $region1: #{yaonet_forward.3} parent=0
    #allocation3 [shape = 'u8[1024]{0}', space=vmem, size = 0x400, scoped, tag = 'output window, operand 0, single buffered']
    #allocation4 [shape = 's32[1]{0}', space=sflag, size = 0x4, scoped, tag = 'scoped memory for yaonet_forward.3']
    %12 = vsyncpa [#allocation4], 0
    // Predicated region
    $region2: #{yaonet_forward.3} parent=1 // pred_check
      _
    $region3: #{yaonet_forward.3} parent=1 // pred_check_branch
      %14 = sbr.rel (0) target = $region5
    $region4: #{yaonet_forward.3} parent=1 // pred_region
      _
    $region5: #{yaonet_forward.3} parent=1 // pred_fallthru
      _
    // Predicated region
    $region6: #{yaonet_forward.3} parent=1 // pred_check
      _
    $region7: #{yaonet_forward.3} parent=1 // pred_check_branch
      %16 = sbr.rel (0) target = $region9
    $region8: #{yaonet_forward.3} parent=1 // pred_region
      _
    $region9: #{yaonet_forward.3} parent=1 // pred_fallthru
      _
    // Predicated region
    $region10: #{yaonet_forward.3} parent=1 // pred_check
      _
    $region11: #{yaonet_forward.3} parent=1 // pred_check_branch
      %18 = sbr.rel (0) target = $region13
    $region12: #{yaonet_forward.3} parent=1 // pred_region
      _
    $region13: #{yaonet_forward.3} parent=1 // pred_fallthru
      _
    // Predicated region
    $region14: #{yaonet_forward.3} parent=1 // pred_check
      _
    $region15: #{yaonet_forward.3} parent=1 // pred_check_branch
      %20 = sbr.rel (0) target = $region17
    $region16: #{yaonet_forward.3} parent=1 // pred_region
      _
    $region17: #{yaonet_forward.3} parent=1 // pred_fallthru
      _
    // Predicated region
    $region18: #{yaonet_forward.3} parent=1 // pred_check
      _
    $region19: #{yaonet_forward.3} parent=1 // pred_check_branch
      %22 = sbr.rel (0) target = $region21
    $region20: #{yaonet_forward.3} parent=1 // pred_region
      _
    $region21: #{yaonet_forward.3} parent=1 // pred_fallthru
      _
    // Predicated region
    $region22: #{yaonet_forward.3} parent=1 // pred_check
      _
    $region23: #{yaonet_forward.3} parent=1 // pred_check_branch
      %24 = sbr.rel (0) target = $region25
    $region24: #{yaonet_forward.3} parent=1 // pred_region
      _
    $region25: #{yaonet_forward.3} parent=1 // pred_fallthru
      _
    // Predicated region
    $region26: #{yaonet_forward.3} parent=1 // pred_check
      _
    $region27: #{yaonet_forward.3} parent=1 // pred_check_branch
      %26 = sbr.rel (0) target = $region29
    $region28: #{yaonet_forward.3} parent=1 // pred_region
      _
    $region29: #{yaonet_forward.3} parent=1 // pred_fallthru
      _
    %p27 = scmp.eq.s32.totalorder 0, 0
    // Predicated region
    $region30: #{yaonet_forward.3} parent=1 // pred_check
      %p28 = pneg %p27
    $region31: #{yaonet_forward.3} parent=1 // pred_check_branch
      %30 = sbr.rel (%p28) target = $region33
    $region32: #{yaonet_forward.3} parent=1 // pred_region
      %31 = vst [vmem:[#allocation2] sm:$0xff] 0.0
    $region33: #{yaonet_forward.3} parent=1 // pred_fallthru
      _
    %v32 = vld [vmem:[#allocation2] sm:$0xff]
    %v33 = vld [vmem:[%s0] sm:$0x3]
    %v34 = vld [vmem:[%s1] sm:$0xff]
    %v35 = vld [vmem:[%s1 + $0x8] sm:$0xff]
    %v36 = vld [vmem:[%s1 + $0x10] sm:$0xff]
    %v37 = vld [vmem:[%s1 + $0x18] sm:$0xff]
    %v38 = vld [vmem:[%s1 + $0x20] sm:$0xff]
    %v39 = vld [vmem:[%s1 + $0x28] sm:$0xff]
    %v40 = vld [vmem:[%s1 + $0x30] sm:$0xff]
    %v41 = vld [vmem:[%s1 + $0x38] sm:$0xff]
    %v42 = vld [vmem:[%s1 + $0x40] sm:$0xff]
    %v43 = vld [vmem:[%s1 + $0x48] sm:$0xff]
    %v44 = vld [vmem:[%s1 + $0x50] sm:$0xff]
    %v45 = vld [vmem:[%s1 + $0x58] sm:$0xff]
    %v46 = vld [vmem:[%s1 + $0x60] sm:$0xff]
    %v47 = vld [vmem:[%s1 + $0x68] sm:$0xff]
    %v48 = vld [vmem:[%s1 + $0x70] sm:$0xff]
    %v49 = vld [vmem:[%s1 + $0x78] sm:$0xff]
    %v50 = vld [vmem:[%s1 + $0x80] sm:$0xff]
    %v51 = vld [vmem:[%s1 + $0x88] sm:$0xff]
    %v52 = vld [vmem:[%s1 + $0x90] sm:$0xff]
    %v53 = vld [vmem:[%s1 + $0x98] sm:$0xff]
    %v54 = vld [vmem:[%s1 + $0xa0] sm:$0xff]
    %v55 = vld [vmem:[%s1 + $0xa8] sm:$0xff]
    %v56 = vld [vmem:[%s1 + $0xb0] sm:$0xff]
    %v57 = vld [vmem:[%s1 + $0xb8] sm:$0xff]
    %v58 = vld [vmem:[%s1 + $0xc0] sm:$0xff]
    %v59 = vld [vmem:[%s1 + $0xc8] sm:$0xff]
    %v60 = vld [vmem:[%s1 + $0xd0] sm:$0xff]
    %v61 = vld [vmem:[%s1 + $0xd8] sm:$0xff]
    %v62 = vld [vmem:[%s1 + $0xe0] sm:$0xff]
    %v63 = vld [vmem:[%s1 + $0xe8] sm:$0xff]
    %v64 = vld [vmem:[%s1 + $0xf0] sm:$0xff]
    %v65 = vld [vmem:[%s1 + $0xf8] sm:$0xff]
    %v66 = vld [vmem:[%s1 + $0x100] sm:$0xff]
    %v67 = vld [vmem:[%s1 + $0x108] sm:$0xff]
    %v68 = vld [vmem:[%s1 + $0x110] sm:$0xff]
    %v69 = vld [vmem:[%s1 + $0x118] sm:$0xff]
    %v70 = vld [vmem:[%s1 + $0x120] sm:$0xff]
    %v71 = vld [vmem:[%s1 + $0x128] sm:$0xff]
    %v72 = vld [vmem:[%s1 + $0x130] sm:$0xff]
    %v73 = vld [vmem:[%s1 + $0x138] sm:$0xff]
    %v74 = vld [vmem:[%s1 + $0x140] sm:$0xff]
    %v75 = vld [vmem:[%s1 + $0x148] sm:$0xff]
    %v76 = vld [vmem:[%s1 + $0x150] sm:$0xff]
    %v77 = vld [vmem:[%s1 + $0x158] sm:$0xff]
    %v78 = vld [vmem:[%s1 + $0x160] sm:$0xff]
    %v79 = vld [vmem:[%s1 + $0x168] sm:$0xff]
    %v80 = vld [vmem:[%s1 + $0x170] sm:$0xff]
    %v81 = vld [vmem:[%s1 + $0x178] sm:$0xff]
    %v82 = vld [vmem:[%s1 + $0x180] sm:$0xff]
    %v83 = vld [vmem:[%s1 + $0x188] sm:$0xff]
    %v84 = vld [vmem:[%s1 + $0x190] sm:$0xff]
    %v85 = vld [vmem:[%s1 + $0x198] sm:$0xff]
    %v86 = vld [vmem:[%s1 + $0x1a0] sm:$0xff]
    %v87 = vld [vmem:[%s1 + $0x1a8] sm:$0xff]
    %v88 = vld [vmem:[%s1 + $0x1b0] sm:$0xff]
    %v89 = vld [vmem:[%s1 + $0x1b8] sm:$0xff]
    %v90 = vld [vmem:[%s1 + $0x1c0] sm:$0xff]
    %v91 = vld [vmem:[%s1 + $0x1c8] sm:$0xff]
    %v92 = vld [vmem:[%s1 + $0x1d0] sm:$0xff]
    %v93 = vld [vmem:[%s1 + $0x1d8] sm:$0xff]
    %v94 = vld [vmem:[%s1 + $0x1e0] sm:$0xff]
    %v95 = vld [vmem:[%s1 + $0x1e8] sm:$0xff]
    %v96 = vld [vmem:[%s1 + $0x1f0] sm:$0xff]
    %v97 = vld [vmem:[%s1 + $0x1f8] sm:$0xff]
    %98 = vmatprep.subr.mxu0 %v35
    %99 = vmatpush1.msra.mxu0 %v34
    %100 = vmatprep.subr.mxu0 %v39
    %101 = vmatpush1.msra.mxu0 %v38
    %102 = vmatprep.subr.mxu0 %v43
    %103 = vmatpush1.msra.mxu0 %v42
    %104 = vmatprep.subr.mxu0 %v47
    %105 = vmatpush1.msra.mxu0 %v46
    %106 = vmatprep.subr.mxu0 %v51
    %107 = vmatpush1.msra.mxu0 %v50
    %108 = vmatprep.subr.mxu0 %v55
    %109 = vmatpush1.msra.mxu0 %v54
    %110 = vmatprep.subr.mxu0 %v59
    %111 = vmatpush1.msra.mxu0 %v58
    %112 = vmatprep.subr.mxu0 %v63
    %113 = vmatpush1.msra.mxu0 %v62
    %114 = vmatprep.subr.mxu0 %v67
    %115 = vmatpush1.msra.mxu0 %v66
    %116 = vmatprep.subr.mxu0 %v71
    %117 = vmatpush1.msra.mxu0 %v70
    %118 = vmatprep.subr.mxu0 %v75
    %119 = vmatpush1.msra.mxu0 %v74
    %120 = vmatprep.subr.mxu0 %v79
    %121 = vmatpush1.msra.mxu0 %v78
    %122 = vmatprep.subr.mxu0 %v83
    %123 = vmatpush1.msra.mxu0 %v82
    %124 = vmatprep.subr.mxu0 %v87
    %125 = vmatpush1.msra.mxu0 %v86
    %126 = vmatprep.subr.mxu0 %v91
    %127 = vmatpush1.msra.mxu0 %v90
    %128 = vmatprep.subr.mxu0 %v95
    %129 = vmatpush1.msra.mxu0 %v94
    %130 = vmatprep.subr.mxu0 0.0
    %131 = vmatpush1.msra.mxu0 0.0
    %132 = vmatprep.subr.mxu0 0.0
    %133 = vmatpush1.msra.mxu0 0.0
    %134 = vmatprep.subr.mxu0 0.0
    %135 = vmatpush1.msra.mxu0 0.0
    %136 = vmatprep.subr.mxu0 0.0
    %137 = vmatpush1.msra.mxu0 0.0
    %138 = vmatprep.subr.mxu0 0.0
    %139 = vmatpush1.msra.mxu0 0.0
    %140 = vmatprep.subr.mxu0 0.0
    %141 = vmatpush1.msra.mxu0 0.0
    %142 = vmatprep.subr.mxu0 0.0
    %143 = vmatpush1.msra.mxu0 0.0
    %144 = vmatprep.subr.mxu0 0.0
    %145 = vmatpush1.msra.mxu0 0.0
    %146 = vmatprep.subr.mxu0 0.0
    %147 = vmatpush1.msra.mxu0 0.0
    %148 = vmatprep.subr.mxu0 0.0
    %149 = vmatpush1.msra.mxu0 0.0
    %150 = vmatprep.subr.mxu0 0.0
    %151 = vmatpush1.msra.mxu0 0.0
    %152 = vmatprep.subr.mxu0 0.0
    %153 = vmatpush1.msra.mxu0 0.0
    %154 = vmatprep.subr.mxu0 0.0
    %155 = vmatpush1.msra.mxu0 0.0
    %156 = vmatprep.subr.mxu0 0.0
    %157 = vmatpush1.msra.mxu0 0.0
    %158 = vmatprep.subr.mxu0 0.0
    %159 = vmatpush1.msra.mxu0 0.0
    %160 = vmatprep.subr.mxu0 0.0
    %161 = vmatpush1.msra.mxu0 0.0
    %162 = vmatprep.mubr.f32.mxu0 0.0
    %163 = vmatmul.mubr.f32.gmra.mrb[0].mxu0 %v33
    %v164 = vpop.f32.mrb[0].mxu0
    %v165 = vadd.f32 0.0, %v164
    %v166 = vpop.f32.mrb[0].mxu0
    %v167 = vadd.f32 0.0, %v166
    %168 = vdwg.mxu0
    %169 = vmatprep.subr.mxu0 %v37
    %170 = vmatpush1.msra.mxu0 %v36
    %171 = vmatprep.subr.mxu0 %v41
    %172 = vmatpush1.msra.mxu0 %v40
    %173 = vmatprep.subr.mxu0 %v45
    %174 = vmatpush1.msra.mxu0 %v44
    %175 = vmatprep.subr.mxu0 %v49
    %176 = vmatpush1.msra.mxu0 %v48
    %177 = vmatprep.subr.mxu0 %v53
    %178 = vmatpush1.msra.mxu0 %v52
    %179 = vmatprep.subr.mxu0 %v57
    %180 = vmatpush1.msra.mxu0 %v56
    %181 = vmatprep.subr.mxu0 %v61
    %182 = vmatpush1.msra.mxu0 %v60
    %183 = vmatprep.subr.mxu0 %v65
    %184 = vmatpush1.msra.mxu0 %v64
    %185 = vmatprep.subr.mxu0 %v69
    %186 = vmatpush1.msra.mxu0 %v68
    %187 = vmatprep.subr.mxu0 %v73
    %188 = vmatpush1.msra.mxu0 %v72
    %189 = vmatprep.subr.mxu0 %v77
    %190 = vmatpush1.msra.mxu0 %v76
    %191 = vmatprep.subr.mxu0 %v81
    %192 = vmatpush1.msra.mxu0 %v80
    %193 = vmatprep.subr.mxu0 %v85
    %194 = vmatpush1.msra.mxu0 %v84
    %195 = vmatprep.subr.mxu0 %v89
    %196 = vmatpush1.msra.mxu0 %v88
    %197 = vmatprep.subr.mxu0 %v93
    %198 = vmatpush1.msra.mxu0 %v92
    %199 = vmatprep.subr.mxu0 %v97
    %200 = vmatpush1.msra.mxu0 %v96
    %201 = vmatprep.subr.mxu0 0.0
    %202 = vmatpush1.msra.mxu0 0.0
    %203 = vmatprep.subr.mxu0 0.0
    %204 = vmatpush1.msra.mxu0 0.0
    %205 = vmatprep.subr.mxu0 0.0
    %206 = vmatpush1.msra.mxu0 0.0
    %207 = vmatprep.subr.mxu0 0.0
    %208 = vmatpush1.msra.mxu0 0.0
    %209 = vmatprep.subr.mxu0 0.0
    %210 = vmatpush1.msra.mxu0 0.0
    %211 = vmatprep.subr.mxu0 0.0
    %212 = vmatpush1.msra.mxu0 0.0
    %213 = vmatprep.subr.mxu0 0.0
    %214 = vmatpush1.msra.mxu0 0.0
    %215 = vmatprep.subr.mxu0 0.0
    %216 = vmatpush1.msra.mxu0 0.0
    %217 = vmatprep.subr.mxu0 0.0
    %218 = vmatpush1.msra.mxu0 0.0
    %219 = vmatprep.subr.mxu0 0.0
    %220 = vmatpush1.msra.mxu0 0.0
    %221 = vmatprep.subr.mxu0 0.0
    %222 = vmatpush1.msra.mxu0 0.0
    %223 = vmatprep.subr.mxu0 0.0
    %224 = vmatpush1.msra.mxu0 0.0
    %225 = vmatprep.subr.mxu0 0.0
    %226 = vmatpush1.msra.mxu0 0.0
    %227 = vmatprep.subr.mxu0 0.0
    %228 = vmatpush1.msra.mxu0 0.0
    %229 = vmatprep.subr.mxu0 0.0
    %230 = vmatpush1.msra.mxu0 0.0
    %231 = vmatprep.subr.mxu0 0.0
    %232 = vmatpush1.msra.mxu0 0.0
    %233 = vmatprep.mubr.f32.mxu0 0.0
    %234 = vmatmul.mubr.f32.gmra.mrb[0].mxu0 %v33
    %v235 = vpop.f32.mrb[0].mxu0
    %v236 = vadd.f32 0.0, %v235
    %v237 = vpop.f32.mrb[0].mxu0
    %v238 = vadd.f32 0.0, %v237
    %239 = vdwg.mxu0
    %v244 = vcombine.low %v165, %v167
    %v245 = vcombine.low %v236, %v238
    %v247 = vunpack.c.l.s4 1983009808
    %v248 = vunpack.c.0.s8 %v247
    %v249 = vlaneseq
    %v250 = vshrl.u32 %v249, 7
    %v251 = vsub.s32 %v248, %v250
    %v252 = vrot.slane %v244, %v251
    %v254 = vunpack.c.l.s4 1983009808
    %v255 = vunpack.c.0.s8 %v254
    %v256 = vlaneseq
    %v257 = vshrl.u32 %v256, 7
    %v258 = vsub.s32 %v255, %v257
    %v259 = vrot.slane %v245, %v258
    %v260 = vcombine.low %v252, %v259
    %v262 = vadd.f32 %v32, %v260
    %263 = vst [vmem:[#allocation2] sm:$0xff] %v262
    // Predicated region
    $region34: #{yaonet_forward.3} parent=1 // pred_check
      %p264 = pneg %p27
    $region35: #{yaonet_forward.3} parent=1 // pred_check_branch
      %266 = sbr.rel (%p264) target = $region37
    $region36: #{yaonet_forward.3} parent=1 // pred_region
      %v267 = vld [vmem:[#allocation2] sm:$0xff]
      %v268 = vld [vmem:[%s2] sm:$0xf]
      %v270 = vlaneseq
      %v271 = vshrl.u32 %v270, 7
      %v272 = vsub.s32 0, %v271
      %v273 = vrot.slane %v268, %v272
      %v274 = vlaneseq
      %v275 = vshrl.u32 %v274, 7
      %v276 = vsub.s32 1, %v275
      %v277 = vrot.slane %v268, %v276
      %v278 = vlaneseq
      %v279 = vshrl.u32 %v278, 7
      %v280 = vsub.s32 2, %v279
      %v281 = vrot.slane %v268, %v280
      %v282 = vlaneseq
      %v283 = vshrl.u32 %v282, 7
      %v284 = vsub.s32 3, %v283
      %v285 = vrot.slane %v268, %v284
      %v286 = vcombine.low %v273, %v277
      %v287 = vcombine.low %v281, %v285
      %v289 = vunpack.c.l.s4 1983009808
      %v290 = vunpack.c.0.s8 %v289
      %v291 = vlaneseq
      %v292 = vshrl.u32 %v291, 7
      %v293 = vsub.s32 %v290, %v292
      %v294 = vrot.slane %v286, %v293
      %v296 = vunpack.c.l.s4 1983009808
      %v297 = vunpack.c.0.s8 %v296
      %v298 = vlaneseq
      %v299 = vshrl.u32 %v298, 7
      %v300 = vsub.s32 %v297, %v299
      %v301 = vrot.slane %v287, %v300
      %v302 = vcombine.low %v294, %v301
      %v304 = vadd.f32 %v267, %v302
      %v305 = vmax.f32 %v304, 0.0
      %v306 = vld [vmem:[%s3] sm:$0xff]
      %v307 = vld [vmem:[%s3 + $0x8] sm:$0xff]
      %v308 = vld [vmem:[%s3 + $0x10] sm:$0xff]
      %v309 = vld [vmem:[%s3 + $0x18] sm:$0xff]
      %v310 = vld [vmem:[%s3 + $0x20] sm:$0xff]
      %v311 = vld [vmem:[%s3 + $0x28] sm:$0xff]
      %v312 = vld [vmem:[%s3 + $0x30] sm:$0xff]
      %v313 = vld [vmem:[%s3 + $0x38] sm:$0xff]
      %v314 = vld [vmem:[%s3 + $0x40] sm:$0xff]
      %v315 = vld [vmem:[%s3 + $0x48] sm:$0xff]
      %v316 = vld [vmem:[%s3 + $0x50] sm:$0xff]
      %v317 = vld [vmem:[%s3 + $0x58] sm:$0xff]
      %v318 = vld [vmem:[%s3 + $0x60] sm:$0xff]
      %v319 = vld [vmem:[%s3 + $0x68] sm:$0xff]
      %v320 = vld [vmem:[%s3 + $0x70] sm:$0xff]
      %v321 = vld [vmem:[%s3 + $0x78] sm:$0xff]
      %v322 = vld [vmem:[%s3 + $0x80] sm:$0xff]
      %v323 = vld [vmem:[%s3 + $0x88] sm:$0xff]
      %v324 = vld [vmem:[%s3 + $0x90] sm:$0xff]
      %v325 = vld [vmem:[%s3 + $0x98] sm:$0xff]
      %v326 = vld [vmem:[%s3 + $0xa0] sm:$0xff]
      %v327 = vld [vmem:[%s3 + $0xa8] sm:$0xff]
      %v328 = vld [vmem:[%s3 + $0xb0] sm:$0xff]
      %v329 = vld [vmem:[%s3 + $0xb8] sm:$0xff]
      %v330 = vld [vmem:[%s3 + $0xc0] sm:$0xff]
      %v331 = vld [vmem:[%s3 + $0xc8] sm:$0xff]
      %v332 = vld [vmem:[%s3 + $0xd0] sm:$0xff]
      %v333 = vld [vmem:[%s3 + $0xd8] sm:$0xff]
      %v334 = vld [vmem:[%s3 + $0xe0] sm:$0xff]
      %v335 = vld [vmem:[%s3 + $0xe8] sm:$0xff]
      %v336 = vld [vmem:[%s3 + $0xf0] sm:$0xff]
      %v337 = vld [vmem:[%s3 + $0xf8] sm:$0xff]
      %v338 = vld [vmem:[%s3 + $0x100] sm:$0xff]
      %v339 = vld [vmem:[%s3 + $0x108] sm:$0xff]
      %v340 = vld [vmem:[%s3 + $0x110] sm:$0xff]
      %v341 = vld [vmem:[%s3 + $0x118] sm:$0xff]
      %v342 = vld [vmem:[%s3 + $0x120] sm:$0xff]
      %v343 = vld [vmem:[%s3 + $0x128] sm:$0xff]
      %v344 = vld [vmem:[%s3 + $0x130] sm:$0xff]
      %v345 = vld [vmem:[%s3 + $0x138] sm:$0xff]
      %v346 = vld [vmem:[%s3 + $0x140] sm:$0xff]
      %v347 = vld [vmem:[%s3 + $0x148] sm:$0xff]
      %v348 = vld [vmem:[%s3 + $0x150] sm:$0xff]
      %v349 = vld [vmem:[%s3 + $0x158] sm:$0xff]
      %v350 = vld [vmem:[%s3 + $0x160] sm:$0xff]
      %v351 = vld [vmem:[%s3 + $0x168] sm:$0xff]
      %v352 = vld [vmem:[%s3 + $0x170] sm:$0xff]
      %v353 = vld [vmem:[%s3 + $0x178] sm:$0xff]
      %v354 = vld [vmem:[%s3 + $0x180] sm:$0xff]
      %v355 = vld [vmem:[%s3 + $0x188] sm:$0xff]
      %v356 = vld [vmem:[%s3 + $0x190] sm:$0xff]
      %v357 = vld [vmem:[%s3 + $0x198] sm:$0xff]
      %v358 = vld [vmem:[%s3 + $0x1a0] sm:$0xff]
      %v359 = vld [vmem:[%s3 + $0x1a8] sm:$0xff]
      %v360 = vld [vmem:[%s3 + $0x1b0] sm:$0xff]
      %v361 = vld [vmem:[%s3 + $0x1b8] sm:$0xff]
      %v362 = vld [vmem:[%s3 + $0x1c0] sm:$0xff]
      %v363 = vld [vmem:[%s3 + $0x1c8] sm:$0xff]
      %v364 = vld [vmem:[%s3 + $0x1d0] sm:$0xff]
      %v365 = vld [vmem:[%s3 + $0x1d8] sm:$0xff]
      %v366 = vld [vmem:[%s3 + $0x1e0] sm:$0xff]
      %v367 = vld [vmem:[%s3 + $0x1e8] sm:$0xff]
      %v368 = vld [vmem:[%s3 + $0x1f0] sm:$0xff]
      %v369 = vld [vmem:[%s3 + $0x1f8] sm:$0xff]
      %v370 = vld [vmem:[%s4] sm:$0x1]
      %v372 = vlaneseq
      %v373 = vshrl.u32 %v372, 7
      %v374 = vsub.s32 0, %v373
      %v375 = vrot.slane %v370, %v374
      %v378 = vcombine.high %v305, %v305
      %v380 = vunpack.c.l.s4 1983009808
      %v381 = vunpack.c.0.s8 %v380
      %v382 = vlaneseq
      %v383 = vshrl.u32 %v382, 7
      %v384 = vsub.s32 %v381, %v383
      %v385 = vrot.slane %v305, %v384
      %v387 = vunpack.c.l.s4 1983009808
      %v388 = vunpack.c.0.s8 %v387
      %v389 = vlaneseq
      %v390 = vshrl.u32 %v389, 7
      %v391 = vsub.s32 %v388, %v390
      %v392 = vrot.slane %v378, %v391
      %v393 = vcombine.high %v385, %v385
      %v394 = vcombine.high %v392, %v392
      %399 = vmatprep.subr.mxu0 0.0
      %400 = vmatpush1.msra.mxu0 %v306
      %401 = vmatprep.subr.mxu0 0.0
      %402 = vmatpush1.msra.mxu0 %v307
      %403 = vmatprep.subr.mxu0 0.0
      %404 = vmatpush1.msra.mxu0 %v308
      %405 = vmatprep.subr.mxu0 0.0
      %406 = vmatpush1.msra.mxu0 %v309
      %407 = vmatprep.subr.mxu0 0.0
      %408 = vmatpush1.msra.mxu0 %v310
      %409 = vmatprep.subr.mxu0 0.0
      %410 = vmatpush1.msra.mxu0 %v311
      %411 = vmatprep.subr.mxu0 0.0
      %412 = vmatpush1.msra.mxu0 %v312
      %413 = vmatprep.subr.mxu0 0.0
      %414 = vmatpush1.msra.mxu0 %v313
      %415 = vmatprep.subr.mxu0 0.0
      %416 = vmatpush1.msra.mxu0 %v314
      %417 = vmatprep.subr.mxu0 0.0
      %418 = vmatpush1.msra.mxu0 %v315
      %419 = vmatprep.subr.mxu0 0.0
      %420 = vmatpush1.msra.mxu0 %v316
      %421 = vmatprep.subr.mxu0 0.0
      %422 = vmatpush1.msra.mxu0 %v317
      %423 = vmatprep.subr.mxu0 0.0
      %424 = vmatpush1.msra.mxu0 %v318
      %425 = vmatprep.subr.mxu0 0.0
      %426 = vmatpush1.msra.mxu0 %v319
      %427 = vmatprep.subr.mxu0 0.0
      %428 = vmatpush1.msra.mxu0 %v320
      %429 = vmatprep.subr.mxu0 0.0
      %430 = vmatpush1.msra.mxu0 %v321
      %431 = vmatprep.subr.mxu0 0.0
      %432 = vmatpush1.msra.mxu0 %v322
      %433 = vmatprep.subr.mxu0 0.0
      %434 = vmatpush1.msra.mxu0 %v323
      %435 = vmatprep.subr.mxu0 0.0
      %436 = vmatpush1.msra.mxu0 %v324
      %437 = vmatprep.subr.mxu0 0.0
      %438 = vmatpush1.msra.mxu0 %v325
      %439 = vmatprep.subr.mxu0 0.0
      %440 = vmatpush1.msra.mxu0 %v326
      %441 = vmatprep.subr.mxu0 0.0
      %442 = vmatpush1.msra.mxu0 %v327
      %443 = vmatprep.subr.mxu0 0.0
      %444 = vmatpush1.msra.mxu0 %v328
      %445 = vmatprep.subr.mxu0 0.0
      %446 = vmatpush1.msra.mxu0 %v329
      %447 = vmatprep.subr.mxu0 0.0
      %448 = vmatpush1.msra.mxu0 %v330
      %449 = vmatprep.subr.mxu0 0.0
      %450 = vmatpush1.msra.mxu0 %v331
      %451 = vmatprep.subr.mxu0 0.0
      %452 = vmatpush1.msra.mxu0 %v332
      %453 = vmatprep.subr.mxu0 0.0
      %454 = vmatpush1.msra.mxu0 %v333
      %455 = vmatprep.subr.mxu0 0.0
      %456 = vmatpush1.msra.mxu0 %v334
      %457 = vmatprep.subr.mxu0 0.0
      %458 = vmatpush1.msra.mxu0 %v335
      %459 = vmatprep.subr.mxu0 0.0
      %460 = vmatpush1.msra.mxu0 %v336
      %461 = vmatprep.subr.mxu0 0.0
      %462 = vmatpush1.msra.mxu0 %v337
      %463 = vmatprep.mubr.f32.mxu0 %v393
      %464 = vmatmul.mubr.f32.gmra.mrb[0].mxu0 %v385
      %v465 = vpop.f32.mrb[0].mxu0
      %v466 = vadd.f32 %v375, %v465
      %v467 = vpop.f32.mrb[0].mxu0
      %468 = vdwg.mxu0
      %469 = vmatprep.subr.mxu0 0.0
      %470 = vmatpush1.msra.mxu0 %v338
      %471 = vmatprep.subr.mxu0 0.0
      %472 = vmatpush1.msra.mxu0 %v339
      %473 = vmatprep.subr.mxu0 0.0
      %474 = vmatpush1.msra.mxu0 %v340
      %475 = vmatprep.subr.mxu0 0.0
      %476 = vmatpush1.msra.mxu0 %v341
      %477 = vmatprep.subr.mxu0 0.0
      %478 = vmatpush1.msra.mxu0 %v342
      %479 = vmatprep.subr.mxu0 0.0
      %480 = vmatpush1.msra.mxu0 %v343
      %481 = vmatprep.subr.mxu0 0.0
      %482 = vmatpush1.msra.mxu0 %v344
      %483 = vmatprep.subr.mxu0 0.0
      %484 = vmatpush1.msra.mxu0 %v345
      %485 = vmatprep.subr.mxu0 0.0
      %486 = vmatpush1.msra.mxu0 %v346
      %487 = vmatprep.subr.mxu0 0.0
      %488 = vmatpush1.msra.mxu0 %v347
      %489 = vmatprep.subr.mxu0 0.0
      %490 = vmatpush1.msra.mxu0 %v348
      %491 = vmatprep.subr.mxu0 0.0
      %492 = vmatpush1.msra.mxu0 %v349
      %493 = vmatprep.subr.mxu0 0.0
      %494 = vmatpush1.msra.mxu0 %v350
      %495 = vmatprep.subr.mxu0 0.0
      %496 = vmatpush1.msra.mxu0 %v351
      %497 = vmatprep.subr.mxu0 0.0
      %498 = vmatpush1.msra.mxu0 %v352
      %499 = vmatprep.subr.mxu0 0.0
      %500 = vmatpush1.msra.mxu0 %v353
      %501 = vmatprep.subr.mxu0 0.0
      %502 = vmatpush1.msra.mxu0 %v354
      %503 = vmatprep.subr.mxu0 0.0
      %504 = vmatpush1.msra.mxu0 %v355
      %505 = vmatprep.subr.mxu0 0.0
      %506 = vmatpush1.msra.mxu0 %v356
      %507 = vmatprep.subr.mxu0 0.0
      %508 = vmatpush1.msra.mxu0 %v357
      %509 = vmatprep.subr.mxu0 0.0
      %510 = vmatpush1.msra.mxu0 %v358
      %511 = vmatprep.subr.mxu0 0.0
      %512 = vmatpush1.msra.mxu0 %v359
      %513 = vmatprep.subr.mxu0 0.0
      %514 = vmatpush1.msra.mxu0 %v360
      %515 = vmatprep.subr.mxu0 0.0
      %516 = vmatpush1.msra.mxu0 %v361
      %517 = vmatprep.subr.mxu0 0.0
      %518 = vmatpush1.msra.mxu0 %v362
      %519 = vmatprep.subr.mxu0 0.0
      %520 = vmatpush1.msra.mxu0 %v363
      %521 = vmatprep.subr.mxu0 0.0
      %522 = vmatpush1.msra.mxu0 %v364
      %523 = vmatprep.subr.mxu0 0.0
      %524 = vmatpush1.msra.mxu0 %v365
      %525 = vmatprep.subr.mxu0 0.0
      %526 = vmatpush1.msra.mxu0 %v366
      %527 = vmatprep.subr.mxu0 0.0
      %528 = vmatpush1.msra.mxu0 %v367
      %529 = vmatprep.subr.mxu0 0.0
      %530 = vmatpush1.msra.mxu0 %v368
      %531 = vmatprep.subr.mxu0 0.0
      %532 = vmatpush1.msra.mxu0 %v369
      %533 = vmatprep.mubr.f32.mxu0 %v394
      %534 = vmatmul.mubr.f32.gmra.mrb[0].mxu0 %v392
      %v535 = vpop.f32.mrb[0].mxu0
      %v536 = vadd.f32 %v466, %v535
      %v537 = vpop.f32.mrb[0].mxu0
      %538 = vdwg.mxu0
      %v539 = vmax.f32 %v536, 0.0
      %v540 = vld [vmem:[%s5] sm:$0xff]
      %v541 = vld [vmem:[%s5 + $0x8] sm:$0xff]
      %v542 = vld [vmem:[%s5 + $0x10] sm:$0xff]
      %v543 = vld [vmem:[%s5 + $0x18] sm:$0xff]
      %v544 = vld [vmem:[%s5 + $0x20] sm:$0xff]
      %v545 = vld [vmem:[%s5 + $0x28] sm:$0xff]
      %v546 = vld [vmem:[%s5 + $0x30] sm:$0xff]
      %v547 = vld [vmem:[%s5 + $0x38] sm:$0xff]
      %v548 = vld [vmem:[%s5 + $0x40] sm:$0xff]
      %v549 = vld [vmem:[%s5 + $0x48] sm:$0xff]
      %v550 = vld [vmem:[%s5 + $0x50] sm:$0xff]
      %v551 = vld [vmem:[%s5 + $0x58] sm:$0xff]
      %v552 = vld [vmem:[%s5 + $0x60] sm:$0xff]
      %v553 = vld [vmem:[%s5 + $0x68] sm:$0xff]
      %v554 = vld [vmem:[%s5 + $0x70] sm:$0xff]
      %v555 = vld [vmem:[%s5 + $0x78] sm:$0xff]
      %v556 = vld [vmem:[%s6] sm:$0x1]
      %v558 = vlaneseq
      %v559 = vshrl.u32 %v558, 7
      %v560 = vsub.s32 0, %v559
      %v561 = vrot.slane %v556, %v560
      %563 = vmatprep.subr.mxu0 0.0
      %564 = vmatpush1.msra.mxu0 %v540
      %565 = vmatprep.subr.mxu0 0.0
      %566 = vmatpush1.msra.mxu0 %v541
      %567 = vmatprep.subr.mxu0 0.0
      %568 = vmatpush1.msra.mxu0 %v542
      %569 = vmatprep.subr.mxu0 0.0
      %570 = vmatpush1.msra.mxu0 %v543
      %571 = vmatprep.subr.mxu0 0.0
      %572 = vmatpush1.msra.mxu0 %v544
      %573 = vmatprep.subr.mxu0 0.0
      %574 = vmatpush1.msra.mxu0 %v545
      %575 = vmatprep.subr.mxu0 0.0
      %576 = vmatpush1.msra.mxu0 %v546
      %577 = vmatprep.subr.mxu0 0.0
      %578 = vmatpush1.msra.mxu0 %v547
      %579 = vmatprep.subr.mxu0 0.0
      %580 = vmatpush1.msra.mxu0 %v548
      %581 = vmatprep.subr.mxu0 0.0
      %582 = vmatpush1.msra.mxu0 %v549
      %583 = vmatprep.subr.mxu0 0.0
      %584 = vmatpush1.msra.mxu0 %v550
      %585 = vmatprep.subr.mxu0 0.0
      %586 = vmatpush1.msra.mxu0 %v551
      %587 = vmatprep.subr.mxu0 0.0
      %588 = vmatpush1.msra.mxu0 %v552
      %589 = vmatprep.subr.mxu0 0.0
      %590 = vmatpush1.msra.mxu0 %v553
      %591 = vmatprep.subr.mxu0 0.0
      %592 = vmatpush1.msra.mxu0 %v554
      %593 = vmatprep.subr.mxu0 0.0
      %594 = vmatpush1.msra.mxu0 %v555
      %595 = vmatprep.subr.mxu0 0.0
      %596 = vmatpush1.msra.mxu0 0.0
      %597 = vmatprep.subr.mxu0 0.0
      %598 = vmatpush1.msra.mxu0 0.0
      %599 = vmatprep.subr.mxu0 0.0
      %600 = vmatpush1.msra.mxu0 0.0
      %601 = vmatprep.subr.mxu0 0.0
      %602 = vmatpush1.msra.mxu0 0.0
      %603 = vmatprep.subr.mxu0 0.0
      %604 = vmatpush1.msra.mxu0 0.0
      %605 = vmatprep.subr.mxu0 0.0
      %606 = vmatpush1.msra.mxu0 0.0
      %607 = vmatprep.subr.mxu0 0.0
      %608 = vmatpush1.msra.mxu0 0.0
      %609 = vmatprep.subr.mxu0 0.0
      %610 = vmatpush1.msra.mxu0 0.0
      %611 = vmatprep.subr.mxu0 0.0
      %612 = vmatpush1.msra.mxu0 0.0
      %613 = vmatprep.subr.mxu0 0.0
      %614 = vmatpush1.msra.mxu0 0.0
      %615 = vmatprep.subr.mxu0 0.0
      %616 = vmatpush1.msra.mxu0 0.0
      %617 = vmatprep.subr.mxu0 0.0
      %618 = vmatpush1.msra.mxu0 0.0
      %619 = vmatprep.subr.mxu0 0.0
      %620 = vmatpush1.msra.mxu0 0.0
      %621 = vmatprep.subr.mxu0 0.0
      %622 = vmatpush1.msra.mxu0 0.0
      %623 = vmatprep.subr.mxu0 0.0
      %624 = vmatpush1.msra.mxu0 0.0
      %625 = vmatprep.subr.mxu0 0.0
      %626 = vmatpush1.msra.mxu0 0.0
      %627 = vmatprep.mubr.f32.mxu0 0.0
      %628 = vmatmul.mubr.f32.gmra.mrb[0].mxu0 %v539
      %v629 = vpop.f32.mrb[0].mxu0
      %v630 = vadd.f32 %v561, %v629
      %v631 = vpop.f32.mrb[0].mxu0
      %632 = vdwg.mxu0
      %633 = vst [vmem:[#allocation3] sm:$0x3] %v630
    $region37: #{yaonet_forward.3} parent=1 // pred_fallthru
      _
    // Predicated region
    $region38: #{yaonet_forward.3} parent=1 // pred_check
      _
    $region39: #{yaonet_forward.3} parent=1 // pred_check_branch
      %635 = sbr.rel (0) target = $region41
    $region40: #{yaonet_forward.3} parent=1 // pred_region
      %s637 = ssub.s32 32, 32
      %638 = vsyncadd [#allocation4], %s637
      %s640 = sshll.u32 [#allocation3], 4
      %s641 = int_to_ptr.vmem [resolvable:$true] %s640
      %643 = dma.vmem_to_hbm [thread:$0]  %s641, 32, %s7, [#allocation4]
    $region41: #{yaonet_forward.3} parent=1 // pred_fallthru
      _
    // Predicated region
    $region42: #{yaonet_forward.3} parent=1 // pred_check
      _
    $region43: #{yaonet_forward.3} parent=1 // pred_check_branch
      %645 = sbr.rel (0) target = $region45
    $region44: #{yaonet_forward.3} parent=1 // pred_region
      %646 = dma.done [#allocation4], 32
    $region45: #{yaonet_forward.3} parent=1 // pred_fallthru
      _
    %647 = vsyncpa [#allocation4], 1

// kernel: yaonet_forward.2
$region0: #{yaonet_forward.2}
  #allocation0 [shape = 'u32[]', space=smem, size = 0x4, offset = 0x4, fixed_abs, tag = 'smem constant byte address 0x4 - core index']
  #allocation1 [shape = 'u32[144,128]{1,0:T(1,128)}', space=vmem, size = 0x12000, scoped, tag = 'internal scratch']
  #allocation2 [shape = 'f32[20,4]{1,0:T(8,128)}', space=vmem, size = 0x3000, scoped, tag = 'scratch operand']
  #allocation3 [shape = 'f32[20,64]{1,0:T(8,128)}', space=vmem, size = 0x3000, scoped, tag = 'scratch operand']
  #allocation4 [shape = 'f32[12,64]{1,0:T(8,128)}', space=vmem, size = 0x2000, scoped, tag = 'scratch operand']
  #allocation5 [shape = 'f32[8,64]{1,0:T(8,128)}', space=vmem, size = 0x1000, scoped, tag = 'scratch operand']
  #allocation6 [shape = 'f32[16,20]{1,0:T(8,128)}', space=vmem, size = 0x2000, scoped, tag = 'scratch operand']
  #allocation7 [shape = 'f32[16,320]{1,0:T(8,128)}', space=vmem, size = 0x6000, scoped, tag = 'scratch operand']
  #allocation8 [shape = 'f32[17,64]{1,0:T(8,128)}', space=vmem, size = 0x3000, scoped, tag = 'scratch operand']
  %s0 = inlined_call_operand.vmem [shape: f32[2,16,4], index: 0, kind: input, shape index: {}]
  %s1 = inlined_call_operand.vmem [shape: f32[20,64], index: 1, kind: input, shape index: {}]
  %s2 = inlined_call_operand.vmem [shape: f32[1,64], index: 2, kind: input, shape index: {}]
  %s3 = inlined_call_operand.vmem [shape: f32[5,320,64], index: 3, kind: input, shape index: {}]
  %s4 = inlined_call_operand.vmem [shape: f32[5,1,64], index: 4, kind: input, shape index: {}]
  %s5 = inlined_call_operand.vmem [shape: f32[2,2,64], index: 5, kind: output, shape index: {}]
  %s6 = sld [smem:[#allocation0]]
  $region53: #{yaonet_forward.2} parent=0
    _
  %s8 = ssub.s32 1, %s6
  %s9 = scalar_select 0, %s8, %s6
  loop: start=0, step=1, limit=4
  $region2: #{yaonet_forward.2} parent=0 // loop_pre_header
    _
  $region3: #{yaonet_forward.2} parent=0 // loop_header
    %s11 = sphi 0, %s15
    %p12 = scmp.ge.s32.totalorder %s11, 4
    %s21 = sphi 0, %s23
    %s24 = sphi 0, %s21
    %s25 = sphi 0, %s24
    %s41 = sphi 0, %s25
    %s45 = sphi 0, %s45
    %s47 = sphi 0, %s45
    %s48 = sphi 0, %s47
    %s62 = sphi 0, %s48
    %s66 = sphi 0, %s66
    %s68 = sphi 0, %s66
    %s69 = sphi 0, %s68
    %s83 = sphi 0, %s69
    %s87 = sphi 0, %s87
    %s89 = sphi 0, %s87
    %s90 = sphi 0, %s89
    %s104 = sphi 0, %s90
    %s108 = sphi 0, %s108
    %s110 = sphi 0, %s108
    %s111 = sphi 0, %s110
    %s125 = sphi 0, %s111
    %s131 = sphi 0, %s133
    %s134 = sphi 0, %s131
    %s135 = sphi 0, %s134
    %s151 = sphi 0, %s135
  $region4: #{yaonet_forward.2} parent=0 // loop_header_branch
    %14 = sbr.rel (%p12) target = $region8
  $region5: #{yaonet_forward.2} parent=0 // loop_body
    %s16 = ssub.s32 %s11, 1
    %s17 = ssub.s32 %s11, 2
    %s18 = sadd.s32 %s11, 1
    %s19 = ssub.s32 %s11, %s18
    %p20 = scmp.eq.s32.totalorder %s19, 0
    %s22 = sadd.s32 %s21, 1
    %s23 = scalar_select %p20, %s21, %s22
    %p26 = pneg %p20
    %p27 = scmp.eq.s32.totalorder %s11, 1
    %p28 = por %p26, %p27
    %p29 = scmp.ne.s32.totalorder %s21, %s24
    %p30 = scmp.eq.s32.totalorder %s11, 0
    %p31 = por %p29, %p30
    %p32 = scmp.ne.s32.totalorder %s21, %s24
    %p33 = scmp.eq.s32.totalorder %s16, 1
    %p34 = por %p32, %p33
    %p35 = scmp.ne.s32.totalorder %s24, %s25
    %p36 = scmp.eq.s32.totalorder %s16, 0
    %p37 = por %p35, %p36
    %p38 = scmp.ne.s32.totalorder %s24, %s25
    %p39 = scmp.eq.s32.totalorder %s17, 1
    %p40 = por %p38, %p39
    %p42 = scmp.ne.s32.totalorder %s25, %s41
    %p43 = scmp.eq.s32.totalorder %s17, 0
    %p44 = por %p42, %p43
    %s46 = sadd.s32 %s45, 1
    %p49 = scmp.eq.s32.totalorder %s11, 1
    %p50 = scmp.ne.s32.totalorder %s45, %s47
    %p51 = scmp.eq.s32.totalorder %s11, 0
    %p52 = por %p50, %p51
    %p53 = scmp.ne.s32.totalorder %s45, %s47
    %p54 = scmp.eq.s32.totalorder %s16, 1
    %p55 = por %p53, %p54
    %p56 = scmp.ne.s32.totalorder %s47, %s48
    %p57 = scmp.eq.s32.totalorder %s16, 0
    %p58 = por %p56, %p57
    %p59 = scmp.ne.s32.totalorder %s47, %s48
    %p60 = scmp.eq.s32.totalorder %s17, 1
    %p61 = por %p59, %p60
    %p63 = scmp.ne.s32.totalorder %s48, %s62
    %p64 = scmp.eq.s32.totalorder %s17, 0
    %p65 = por %p63, %p64
    %s67 = sadd.s32 %s66, 1
    %p70 = scmp.eq.s32.totalorder %s11, 1
    %p71 = scmp.ne.s32.totalorder %s66, %s68
    %p72 = scmp.eq.s32.totalorder %s11, 0
    %p73 = por %p71, %p72
    %p74 = scmp.ne.s32.totalorder %s66, %s68
    %p75 = scmp.eq.s32.totalorder %s16, 1
    %p76 = por %p74, %p75
    %p77 = scmp.ne.s32.totalorder %s68, %s69
    %p78 = scmp.eq.s32.totalorder %s16, 0
    %p79 = por %p77, %p78
    %p80 = scmp.ne.s32.totalorder %s68, %s69
    %p81 = scmp.eq.s32.totalorder %s17, 1
    %p82 = por %p80, %p81
    %p84 = scmp.ne.s32.totalorder %s69, %s83
    %p85 = scmp.eq.s32.totalorder %s17, 0
    %p86 = por %p84, %p85
    %s88 = sadd.s32 %s87, 1
    %p91 = scmp.eq.s32.totalorder %s11, 1
    %p92 = scmp.ne.s32.totalorder %s87, %s89
    %p93 = scmp.eq.s32.totalorder %s11, 0
    %p94 = por %p92, %p93
    %p95 = scmp.ne.s32.totalorder %s87, %s89
    %p96 = scmp.eq.s32.totalorder %s16, 1
    %p97 = por %p95, %p96
    %p98 = scmp.ne.s32.totalorder %s89, %s90
    %p99 = scmp.eq.s32.totalorder %s16, 0
    %p100 = por %p98, %p99
    %p101 = scmp.ne.s32.totalorder %s89, %s90
    %p102 = scmp.eq.s32.totalorder %s17, 1
    %p103 = por %p101, %p102
    %p105 = scmp.ne.s32.totalorder %s90, %s104
    %p106 = scmp.eq.s32.totalorder %s17, 0
    %p107 = por %p105, %p106
    %s109 = sadd.s32 %s108, 1
    %p112 = scmp.eq.s32.totalorder %s11, 1
    %p113 = scmp.ne.s32.totalorder %s108, %s110
    %p114 = scmp.eq.s32.totalorder %s11, 0
    %p115 = por %p113, %p114
    %p116 = scmp.ne.s32.totalorder %s108, %s110
    %p117 = scmp.eq.s32.totalorder %s16, 1
    %p118 = por %p116, %p117
    %p119 = scmp.ne.s32.totalorder %s110, %s111
    %p120 = scmp.eq.s32.totalorder %s16, 0
    %p121 = por %p119, %p120
    %p122 = scmp.ne.s32.totalorder %s110, %s111
    %p123 = scmp.eq.s32.totalorder %s17, 1
    %p124 = por %p122, %p123
    %p126 = scmp.ne.s32.totalorder %s111, %s125
    %p127 = scmp.eq.s32.totalorder %s17, 0
    %p128 = por %p126, %p127
    %s129 = ssub.s32 %s11, %s18
    %p130 = scmp.eq.s32.totalorder %s129, 0
    %s132 = sadd.s32 %s131, 1
    %s133 = scalar_select %p130, %s131, %s132
    %p136 = pneg %p130
    %p137 = scmp.eq.s32.totalorder %s11, 1
    %p138 = por %p136, %p137
    %p139 = scmp.ne.s32.totalorder %s131, %s134
    %p140 = scmp.eq.s32.totalorder %s11, 0
    %p141 = por %p139, %p140
    %p142 = scmp.ne.s32.totalorder %s131, %s134
    %p143 = scmp.eq.s32.totalorder %s16, 1
    %p144 = por %p142, %p143
    %p145 = scmp.ne.s32.totalorder %s134, %s135
    %p146 = scmp.eq.s32.totalorder %s16, 0
    %p147 = por %p145, %p146
    %p148 = scmp.ne.s32.totalorder %s134, %s135
    %p149 = scmp.eq.s32.totalorder %s17, 1
    %p150 = por %p148, %p149
    %p152 = scmp.ne.s32.totalorder %s135, %s151
    %p153 = scmp.eq.s32.totalorder %s17, 0
    %p154 = por %p152, %p153
    %p155 = scmp.le.s32.totalorder 1, %s11
    %p156 = scmp.lt.s32.totalorder %s11, 3
    %p157 = pnand %p155, %p156
    %p158 = pneg %p157
    // Predicated region
    $region9: #{yaonet_forward.2} parent=5 // pred_check
      _
    $region10: #{yaonet_forward.2} parent=5 // pred_check_branch
      %160 = sbr.rel (%p157) target = $region12
    $region11: #{yaonet_forward.2} parent=5 // pred_region
      %s161 = ssub.s32 %s11, 1
      // Predicated region
      $region13: #{yaonet_forward.2} parent=11 // pred_check
        %p162 = pneg %p58
      $region14: #{yaonet_forward.2} parent=11 // pred_check_branch
        %164 = sbr.rel (%p162) target = $region16
      $region15: #{yaonet_forward.2} parent=11 // pred_region
        _
      $region16: #{yaonet_forward.2} parent=11 // pred_fallthru
        _
      // Predicated region
      $region17: #{yaonet_forward.2} parent=11 // pred_check
        %p165 = pneg %p79
      $region18: #{yaonet_forward.2} parent=11 // pred_check_branch
        %167 = sbr.rel (%p165) target = $region20
      $region19: #{yaonet_forward.2} parent=11 // pred_region
        _
      $region20: #{yaonet_forward.2} parent=11 // pred_fallthru
        _
      // Predicated region
      $region21: #{yaonet_forward.2} parent=11 // pred_check
        %p168 = pneg %p100
      $region22: #{yaonet_forward.2} parent=11 // pred_check_branch
        %170 = sbr.rel (%p168) target = $region24
      $region23: #{yaonet_forward.2} parent=11 // pred_region
        _
      $region24: #{yaonet_forward.2} parent=11 // pred_fallthru
        _
      // Predicated region
      $region25: #{yaonet_forward.2} parent=11 // pred_check
        %p171 = pneg %p121
      $region26: #{yaonet_forward.2} parent=11 // pred_check_branch
        %173 = sbr.rel (%p171) target = $region28
      $region27: #{yaonet_forward.2} parent=11 // pred_region
        _
      $region28: #{yaonet_forward.2} parent=11 // pred_fallthru
        _
    $region12: #{yaonet_forward.2} parent=5 // pred_fallthru
      _
    %p174 = scmp.lt.s32.totalorder %s11, 2
    // Predicated region
    $region29: #{yaonet_forward.2} parent=5 // pred_check
      %p175 = pneg %p174
    $region30: #{yaonet_forward.2} parent=5 // pred_check_branch
      %177 = sbr.rel (%p175) target = $region32
    $region31: #{yaonet_forward.2} parent=5 // pred_region
      // Predicated region
      $region33: #{yaonet_forward.2} parent=31 // pred_check
        %p178 = pneg %p31
      $region34: #{yaonet_forward.2} parent=31 // pred_check_branch
        %180 = sbr.rel (%p178) target = $region36
      $region35: #{yaonet_forward.2} parent=31 // pred_region
        %p181 = scmp.lt.s32.totalorder %s11, 1
        %s182 = scalar_select %p181, %s11, 1
        %s183 = smul.addr %s182, 2
        %s184 = smul.addr %s183, 8
        %s185 = scalar_lea.vmem %s0, %s184
      $region36: #{yaonet_forward.2} parent=31 // pred_fallthru
        _
    $region32: #{yaonet_forward.2} parent=5 // pred_fallthru
      _
    %p186 = scmp.le.s32.totalorder 1, %s11
    %p187 = scmp.lt.s32.totalorder %s11, 3
    %p188 = pnand %p186, %p187
    %p189 = pneg %p188
    // Predicated region
    $region37: #{yaonet_forward.2} parent=5 // pred_check
      _
    $region38: #{yaonet_forward.2} parent=5 // pred_check_branch
      %191 = sbr.rel (%p188) target = $region40
    $region39: #{yaonet_forward.2} parent=5 // pred_region
      %s192 = ssub.s32 %s11, 1
      %p193 = scmp.lt.s32.totalorder %s16, 1
      %s194 = scalar_select %p193, %s16, 1
      %s195 = smul.addr %s194, 2
      %s196 = smul.addr %s195, 8
      %s197 = scalar_lea.vmem %s0, %s196
      %p198 = pneg %p37
      %p199 = pneg %p34
      %p200 = pneg %p58
      %p201 = pneg %p55
      %p202 = pneg %p79
      %p203 = pneg %p76
      %p204 = pneg %p100
      %p205 = pneg %p97
      %p206 = pneg %p121
      %p207 = pneg %p118
      %p208 = pneg %p147
      %p209 = pneg %p144
      %p210 = scmp.lt.s32.totalorder %s16, 1
      %s211 = scalar_select %p210, %s16, 1
      %s212 = smul.addr %s211, 2
      %s213 = scalar_lea.vmem %s5, %s212
      %p214 = scmp.lt.s32.totalorder %s16, 1
      %s215 = scalar_select %p214, %s16, 1
      %s216 = smul.addr %s215, 2
      %s217 = smul.addr %s216, 8
      %s218 = scalar_lea.vmem %s0, %s217
      %p219 = scmp.lt.s32.totalorder %s16, 1
      %s220 = scalar_select %p219, %s16, 1
      %s221 = smul.addr %s220, 2
      %s222 = scalar_lea.vmem %s5, %s221
      %vm223 = vcmask 25600
      %224 = vst.msk [vmem:[#allocation2] sm:$0x3] %vm223, 0.0
      %225 = vst.msk [vmem:[#allocation2 + $0x12] sm:$0x3] %vm223, 0.0
      %vm226 = vcmask 517120
      %227 = vst.msk [vmem:[#allocation3] sm:$0x3] %vm226, 0.0
      %228 = vst.msk [vmem:[#allocation3 + $0x12] sm:$0x3] %vm226, 0.0
      %229 = vst.msk [vmem:[#allocation4] sm:$0x3] %vm226, 0.0
      %230 = vst.msk [vmem:[#allocation4 + $0xa] sm:$0x3] %vm226, 0.0
      %231 = vst.msk [vmem:[#allocation5] sm:$0x3] %vm226, 0.0
      %232 = vst.msk [vmem:[#allocation5 + $0x6] sm:$0x3] %vm226, 0.0
      %vm233 = vcmask 516096
      %234 = vst.msk [vmem:[#allocation8] sm:$0x1] %vm233, 0.0
      %v235 = vld [vmem:[%s218] sm:$0xff]
      %v236 = vld [vmem:[%s218 + $0x8] sm:$0xff]
      %v237 = vld [vmem:[%s1] sm:$0xff]
      %v238 = vld [vmem:[%s1 + $0x8] sm:$0xff]
      %v239 = vld [vmem:[%s1 + $0x10] sm:$0xf]
      %v240 = vld [vmem:[%s2] sm:$0x1]
      %vm241 = vcmask 31744
      %242 = vst.msk [vmem:[#allocation2 + $0x2] sm:$0xff] %vm241, %v235
      %243 = vst.msk [vmem:[#allocation2 + $0xa] sm:$0xff] %vm241, %v236
      %v244 = vld [vmem:[#allocation2] sm:$0xff]
      %v245 = vld [vmem:[#allocation2 + $0x8] sm:$0xff]
      %246 = vst.msk [vmem:[#allocation6] sm:$0xff] %vm241, %v244
      %247 = vst.msk [vmem:[#allocation6 + $0x8] sm:$0xff] %vm241, %v245
      %v248 = vld [vmem:[#allocation2 + $0x1] sm:$0xff]
      %v249 = vld [vmem:[#allocation2 + $0x9] sm:$0xff]
      %252 = vrot.lane.b32.xlu0 %v248, 4
      %v253 = vpop.permute.xlu0 %252
      %254 = vrot.lane.b32.xlu0 %v249, 4
      %v255 = vpop.permute.xlu0 %254
      %vm258 = vcmask 64544
      %259 = vst.msk [vmem:[#allocation6] sm:$0xff] %vm258, %v253
      %260 = vst.msk [vmem:[#allocation6 + $0x8] sm:$0xff] %vm258, %v255
      %v261 = vld [vmem:[#allocation2 + $0x2] sm:$0xff]
      %v262 = vld [vmem:[#allocation2 + $0xa] sm:$0xff]
      %265 = vrot.lane.b32.xlu0 %v261, 8
      %v266 = vpop.permute.xlu0 %265
      %267 = vrot.lane.b32.xlu0 %v262, 8
      %v268 = vpop.permute.xlu0 %267
      %vm271 = vcmask 97344
      %272 = vst.msk [vmem:[#allocation6] sm:$0xff] %vm271, %v266
      %273 = vst.msk [vmem:[#allocation6 + $0x8] sm:$0xff] %vm271, %v268
      %v274 = vld [vmem:[#allocation2 + $0x3] sm:$0xff]
      %v275 = vld [vmem:[#allocation2 + $0xb] sm:$0xff]
      %278 = vrot.lane.b32.xlu0 %v274, 12
      %v279 = vpop.permute.xlu0 %278
      %280 = vrot.lane.b32.xlu0 %v275, 12
      %v281 = vpop.permute.xlu0 %280
      %vm284 = vcmask 130144
      %285 = vst.msk [vmem:[#allocation6] sm:$0xff] %vm284, %v279
      %286 = vst.msk [vmem:[#allocation6 + $0x8] sm:$0xff] %vm284, %v281
      %v287 = vld [vmem:[#allocation2 + $0x4] sm:$0xff]
      %v288 = vld [vmem:[#allocation2 + $0xc] sm:$0xff]
      %291 = vrot.lane.b32.xlu0 %v287, 16
      %v292 = vpop.permute.xlu0 %291
      %293 = vrot.lane.b32.xlu0 %v288, 16
      %v294 = vpop.permute.xlu0 %293
      %vm297 = vcmask 162944
      %298 = vst.msk [vmem:[#allocation6] sm:$0xff] %vm297, %v292
      %299 = vst.msk [vmem:[#allocation6 + $0x8] sm:$0xff] %vm297, %v294
      %v300 = vld [vmem:[#allocation6] sm:$0xff]
      %v301 = vld [vmem:[#allocation6 + $0x8] sm:$0xff]
      %v303 = vlaneseq
      %v304 = vshrl.u32 %v303, 7
      %v305 = vsub.s32 0, %v304
      %v306 = vrot.slane %v240, %v305
      %vm308 = vcmask 162816
      %v310 = vsel %vm308, %v300, 0
      %v313 = vsel %vm308, %v301, 0
      %vm315 = vcmask 1043456
      %v317 = vsel %vm315, %v239, 0
      %319 = vmatprep.subr.mxu0 0.0
      %320 = vmatpush1.msra.mxu0 %v237
      %321 = vmatprep.subr.mxu0 0.0
      %322 = vmatpush1.msra.mxu0 %v238
      %323 = vmatprep.subr.mxu0 0.0
      %324 = vmatpush1.msra.mxu0 %v317
      %325 = vmatprep.subr.mxu0 0.0
      %326 = vmatpush1.msra.mxu0 0.0
      %327 = vmatprep.subr.mxu0 0.0
      %328 = vmatpush1.msra.mxu0 0.0
      %329 = vmatprep.subr.mxu0 0.0
      %330 = vmatpush1.msra.mxu0 0.0
      %331 = vmatprep.subr.mxu0 0.0
      %332 = vmatpush1.msra.mxu0 0.0
      %333 = vmatprep.subr.mxu0 0.0
      %334 = vmatpush1.msra.mxu0 0.0
      %335 = vmatprep.subr.mxu0 0.0
      %336 = vmatpush1.msra.mxu0 0.0
      %337 = vmatprep.subr.mxu0 0.0
      %338 = vmatpush1.msra.mxu0 0.0
      %339 = vmatprep.subr.mxu0 0.0
      %340 = vmatpush1.msra.mxu0 0.0
      %341 = vmatprep.subr.mxu0 0.0
      %342 = vmatpush1.msra.mxu0 0.0
      %343 = vmatprep.subr.mxu0 0.0
      %344 = vmatpush1.msra.mxu0 0.0
      %345 = vmatprep.subr.mxu0 0.0
      %346 = vmatpush1.msra.mxu0 0.0
      %347 = vmatprep.subr.mxu0 0.0
      %348 = vmatpush1.msra.mxu0 0.0
      %349 = vmatprep.subr.mxu0 0.0
      %350 = vmatpush1.msra.mxu0 0.0
      %351 = vmatprep.subr.mxu0 0.0
      %352 = vmatpush1.msra.mxu0 0.0
      %353 = vmatprep.subr.mxu0 0.0
      %354 = vmatpush1.msra.mxu0 0.0
      %355 = vmatprep.subr.mxu0 0.0
      %356 = vmatpush1.msra.mxu0 0.0
      %357 = vmatprep.subr.mxu0 0.0
      %358 = vmatpush1.msra.mxu0 0.0
      %359 = vmatprep.subr.mxu0 0.0
      %360 = vmatpush1.msra.mxu0 0.0
      %361 = vmatprep.subr.mxu0 0.0
      %362 = vmatpush1.msra.mxu0 0.0
      %363 = vmatprep.subr.mxu0 0.0
      %364 = vmatpush1.msra.mxu0 0.0
      %365 = vmatprep.subr.mxu0 0.0
      %366 = vmatpush1.msra.mxu0 0.0
      %367 = vmatprep.subr.mxu0 0.0
      %368 = vmatpush1.msra.mxu0 0.0
      %369 = vmatprep.subr.mxu0 0.0
      %370 = vmatpush1.msra.mxu0 0.0
      %371 = vmatprep.subr.mxu0 0.0
      %372 = vmatpush1.msra.mxu0 0.0
      %373 = vmatprep.subr.mxu0 0.0
      %374 = vmatpush1.msra.mxu0 0.0
      %375 = vmatprep.subr.mxu0 0.0
      %376 = vmatpush1.msra.mxu0 0.0
      %377 = vmatprep.subr.mxu0 0.0
      %378 = vmatpush1.msra.mxu0 0.0
      %379 = vmatprep.subr.mxu0 0.0
      %380 = vmatpush1.msra.mxu0 0.0
      %381 = vmatprep.subr.mxu0 0.0
      %382 = vmatpush1.msra.mxu0 0.0
      %383 = vmatprep.mubr.f32.mxu0 0.0
      %384 = vmatmul.mubr.f32.gmra.mrb[0].mxu0 %v310
      %v385 = vpop.f32.mrb[0].mxu0
      %v386 = vadd.f32 %v306, %v385
      %v387 = vpop.f32.mrb[0].mxu0
      %388 = vmatprep.mubr.f32.mxu0 0.0
      %389 = vmatmul.mubr.f32.gmra.mrb[0].mxu0 %v313
      %v390 = vpop.f32.mrb[0].mxu0
      %v391 = vadd.f32 %v306, %v390
      %v392 = vpop.f32.mrb[0].mxu0
      %393 = vdwg.mxu0
      %v394 = vmax.f32 %v386, 0.0
      %v395 = vmax.f32 %v391, 0.0
      %v396 = vld [vmem:[%s3] sm:$0xff]
      %v397 = vld [vmem:[%s3 + $0x8] sm:$0xff]
      %v398 = vld [vmem:[%s3 + $0x10] sm:$0xff]
      %v399 = vld [vmem:[%s3 + $0x18] sm:$0xff]
      %v400 = vld [vmem:[%s3 + $0x20] sm:$0xff]
      %v401 = vld [vmem:[%s3 + $0x28] sm:$0xff]
      %v402 = vld [vmem:[%s3 + $0x30] sm:$0xff]
      %v403 = vld [vmem:[%s3 + $0x38] sm:$0xff]
      %v404 = vld [vmem:[%s3 + $0x40] sm:$0xff]
      %v405 = vld [vmem:[%s3 + $0x48] sm:$0xff]
      %v406 = vld [vmem:[%s3 + $0x50] sm:$0xff]
      %v407 = vld [vmem:[%s3 + $0x58] sm:$0xff]
      %v408 = vld [vmem:[%s3 + $0x60] sm:$0xff]
      %v409 = vld [vmem:[%s3 + $0x68] sm:$0xff]
      %v410 = vld [vmem:[%s3 + $0x70] sm:$0xff]
      %v411 = vld [vmem:[%s3 + $0x78] sm:$0xff]
      %v412 = vld [vmem:[%s3 + $0x80] sm:$0xff]
      %v413 = vld [vmem:[%s3 + $0x88] sm:$0xff]
      %v414 = vld [vmem:[%s3 + $0x90] sm:$0xff]
      %v415 = vld [vmem:[%s3 + $0x98] sm:$0xff]
      %v416 = vld [vmem:[%s3 + $0xa0] sm:$0xff]
      %v417 = vld [vmem:[%s3 + $0xa8] sm:$0xff]
      %v418 = vld [vmem:[%s3 + $0xb0] sm:$0xff]
      %v419 = vld [vmem:[%s3 + $0xb8] sm:$0xff]
      %v420 = vld [vmem:[%s3 + $0xc0] sm:$0xff]
      %v421 = vld [vmem:[%s3 + $0xc8] sm:$0xff]
      %v422 = vld [vmem:[%s3 + $0xd0] sm:$0xff]
      %v423 = vld [vmem:[%s3 + $0xd8] sm:$0xff]
      %v424 = vld [vmem:[%s3 + $0xe0] sm:$0xff]
      %v425 = vld [vmem:[%s3 + $0xe8] sm:$0xff]
      %v426 = vld [vmem:[%s3 + $0xf0] sm:$0xff]
      %v427 = vld [vmem:[%s3 + $0xf8] sm:$0xff]
      %v428 = vld [vmem:[%s3 + $0x100] sm:$0xff]
      %v429 = vld [vmem:[%s3 + $0x108] sm:$0xff]
      %v430 = vld [vmem:[%s3 + $0x110] sm:$0xff]
      %v431 = vld [vmem:[%s3 + $0x118] sm:$0xff]
      %v432 = vld [vmem:[%s3 + $0x120] sm:$0xff]
      %v433 = vld [vmem:[%s3 + $0x128] sm:$0xff]
      %v434 = vld [vmem:[%s3 + $0x130] sm:$0xff]
      %v435 = vld [vmem:[%s3 + $0x138] sm:$0xff]
      %v436 = vld [vmem:[%s4] sm:$0x1]
      %vm437 = vcmask 523264
      %438 = vst.msk [vmem:[#allocation3 + $0x2] sm:$0xff] %vm437, %v394
      %439 = vst.msk [vmem:[#allocation3 + $0xa] sm:$0xff] %vm437, %v395
      %v440 = vld [vmem:[#allocation3] sm:$0xff]
      %v441 = vld [vmem:[#allocation3 + $0x8] sm:$0xff]
      %442 = vst.msk [vmem:[#allocation7] sm:$0xff] %vm437, %v440
      %443 = vst.msk [vmem:[#allocation7 + $0x18] sm:$0xff] %vm437, %v441
      %v444 = vld [vmem:[#allocation3 + $0x1] sm:$0xff]
      %v445 = vld [vmem:[#allocation3 + $0x9] sm:$0xff]
      %448 = vrot.lane.b32.xlu0 %v444, 64
      %v449 = vpop.permute.xlu0 %448
      %450 = vrot.lane.b32.xlu0 %v445, 64
      %v451 = vpop.permute.xlu0 %450
      %vm454 = vcmask 1048064
      %455 = vst.msk [vmem:[#allocation7] sm:$0xff] %vm454, %v449
      %456 = vst.msk [vmem:[#allocation7 + $0x18] sm:$0xff] %vm454, %v451
      %v457 = vld [vmem:[#allocation3 + $0x2] sm:$0xff]
      %v458 = vld [vmem:[#allocation3 + $0xa] sm:$0xff]
      %459 = vst.msk [vmem:[#allocation7 + $0x8] sm:$0xff] %vm437, %v457
      %460 = vst.msk [vmem:[#allocation7 + $0x20] sm:$0xff] %vm437, %v458
      %v461 = vld [vmem:[#allocation3 + $0x3] sm:$0xff]
      %v462 = vld [vmem:[#allocation3 + $0xb] sm:$0xff]
      %465 = vrot.lane.b32.xlu0 %v461, 64
      %v466 = vpop.permute.xlu0 %465
      %467 = vrot.lane.b32.xlu0 %v462, 64
      %v468 = vpop.permute.xlu0 %467
      %471 = vst.msk [vmem:[#allocation7 + $0x8] sm:$0xff] %vm454, %v466
      %472 = vst.msk [vmem:[#allocation7 + $0x20] sm:$0xff] %vm454, %v468
      %v473 = vld [vmem:[#allocation3 + $0x4] sm:$0xff]
      %v474 = vld [vmem:[#allocation3 + $0xc] sm:$0xff]
      %475 = vst.msk [vmem:[#allocation7 + $0x10] sm:$0xff] %vm437, %v473
      %476 = vst.msk [vmem:[#allocation7 + $0x28] sm:$0xff] %vm437, %v474
      %v477 = vld [vmem:[#allocation7] sm:$0xff]
      %v478 = vld [vmem:[#allocation7 + $0x8] sm:$0xff]
      %v479 = vld [vmem:[#allocation7 + $0x10] sm:$0xff]
      %v480 = vld [vmem:[#allocation7 + $0x18] sm:$0xff]
      %v481 = vld [vmem:[#allocation7 + $0x20] sm:$0xff]
      %v482 = vld [vmem:[#allocation7 + $0x28] sm:$0xff]
      %v484 = vlaneseq
      %v485 = vshrl.u32 %v484, 7
      %v486 = vsub.s32 0, %v485
      %v487 = vrot.slane %v436, %v486
      %v490 = vsel %vm437, %v479, 0
      %v493 = vsel %vm437, %v482, 0
      %495 = vmatprep.subr.mxu0 0.0
      %496 = vmatpush1.msra.mxu0 %v396
      %497 = vmatprep.subr.mxu0 0.0
      %498 = vmatpush1.msra.mxu0 %v397
      %499 = vmatprep.subr.mxu0 0.0
      %500 = vmatpush1.msra.mxu0 %v398
      %501 = vmatprep.subr.mxu0 0.0
      %502 = vmatpush1.msra.mxu0 %v399
      %503 = vmatprep.subr.mxu0 0.0
      %504 = vmatpush1.msra.mxu0 %v400
      %505 = vmatprep.subr.mxu0 0.0
      %506 = vmatpush1.msra.mxu0 %v401
      %507 = vmatprep.subr.mxu0 0.0
      %508 = vmatpush1.msra.mxu0 %v402
      %509 = vmatprep.subr.mxu0 0.0
      %510 = vmatpush1.msra.mxu0 %v403
      %511 = vmatprep.subr.mxu0 0.0
      %512 = vmatpush1.msra.mxu0 %v404
      %513 = vmatprep.subr.mxu0 0.0
      %514 = vmatpush1.msra.mxu0 %v405
      %515 = vmatprep.subr.mxu0 0.0
      %516 = vmatpush1.msra.mxu0 %v406
      %517 = vmatprep.subr.mxu0 0.0
      %518 = vmatpush1.msra.mxu0 %v407
      %519 = vmatprep.subr.mxu0 0.0
      %520 = vmatpush1.msra.mxu0 %v408
      %521 = vmatprep.subr.mxu0 0.0
      %522 = vmatpush1.msra.mxu0 %v409
      %523 = vmatprep.subr.mxu0 0.0
      %524 = vmatpush1.msra.mxu0 %v410
      %525 = vmatprep.subr.mxu0 0.0
      %526 = vmatpush1.msra.mxu0 %v411
      %527 = vmatprep.subr.mxu0 0.0
      %528 = vmatpush1.msra.mxu0 %v412
      %529 = vmatprep.subr.mxu0 0.0
      %530 = vmatpush1.msra.mxu0 %v413
      %531 = vmatprep.subr.mxu0 0.0
      %532 = vmatpush1.msra.mxu0 %v414
      %533 = vmatprep.subr.mxu0 0.0
      %534 = vmatpush1.msra.mxu0 %v415
      %535 = vmatprep.subr.mxu0 0.0
      %536 = vmatpush1.msra.mxu0 %v416
      %537 = vmatprep.subr.mxu0 0.0
      %538 = vmatpush1.msra.mxu0 %v417
      %539 = vmatprep.subr.mxu0 0.0
      %540 = vmatpush1.msra.mxu0 %v418
      %541 = vmatprep.subr.mxu0 0.0
      %542 = vmatpush1.msra.mxu0 %v419
      %543 = vmatprep.subr.mxu0 0.0
      %544 = vmatpush1.msra.mxu0 %v420
      %545 = vmatprep.subr.mxu0 0.0
      %546 = vmatpush1.msra.mxu0 %v421
      %547 = vmatprep.subr.mxu0 0.0
      %548 = vmatpush1.msra.mxu0 %v422
      %549 = vmatprep.subr.mxu0 0.0
      %550 = vmatpush1.msra.mxu0 %v423
      %551 = vmatprep.subr.mxu0 0.0
      %552 = vmatpush1.msra.mxu0 %v424
      %553 = vmatprep.subr.mxu0 0.0
      %554 = vmatpush1.msra.mxu0 %v425
      %555 = vmatprep.subr.mxu0 0.0
      %556 = vmatpush1.msra.mxu0 %v426
      %557 = vmatprep.subr.mxu0 0.0
      %558 = vmatpush1.msra.mxu0 %v427
      %559 = vmatprep.mubr.f32.mxu0 %v478
      %560 = vmatmul.mubr.f32.gmra.mrb[0].mxu0 %v477
      %v561 = vpop.f32.mrb[0].mxu0
      %v562 = vadd.f32 %v487, %v561
      %v563 = vpop.f32.mrb[0].mxu0
      %564 = vmatprep.mubr.f32.mxu0 %v481
      %565 = vmatmul.mubr.f32.gmra.mrb[0].mxu0 %v480
      %v566 = vpop.f32.mrb[0].mxu0
      %v567 = vadd.f32 %v487, %v566
      %v568 = vpop.f32.mrb[0].mxu0
      %569 = vdwg.mxu0
      %570 = vmatprep.subr.mxu0 0.0
      %571 = vmatpush1.msra.mxu0 %v428
      %572 = vmatprep.subr.mxu0 0.0
      %573 = vmatpush1.msra.mxu0 %v429
      %574 = vmatprep.subr.mxu0 0.0
      %575 = vmatpush1.msra.mxu0 %v430
      %576 = vmatprep.subr.mxu0 0.0
      %577 = vmatpush1.msra.mxu0 %v431
      %578 = vmatprep.subr.mxu0 0.0
      %579 = vmatpush1.msra.mxu0 %v432
      %580 = vmatprep.subr.mxu0 0.0
      %581 = vmatpush1.msra.mxu0 %v433
      %582 = vmatprep.subr.mxu0 0.0
      %583 = vmatpush1.msra.mxu0 %v434
      %584 = vmatprep.subr.mxu0 0.0
      %585 = vmatpush1.msra.mxu0 %v435
      %586 = vmatprep.subr.mxu0 0.0
      %587 = vmatpush1.msra.mxu0 0.0
      %588 = vmatprep.subr.mxu0 0.0
      %589 = vmatpush1.msra.mxu0 0.0
      %590 = vmatprep.subr.mxu0 0.0
      %591 = vmatpush1.msra.mxu0 0.0
      %592 = vmatprep.subr.mxu0 0.0
      %593 = vmatpush1.msra.mxu0 0.0
      %594 = vmatprep.subr.mxu0 0.0
      %595 = vmatpush1.msra.mxu0 0.0
      %596 = vmatprep.subr.mxu0 0.0
      %597 = vmatpush1.msra.mxu0 0.0
      %598 = vmatprep.subr.mxu0 0.0
      %599 = vmatpush1.msra.mxu0 0.0
      %600 = vmatprep.subr.mxu0 0.0
      %601 = vmatpush1.msra.mxu0 0.0
      %602 = vmatprep.subr.mxu0 0.0
      %603 = vmatpush1.msra.mxu0 0.0
      %604 = vmatprep.subr.mxu0 0.0
      %605 = vmatpush1.msra.mxu0 0.0
      %606 = vmatprep.subr.mxu0 0.0
      %607 = vmatpush1.msra.mxu0 0.0
      %608 = vmatprep.subr.mxu0 0.0
      %609 = vmatpush1.msra.mxu0 0.0
      %610 = vmatprep.subr.mxu0 0.0
      %611 = vmatpush1.msra.mxu0 0.0
      %612 = vmatprep.subr.mxu0 0.0
      %613 = vmatpush1.msra.mxu0 0.0
      %614 = vmatprep.subr.mxu0 0.0
      %615 = vmatpush1.msra.mxu0 0.0
      %616 = vmatprep.subr.mxu0 0.0
      %617 = vmatpush1.msra.mxu0 0.0
      %618 = vmatprep.subr.mxu0 0.0
      %619 = vmatpush1.msra.mxu0 0.0
      %620 = vmatprep.subr.mxu0 0.0
      %621 = vmatpush1.msra.mxu0 0.0
      %622 = vmatprep.subr.mxu0 0.0
      %623 = vmatpush1.msra.mxu0 0.0
      %624 = vmatprep.subr.mxu0 0.0
      %625 = vmatpush1.msra.mxu0 0.0
      %626 = vmatprep.subr.mxu0 0.0
      %627 = vmatpush1.msra.mxu0 0.0
      %628 = vmatprep.subr.mxu0 0.0
      %629 = vmatpush1.msra.mxu0 0.0
      %630 = vmatprep.subr.mxu0 0.0
      %631 = vmatpush1.msra.mxu0 0.0
      %632 = vmatprep.subr.mxu0 0.0
      %633 = vmatpush1.msra.mxu0 0.0
      %634 = vmatprep.mubr.f32.mxu0 0.0
      %635 = vmatmul.mubr.f32.gmra.mrb[0].mxu0 %v490
      %v636 = vpop.f32.mrb[0].mxu0
      %v637 = vadd.f32 %v562, %v636
      %v638 = vpop.f32.mrb[0].mxu0
      %639 = vmatprep.mubr.f32.mxu0 0.0
      %640 = vmatmul.mubr.f32.gmra.mrb[0].mxu0 %v493
      %v641 = vpop.f32.mrb[0].mxu0
      %v642 = vadd.f32 %v567, %v641
      %v643 = vpop.f32.mrb[0].mxu0
      %644 = vdwg.mxu0
      %v645 = vmax.f32 %v637, 0.0
      %v646 = vmax.f32 %v642, 0.0
      %647 = vst.msk [vmem:[#allocation8 + $0x1] sm:$0xff] %vm437, %v645
      %648 = vst.msk [vmem:[#allocation8 + $0x9] sm:$0xff] %vm437, %v646
      %v649 = vld [vmem:[#allocation8] ss:$2 sm:$0xff]
      %s650 = scalar_lea.vmem [#allocation8], 1
      %v651 = vld [vmem:[%s650] ss:$2 sm:$0xff]
      %s652 = scalar_lea.vmem [#allocation8], 2
      %v653 = vld [vmem:[%s652] ss:$2 sm:$0xff]
      %v654 = vmax.f32 %v649, %v651
      %v655 = vmax.f32 %v654, %v653
      %s656 = scalar_lea.vmem %s3, 320
      %v657 = vld [vmem:[%s656] sm:$0xff]
      %v658 = vld [vmem:[%s656 + $0x8] sm:$0xff]
      %v659 = vld [vmem:[%s656 + $0x10] sm:$0xff]
      %v660 = vld [vmem:[%s656 + $0x18] sm:$0xff]
      %v661 = vld [vmem:[%s656 + $0x20] sm:$0xff]
      %v662 = vld [vmem:[%s656 + $0x28] sm:$0xff]
      %v663 = vld [vmem:[%s656 + $0x30] sm:$0xff]
      %v664 = vld [vmem:[%s656 + $0x38] sm:$0xff]
      %v665 = vld [vmem:[%s656 + $0x40] sm:$0xff]
      %v666 = vld [vmem:[%s656 + $0x48] sm:$0xff]
      %v667 = vld [vmem:[%s656 + $0x50] sm:$0xff]
      %v668 = vld [vmem:[%s656 + $0x58] sm:$0xff]
      %v669 = vld [vmem:[%s656 + $0x60] sm:$0xff]
      %v670 = vld [vmem:[%s656 + $0x68] sm:$0xff]
      %v671 = vld [vmem:[%s656 + $0x70] sm:$0xff]
      %v672 = vld [vmem:[%s656 + $0x78] sm:$0xff]
      %v673 = vld [vmem:[%s656 + $0x80] sm:$0xff]
      %v674 = vld [vmem:[%s656 + $0x88] sm:$0xff]
      %v675 = vld [vmem:[%s656 + $0x90] sm:$0xff]
      %v676 = vld [vmem:[%s656 + $0x98] sm:$0xff]
      %v677 = vld [vmem:[%s656 + $0xa0] sm:$0xff]
      %v678 = vld [vmem:[%s656 + $0xa8] sm:$0xff]
      %v679 = vld [vmem:[%s656 + $0xb0] sm:$0xff]
      %v680 = vld [vmem:[%s656 + $0xb8] sm:$0xff]
      %v681 = vld [vmem:[%s656 + $0xc0] sm:$0xff]
      %v682 = vld [vmem:[%s656 + $0xc8] sm:$0xff]
      %v683 = vld [vmem:[%s656 + $0xd0] sm:$0xff]
      %v684 = vld [vmem:[%s656 + $0xd8] sm:$0xff]
      %v685 = vld [vmem:[%s656 + $0xe0] sm:$0xff]
      %v686 = vld [vmem:[%s656 + $0xe8] sm:$0xff]
      %v687 = vld [vmem:[%s656 + $0xf0] sm:$0xff]
      %v688 = vld [vmem:[%s656 + $0xf8] sm:$0xff]
      %v689 = vld [vmem:[%s656 + $0x100] sm:$0xff]
      %v690 = vld [vmem:[%s656 + $0x108] sm:$0xff]
      %v691 = vld [vmem:[%s656 + $0x110] sm:$0xff]
      %v692 = vld [vmem:[%s656 + $0x118] sm:$0xff]
      %v693 = vld [vmem:[%s656 + $0x120] sm:$0xff]
      %v694 = vld [vmem:[%s656 + $0x128] sm:$0xff]
      %v695 = vld [vmem:[%s656 + $0x130] sm:$0xff]
      %v696 = vld [vmem:[%s656 + $0x138] sm:$0xff]
      %s697 = scalar_lea.vmem %s4, 1
      %v698 = vld [vmem:[%s697] sm:$0x1]
      %699 = vst.msk [vmem:[#allocation4 + $0x2] sm:$0xff] %vm437, %v655
      %v700 = vld [vmem:[#allocation4] sm:$0xff]
      %701 = vst.msk [vmem:[#allocation7] sm:$0xff] %vm437, %v700
      %v702 = vld [vmem:[#allocation4 + $0x1] sm:$0xff]
      %704 = vrot.lane.b32.xlu0 %v702, 64
      %v705 = vpop.permute.xlu0 %704
      %707 = vst.msk [vmem:[#allocation7] sm:$0xff] %vm454, %v705
      %v708 = vld [vmem:[#allocation4 + $0x2] sm:$0xff]
      %709 = vst.msk [vmem:[#allocation7 + $0x8] sm:$0xff] %vm437, %v708
      %v710 = vld [vmem:[#allocation4 + $0x3] sm:$0xff]
      %712 = vrot.lane.b32.xlu0 %v710, 64
      %v713 = vpop.permute.xlu0 %712
      %715 = vst.msk [vmem:[#allocation7 + $0x8] sm:$0xff] %vm454, %v713
      %v716 = vld [vmem:[#allocation4 + $0x4] sm:$0xff]
      %717 = vst.msk [vmem:[#allocation7 + $0x10] sm:$0xff] %vm437, %v716
      %v718 = vld [vmem:[#allocation7] sm:$0xff]
      %v719 = vld [vmem:[#allocation7 + $0x8] sm:$0xff]
      %v720 = vld [vmem:[#allocation7 + $0x10] sm:$0xff]
      %v722 = vlaneseq
      %v723 = vshrl.u32 %v722, 7
      %v724 = vsub.s32 0, %v723
      %v725 = vrot.slane %v698, %v724
      %v728 = vsel %vm437, %v720, 0
      %730 = vmatprep.subr.mxu0 0.0
      %731 = vmatpush1.msra.mxu0 %v657
      %732 = vmatprep.subr.mxu0 0.0
      %733 = vmatpush1.msra.mxu0 %v658
      %734 = vmatprep.subr.mxu0 0.0
      %735 = vmatpush1.msra.mxu0 %v659
      %736 = vmatprep.subr.mxu0 0.0
      %737 = vmatpush1.msra.mxu0 %v660
      %738 = vmatprep.subr.mxu0 0.0
      %739 = vmatpush1.msra.mxu0 %v661
      %740 = vmatprep.subr.mxu0 0.0
      %741 = vmatpush1.msra.mxu0 %v662
      %742 = vmatprep.subr.mxu0 0.0
      %743 = vmatpush1.msra.mxu0 %v663
      %744 = vmatprep.subr.mxu0 0.0
      %745 = vmatpush1.msra.mxu0 %v664
      %746 = vmatprep.subr.mxu0 0.0
      %747 = vmatpush1.msra.mxu0 %v665
      %748 = vmatprep.subr.mxu0 0.0
      %749 = vmatpush1.msra.mxu0 %v666
      %750 = vmatprep.subr.mxu0 0.0
      %751 = vmatpush1.msra.mxu0 %v667
      %752 = vmatprep.subr.mxu0 0.0
      %753 = vmatpush1.msra.mxu0 %v668
      %754 = vmatprep.subr.mxu0 0.0
      %755 = vmatpush1.msra.mxu0 %v669
      %756 = vmatprep.subr.mxu0 0.0
      %757 = vmatpush1.msra.mxu0 %v670
      %758 = vmatprep.subr.mxu0 0.0
      %759 = vmatpush1.msra.mxu0 %v671
      %760 = vmatprep.subr.mxu0 0.0
      %761 = vmatpush1.msra.mxu0 %v672
      %762 = vmatprep.subr.mxu0 0.0
      %763 = vmatpush1.msra.mxu0 %v673
      %764 = vmatprep.subr.mxu0 0.0
      %765 = vmatpush1.msra.mxu0 %v674
      %766 = vmatprep.subr.mxu0 0.0
      %767 = vmatpush1.msra.mxu0 %v675
      %768 = vmatprep.subr.mxu0 0.0
      %769 = vmatpush1.msra.mxu0 %v676
      %770 = vmatprep.subr.mxu0 0.0
      %771 = vmatpush1.msra.mxu0 %v677
      %772 = vmatprep.subr.mxu0 0.0
      %773 = vmatpush1.msra.mxu0 %v678
      %774 = vmatprep.subr.mxu0 0.0
      %775 = vmatpush1.msra.mxu0 %v679
      %776 = vmatprep.subr.mxu0 0.0
      %777 = vmatpush1.msra.mxu0 %v680
      %778 = vmatprep.subr.mxu0 0.0
      %779 = vmatpush1.msra.mxu0 %v681
      %780 = vmatprep.subr.mxu0 0.0
      %781 = vmatpush1.msra.mxu0 %v682
      %782 = vmatprep.subr.mxu0 0.0
      %783 = vmatpush1.msra.mxu0 %v683
      %784 = vmatprep.subr.mxu0 0.0
      %785 = vmatpush1.msra.mxu0 %v684
      %786 = vmatprep.subr.mxu0 0.0
      %787 = vmatpush1.msra.mxu0 %v685
      %788 = vmatprep.subr.mxu0 0.0
      %789 = vmatpush1.msra.mxu0 %v686
      %790 = vmatprep.subr.mxu0 0.0
      %791 = vmatpush1.msra.mxu0 %v687
      %792 = vmatprep.subr.mxu0 0.0
      %793 = vmatpush1.msra.mxu0 %v688
      %794 = vmatprep.mubr.f32.mxu0 %v719
      %795 = vmatmul.mubr.f32.gmra.mrb[0].mxu0 %v718
      %v796 = vpop.f32.mrb[0].mxu0
      %v797 = vadd.f32 %v725, %v796
      %v798 = vpop.f32.mrb[0].mxu0
      %799 = vdwg.mxu0
      %800 = vmatprep.subr.mxu0 0.0
      %801 = vmatpush1.msra.mxu0 %v689
      %802 = vmatprep.subr.mxu0 0.0
      %803 = vmatpush1.msra.mxu0 %v690
      %804 = vmatprep.subr.mxu0 0.0
      %805 = vmatpush1.msra.mxu0 %v691
      %806 = vmatprep.subr.mxu0 0.0
      %807 = vmatpush1.msra.mxu0 %v692
      %808 = vmatprep.subr.mxu0 0.0
      %809 = vmatpush1.msra.mxu0 %v693
      %810 = vmatprep.subr.mxu0 0.0
      %811 = vmatpush1.msra.mxu0 %v694
      %812 = vmatprep.subr.mxu0 0.0
      %813 = vmatpush1.msra.mxu0 %v695
      %814 = vmatprep.subr.mxu0 0.0
      %815 = vmatpush1.msra.mxu0 %v696
      %816 = vmatprep.subr.mxu0 0.0
      %817 = vmatpush1.msra.mxu0 0.0
      %818 = vmatprep.subr.mxu0 0.0
      %819 = vmatpush1.msra.mxu0 0.0
      %820 = vmatprep.subr.mxu0 0.0
      %821 = vmatpush1.msra.mxu0 0.0
      %822 = vmatprep.subr.mxu0 0.0
      %823 = vmatpush1.msra.mxu0 0.0
      %824 = vmatprep.subr.mxu0 0.0
      %825 = vmatpush1.msra.mxu0 0.0
      %826 = vmatprep.subr.mxu0 0.0
      %827 = vmatpush1.msra.mxu0 0.0
      %828 = vmatprep.subr.mxu0 0.0
      %829 = vmatpush1.msra.mxu0 0.0
      %830 = vmatprep.subr.mxu0 0.0
      %831 = vmatpush1.msra.mxu0 0.0
      %832 = vmatprep.subr.mxu0 0.0
      %833 = vmatpush1.msra.mxu0 0.0
      %834 = vmatprep.subr.mxu0 0.0
      %835 = vmatpush1.msra.mxu0 0.0
      %836 = vmatprep.subr.mxu0 0.0
      %837 = vmatpush1.msra.mxu0 0.0
      %838 = vmatprep.subr.mxu0 0.0
      %839 = vmatpush1.msra.mxu0 0.0
      %840 = vmatprep.subr.mxu0 0.0
      %841 = vmatpush1.msra.mxu0 0.0
      %842 = vmatprep.subr.mxu0 0.0
      %843 = vmatpush1.msra.mxu0 0.0
      %844 = vmatprep.subr.mxu0 0.0
      %845 = vmatpush1.msra.mxu0 0.0
      %846 = vmatprep.subr.mxu0 0.0
      %847 = vmatpush1.msra.mxu0 0.0
      %848 = vmatprep.subr.mxu0 0.0
      %849 = vmatpush1.msra.mxu0 0.0
      %850 = vmatprep.subr.mxu0 0.0
      %851 = vmatpush1.msra.mxu0 0.0
      %852 = vmatprep.subr.mxu0 0.0
      %853 = vmatpush1.msra.mxu0 0.0
      %854 = vmatprep.subr.mxu0 0.0
      %855 = vmatpush1.msra.mxu0 0.0
      %856 = vmatprep.subr.mxu0 0.0
      %857 = vmatpush1.msra.mxu0 0.0
      %858 = vmatprep.subr.mxu0 0.0
      %859 = vmatpush1.msra.mxu0 0.0
      %860 = vmatprep.subr.mxu0 0.0
      %861 = vmatpush1.msra.mxu0 0.0
      %862 = vmatprep.subr.mxu0 0.0
      %863 = vmatpush1.msra.mxu0 0.0
      %864 = vmatprep.mubr.f32.mxu0 0.0
      %865 = vmatmul.mubr.f32.gmra.mrb[0].mxu0 %v728
      %v866 = vpop.f32.mrb[0].mxu0
      %v867 = vadd.f32 %v797, %v866
      %v868 = vpop.f32.mrb[0].mxu0
      %869 = vdwg.mxu0
      %v870 = vmax.f32 %v867, 0.0
      %s871 = scalar_lea.vmem %s3, 640
      %v872 = vld [vmem:[%s871] sm:$0xff]
      %v873 = vld [vmem:[%s871 + $0x8] sm:$0xff]
      %v874 = vld [vmem:[%s871 + $0x10] sm:$0xff]
      %v875 = vld [vmem:[%s871 + $0x18] sm:$0xff]
      %v876 = vld [vmem:[%s871 + $0x20] sm:$0xff]
      %v877 = vld [vmem:[%s871 + $0x28] sm:$0xff]
      %v878 = vld [vmem:[%s871 + $0x30] sm:$0xff]
      %v879 = vld [vmem:[%s871 + $0x38] sm:$0xff]
      %v880 = vld [vmem:[%s871 + $0x40] sm:$0xff]
      %v881 = vld [vmem:[%s871 + $0x48] sm:$0xff]
      %v882 = vld [vmem:[%s871 + $0x50] sm:$0xff]
      %v883 = vld [vmem:[%s871 + $0x58] sm:$0xff]
      %v884 = vld [vmem:[%s871 + $0x60] sm:$0xff]
      %v885 = vld [vmem:[%s871 + $0x68] sm:$0xff]
      %v886 = vld [vmem:[%s871 + $0x70] sm:$0xff]
      %v887 = vld [vmem:[%s871 + $0x78] sm:$0xff]
      %v888 = vld [vmem:[%s871 + $0x80] sm:$0xff]
      %v889 = vld [vmem:[%s871 + $0x88] sm:$0xff]
      %v890 = vld [vmem:[%s871 + $0x90] sm:$0xff]
      %v891 = vld [vmem:[%s871 + $0x98] sm:$0xff]
      %v892 = vld [vmem:[%s871 + $0xa0] sm:$0xff]
      %v893 = vld [vmem:[%s871 + $0xa8] sm:$0xff]
      %v894 = vld [vmem:[%s871 + $0xb0] sm:$0xff]
      %v895 = vld [vmem:[%s871 + $0xb8] sm:$0xff]
      %v896 = vld [vmem:[%s871 + $0xc0] sm:$0xff]
      %v897 = vld [vmem:[%s871 + $0xc8] sm:$0xff]
      %v898 = vld [vmem:[%s871 + $0xd0] sm:$0xff]
      %v899 = vld [vmem:[%s871 + $0xd8] sm:$0xff]
      %v900 = vld [vmem:[%s871 + $0xe0] sm:$0xff]
      %v901 = vld [vmem:[%s871 + $0xe8] sm:$0xff]
      %v902 = vld [vmem:[%s871 + $0xf0] sm:$0xff]
      %v903 = vld [vmem:[%s871 + $0xf8] sm:$0xff]
      %v904 = vld [vmem:[%s871 + $0x100] sm:$0xff]
      %v905 = vld [vmem:[%s871 + $0x108] sm:$0xff]
      %v906 = vld [vmem:[%s871 + $0x110] sm:$0xff]
      %v907 = vld [vmem:[%s871 + $0x118] sm:$0xff]
      %v908 = vld [vmem:[%s871 + $0x120] sm:$0xff]
      %v909 = vld [vmem:[%s871 + $0x128] sm:$0xff]
      %v910 = vld [vmem:[%s871 + $0x130] sm:$0xff]
      %v911 = vld [vmem:[%s871 + $0x138] sm:$0xff]
      %s912 = scalar_lea.vmem %s4, 2
      %v913 = vld [vmem:[%s912] sm:$0x1]
      %914 = vst.msk [vmem:[#allocation4 + $0x2] sm:$0xff] %vm437, %v870
      %v915 = vld [vmem:[#allocation4] sm:$0xff]
      %916 = vst.msk [vmem:[#allocation7] sm:$0xff] %vm437, %v915
      %v917 = vld [vmem:[#allocation4 + $0x1] sm:$0xff]
      %919 = vrot.lane.b32.xlu0 %v917, 64
      %v920 = vpop.permute.xlu0 %919
      %922 = vst.msk [vmem:[#allocation7] sm:$0xff] %vm454, %v920
      %v923 = vld [vmem:[#allocation4 + $0x2] sm:$0xff]
      %924 = vst.msk [vmem:[#allocation7 + $0x8] sm:$0xff] %vm437, %v923
      %v925 = vld [vmem:[#allocation4 + $0x3] sm:$0xff]
      %927 = vrot.lane.b32.xlu0 %v925, 64
      %v928 = vpop.permute.xlu0 %927
      %930 = vst.msk [vmem:[#allocation7 + $0x8] sm:$0xff] %vm454, %v928
      %v931 = vld [vmem:[#allocation4 + $0x4] sm:$0xff]
      %932 = vst.msk [vmem:[#allocation7 + $0x10] sm:$0xff] %vm437, %v931
      %v933 = vld [vmem:[#allocation7] sm:$0xff]
      %v934 = vld [vmem:[#allocation7 + $0x8] sm:$0xff]
      %v935 = vld [vmem:[#allocation7 + $0x10] sm:$0xff]
      %v937 = vlaneseq
      %v938 = vshrl.u32 %v937, 7
      %v939 = vsub.s32 0, %v938
      %v940 = vrot.slane %v913, %v939
      %v943 = vsel %vm437, %v935, 0
      %945 = vmatprep.subr.mxu0 0.0
      %946 = vmatpush1.msra.mxu0 %v872
      %947 = vmatprep.subr.mxu0 0.0
      %948 = vmatpush1.msra.mxu0 %v873
      %949 = vmatprep.subr.mxu0 0.0
      %950 = vmatpush1.msra.mxu0 %v874
      %951 = vmatprep.subr.mxu0 0.0
      %952 = vmatpush1.msra.mxu0 %v875
      %953 = vmatprep.subr.mxu0 0.0
      %954 = vmatpush1.msra.mxu0 %v876
      %955 = vmatprep.subr.mxu0 0.0
      %956 = vmatpush1.msra.mxu0 %v877
      %957 = vmatprep.subr.mxu0 0.0
      %958 = vmatpush1.msra.mxu0 %v878
      %959 = vmatprep.subr.mxu0 0.0
      %960 = vmatpush1.msra.mxu0 %v879
      %961 = vmatprep.subr.mxu0 0.0
      %962 = vmatpush1.msra.mxu0 %v880
      %963 = vmatprep.subr.mxu0 0.0
      %964 = vmatpush1.msra.mxu0 %v881
      %965 = vmatprep.subr.mxu0 0.0
      %966 = vmatpush1.msra.mxu0 %v882
      %967 = vmatprep.subr.mxu0 0.0
      %968 = vmatpush1.msra.mxu0 %v883
      %969 = vmatprep.subr.mxu0 0.0
      %970 = vmatpush1.msra.mxu0 %v884
      %971 = vmatprep.subr.mxu0 0.0
      %972 = vmatpush1.msra.mxu0 %v885
      %973 = vmatprep.subr.mxu0 0.0
      %974 = vmatpush1.msra.mxu0 %v886
      %975 = vmatprep.subr.mxu0 0.0
      %976 = vmatpush1.msra.mxu0 %v887
      %977 = vmatprep.subr.mxu0 0.0
      %978 = vmatpush1.msra.mxu0 %v888
      %979 = vmatprep.subr.mxu0 0.0
      %980 = vmatpush1.msra.mxu0 %v889
      %981 = vmatprep.subr.mxu0 0.0
      %982 = vmatpush1.msra.mxu0 %v890
      %983 = vmatprep.subr.mxu0 0.0
      %984 = vmatpush1.msra.mxu0 %v891
      %985 = vmatprep.subr.mxu0 0.0
      %986 = vmatpush1.msra.mxu0 %v892
      %987 = vmatprep.subr.mxu0 0.0
      %988 = vmatpush1.msra.mxu0 %v893
      %989 = vmatprep.subr.mxu0 0.0
      %990 = vmatpush1.msra.mxu0 %v894
      %991 = vmatprep.subr.mxu0 0.0
      %992 = vmatpush1.msra.mxu0 %v895
      %993 = vmatprep.subr.mxu0 0.0
      %994 = vmatpush1.msra.mxu0 %v896
      %995 = vmatprep.subr.mxu0 0.0
      %996 = vmatpush1.msra.mxu0 %v897
      %997 = vmatprep.subr.mxu0 0.0
      %998 = vmatpush1.msra.mxu0 %v898
      %999 = vmatprep.subr.mxu0 0.0
      %1000 = vmatpush1.msra.mxu0 %v899
      %1001 = vmatprep.subr.mxu0 0.0
      %1002 = vmatpush1.msra.mxu0 %v900
      %1003 = vmatprep.subr.mxu0 0.0
      %1004 = vmatpush1.msra.mxu0 %v901
      %1005 = vmatprep.subr.mxu0 0.0
      %1006 = vmatpush1.msra.mxu0 %v902
      %1007 = vmatprep.subr.mxu0 0.0
      %1008 = vmatpush1.msra.mxu0 %v903
      %1009 = vmatprep.mubr.f32.mxu0 %v934
      %1010 = vmatmul.mubr.f32.gmra.mrb[0].mxu0 %v933
      %v1011 = vpop.f32.mrb[0].mxu0
      %v1012 = vadd.f32 %v940, %v1011
      %v1013 = vpop.f32.mrb[0].mxu0
      %1014 = vdwg.mxu0
      %1015 = vmatprep.subr.mxu0 0.0
      %1016 = vmatpush1.msra.mxu0 %v904
      %1017 = vmatprep.subr.mxu0 0.0
      %1018 = vmatpush1.msra.mxu0 %v905
      %1019 = vmatprep.subr.mxu0 0.0
      %1020 = vmatpush1.msra.mxu0 %v906
      %1021 = vmatprep.subr.mxu0 0.0
      %1022 = vmatpush1.msra.mxu0 %v907
      %1023 = vmatprep.subr.mxu0 0.0
      %1024 = vmatpush1.msra.mxu0 %v908
      %1025 = vmatprep.subr.mxu0 0.0
      %1026 = vmatpush1.msra.mxu0 %v909
      %1027 = vmatprep.subr.mxu0 0.0
      %1028 = vmatpush1.msra.mxu0 %v910
      %1029 = vmatprep.subr.mxu0 0.0
      %1030 = vmatpush1.msra.mxu0 %v911
      %1031 = vmatprep.subr.mxu0 0.0
      %1032 = vmatpush1.msra.mxu0 0.0
      %1033 = vmatprep.subr.mxu0 0.0
      %1034 = vmatpush1.msra.mxu0 0.0
      %1035 = vmatprep.subr.mxu0 0.0
      %1036 = vmatpush1.msra.mxu0 0.0
      %1037 = vmatprep.subr.mxu0 0.0
      %1038 = vmatpush1.msra.mxu0 0.0
      %1039 = vmatprep.subr.mxu0 0.0
      %1040 = vmatpush1.msra.mxu0 0.0
      %1041 = vmatprep.subr.mxu0 0.0
      %1042 = vmatpush1.msra.mxu0 0.0
      %1043 = vmatprep.subr.mxu0 0.0
      %1044 = vmatpush1.msra.mxu0 0.0
      %1045 = vmatprep.subr.mxu0 0.0
      %1046 = vmatpush1.msra.mxu0 0.0
      %1047 = vmatprep.subr.mxu0 0.0
      %1048 = vmatpush1.msra.mxu0 0.0
      %1049 = vmatprep.subr.mxu0 0.0
      %1050 = vmatpush1.msra.mxu0 0.0
      %1051 = vmatprep.subr.mxu0 0.0
      %1052 = vmatpush1.msra.mxu0 0.0
      %1053 = vmatprep.subr.mxu0 0.0
      %1054 = vmatpush1.msra.mxu0 0.0
      %1055 = vmatprep.subr.mxu0 0.0
      %1056 = vmatpush1.msra.mxu0 0.0
      %1057 = vmatprep.subr.mxu0 0.0
      %1058 = vmatpush1.msra.mxu0 0.0
      %1059 = vmatprep.subr.mxu0 0.0
      %1060 = vmatpush1.msra.mxu0 0.0
      %1061 = vmatprep.subr.mxu0 0.0
      %1062 = vmatpush1.msra.mxu0 0.0
      %1063 = vmatprep.subr.mxu0 0.0
      %1064 = vmatpush1.msra.mxu0 0.0
      %1065 = vmatprep.subr.mxu0 0.0
      %1066 = vmatpush1.msra.mxu0 0.0
      %1067 = vmatprep.subr.mxu0 0.0
      %1068 = vmatpush1.msra.mxu0 0.0
      %1069 = vmatprep.subr.mxu0 0.0
      %1070 = vmatpush1.msra.mxu0 0.0
      %1071 = vmatprep.subr.mxu0 0.0
      %1072 = vmatpush1.msra.mxu0 0.0
      %1073 = vmatprep.subr.mxu0 0.0
      %1074 = vmatpush1.msra.mxu0 0.0
      %1075 = vmatprep.subr.mxu0 0.0
      %1076 = vmatpush1.msra.mxu0 0.0
      %1077 = vmatprep.subr.mxu0 0.0
      %1078 = vmatpush1.msra.mxu0 0.0
      %1079 = vmatprep.mubr.f32.mxu0 0.0
      %1080 = vmatmul.mubr.f32.gmra.mrb[0].mxu0 %v943
      %v1081 = vpop.f32.mrb[0].mxu0
      %v1082 = vadd.f32 %v1012, %v1081
      %v1083 = vpop.f32.mrb[0].mxu0
      %1084 = vdwg.mxu0
      %v1085 = vmax.f32 %v1082, 0.0
      %1086 = vst.msk [vmem:[#allocation8 + $0x1] sm:$0xff] %vm437, %v1085
      %v1087 = vld [vmem:[#allocation8] ss:$2 sm:$0xf]
      %v1088 = vld [vmem:[%s650] ss:$2 sm:$0xf]
      %v1089 = vld [vmem:[%s652] ss:$2 sm:$0xf]
      %v1090 = vmax.f32 %v1087, %v1088
      %v1091 = vmax.f32 %v1090, %v1089
      %s1092 = scalar_lea.vmem %s3, 960
      %v1093 = vld [vmem:[%s1092] sm:$0xff]
      %v1094 = vld [vmem:[%s1092 + $0x8] sm:$0xff]
      %v1095 = vld [vmem:[%s1092 + $0x10] sm:$0xff]
      %v1096 = vld [vmem:[%s1092 + $0x18] sm:$0xff]
      %v1097 = vld [vmem:[%s1092 + $0x20] sm:$0xff]
      %v1098 = vld [vmem:[%s1092 + $0x28] sm:$0xff]
      %v1099 = vld [vmem:[%s1092 + $0x30] sm:$0xff]
      %v1100 = vld [vmem:[%s1092 + $0x38] sm:$0xff]
      %v1101 = vld [vmem:[%s1092 + $0x40] sm:$0xff]
      %v1102 = vld [vmem:[%s1092 + $0x48] sm:$0xff]
      %v1103 = vld [vmem:[%s1092 + $0x50] sm:$0xff]
      %v1104 = vld [vmem:[%s1092 + $0x58] sm:$0xff]
      %v1105 = vld [vmem:[%s1092 + $0x60] sm:$0xff]
      %v1106 = vld [vmem:[%s1092 + $0x68] sm:$0xff]
      %v1107 = vld [vmem:[%s1092 + $0x70] sm:$0xff]
      %v1108 = vld [vmem:[%s1092 + $0x78] sm:$0xff]
      %v1109 = vld [vmem:[%s1092 + $0x80] sm:$0xff]
      %v1110 = vld [vmem:[%s1092 + $0x88] sm:$0xff]
      %v1111 = vld [vmem:[%s1092 + $0x90] sm:$0xff]
      %v1112 = vld [vmem:[%s1092 + $0x98] sm:$0xff]
      %v1113 = vld [vmem:[%s1092 + $0xa0] sm:$0xff]
      %v1114 = vld [vmem:[%s1092 + $0xa8] sm:$0xff]
      %v1115 = vld [vmem:[%s1092 + $0xb0] sm:$0xff]
      %v1116 = vld [vmem:[%s1092 + $0xb8] sm:$0xff]
      %v1117 = vld [vmem:[%s1092 + $0xc0] sm:$0xff]
      %v1118 = vld [vmem:[%s1092 + $0xc8] sm:$0xff]
      %v1119 = vld [vmem:[%s1092 + $0xd0] sm:$0xff]
      %v1120 = vld [vmem:[%s1092 + $0xd8] sm:$0xff]
      %v1121 = vld [vmem:[%s1092 + $0xe0] sm:$0xff]
      %v1122 = vld [vmem:[%s1092 + $0xe8] sm:$0xff]
      %v1123 = vld [vmem:[%s1092 + $0xf0] sm:$0xff]
      %v1124 = vld [vmem:[%s1092 + $0xf8] sm:$0xff]
      %v1125 = vld [vmem:[%s1092 + $0x100] sm:$0xff]
      %v1126 = vld [vmem:[%s1092 + $0x108] sm:$0xff]
      %v1127 = vld [vmem:[%s1092 + $0x110] sm:$0xff]
      %v1128 = vld [vmem:[%s1092 + $0x118] sm:$0xff]
      %v1129 = vld [vmem:[%s1092 + $0x120] sm:$0xff]
      %v1130 = vld [vmem:[%s1092 + $0x128] sm:$0xff]
      %v1131 = vld [vmem:[%s1092 + $0x130] sm:$0xff]
      %v1132 = vld [vmem:[%s1092 + $0x138] sm:$0xff]
      %s1133 = scalar_lea.vmem %s4, 3
      %v1134 = vld [vmem:[%s1133] sm:$0x1]
      %vm1135 = vcmask 519168
      %1136 = vst.msk [vmem:[#allocation5 + $0x2] sm:$0xf] %vm1135, %v1091
      %v1137 = vld [vmem:[#allocation5] sm:$0xf]
      %1138 = vst.msk [vmem:[#allocation7] sm:$0xf] %vm1135, %v1137
      %v1139 = vld [vmem:[#allocation5 + $0x1] sm:$0xf]
      %1141 = vrot.lane.b32.xlu0 %v1139, 64
      %v1142 = vpop.permute.xlu0 %1141
      %vm1144 = vcmask 1043968
      %1145 = vst.msk [vmem:[#allocation7] sm:$0xf] %vm1144, %v1142
      %v1146 = vld [vmem:[#allocation5 + $0x2] sm:$0xf]
      %1147 = vst.msk [vmem:[#allocation7 + $0x8] sm:$0xf] %vm1135, %v1146
      %v1148 = vld [vmem:[#allocation5 + $0x3] sm:$0xf]
      %1150 = vrot.lane.b32.xlu0 %v1148, 64
      %v1151 = vpop.permute.xlu0 %1150
      %1153 = vst.msk [vmem:[#allocation7 + $0x8] sm:$0xf] %vm1144, %v1151
      %v1154 = vld [vmem:[#allocation5 + $0x4] sm:$0xf]
      %1155 = vst.msk [vmem:[#allocation7 + $0x10] sm:$0xf] %vm1135, %v1154
      %v1156 = vld [vmem:[#allocation7] sm:$0xf]
      %v1157 = vld [vmem:[#allocation7 + $0x8] sm:$0xf]
      %v1158 = vld [vmem:[#allocation7 + $0x10] sm:$0xf]
      %v1160 = vlaneseq
      %v1161 = vshrl.u32 %v1160, 7
      %v1162 = vsub.s32 0, %v1161
      %v1163 = vrot.slane %v1134, %v1162
      %v1166 = vsel %vm437, %v1158, 0
      %1168 = vmatprep.subr.mxu0 0.0
      %1169 = vmatpush1.msra.mxu0 %v1093
      %1170 = vmatprep.subr.mxu0 0.0
      %1171 = vmatpush1.msra.mxu0 %v1094
      %1172 = vmatprep.subr.mxu0 0.0
      %1173 = vmatpush1.msra.mxu0 %v1095
      %1174 = vmatprep.subr.mxu0 0.0
      %1175 = vmatpush1.msra.mxu0 %v1096
      %1176 = vmatprep.subr.mxu0 0.0
      %1177 = vmatpush1.msra.mxu0 %v1097
      %1178 = vmatprep.subr.mxu0 0.0
      %1179 = vmatpush1.msra.mxu0 %v1098
      %1180 = vmatprep.subr.mxu0 0.0
      %1181 = vmatpush1.msra.mxu0 %v1099
      %1182 = vmatprep.subr.mxu0 0.0
      %1183 = vmatpush1.msra.mxu0 %v1100
      %1184 = vmatprep.subr.mxu0 0.0
      %1185 = vmatpush1.msra.mxu0 %v1101
      %1186 = vmatprep.subr.mxu0 0.0
      %1187 = vmatpush1.msra.mxu0 %v1102
      %1188 = vmatprep.subr.mxu0 0.0
      %1189 = vmatpush1.msra.mxu0 %v1103
      %1190 = vmatprep.subr.mxu0 0.0
      %1191 = vmatpush1.msra.mxu0 %v1104
      %1192 = vmatprep.subr.mxu0 0.0
      %1193 = vmatpush1.msra.mxu0 %v1105
      %1194 = vmatprep.subr.mxu0 0.0
      %1195 = vmatpush1.msra.mxu0 %v1106
      %1196 = vmatprep.subr.mxu0 0.0
      %1197 = vmatpush1.msra.mxu0 %v1107
      %1198 = vmatprep.subr.mxu0 0.0
      %1199 = vmatpush1.msra.mxu0 %v1108
      %1200 = vmatprep.subr.mxu0 0.0
      %1201 = vmatpush1.msra.mxu0 %v1109
      %1202 = vmatprep.subr.mxu0 0.0
      %1203 = vmatpush1.msra.mxu0 %v1110
      %1204 = vmatprep.subr.mxu0 0.0
      %1205 = vmatpush1.msra.mxu0 %v1111
      %1206 = vmatprep.subr.mxu0 0.0
      %1207 = vmatpush1.msra.mxu0 %v1112
      %1208 = vmatprep.subr.mxu0 0.0
      %1209 = vmatpush1.msra.mxu0 %v1113
      %1210 = vmatprep.subr.mxu0 0.0
      %1211 = vmatpush1.msra.mxu0 %v1114
      %1212 = vmatprep.subr.mxu0 0.0
      %1213 = vmatpush1.msra.mxu0 %v1115
      %1214 = vmatprep.subr.mxu0 0.0
      %1215 = vmatpush1.msra.mxu0 %v1116
      %1216 = vmatprep.subr.mxu0 0.0
      %1217 = vmatpush1.msra.mxu0 %v1117
      %1218 = vmatprep.subr.mxu0 0.0
      %1219 = vmatpush1.msra.mxu0 %v1118
      %1220 = vmatprep.subr.mxu0 0.0
      %1221 = vmatpush1.msra.mxu0 %v1119
      %1222 = vmatprep.subr.mxu0 0.0
      %1223 = vmatpush1.msra.mxu0 %v1120
      %1224 = vmatprep.subr.mxu0 0.0
      %1225 = vmatpush1.msra.mxu0 %v1121
      %1226 = vmatprep.subr.mxu0 0.0
      %1227 = vmatpush1.msra.mxu0 %v1122
      %1228 = vmatprep.subr.mxu0 0.0
      %1229 = vmatpush1.msra.mxu0 %v1123
      %1230 = vmatprep.subr.mxu0 0.0
      %1231 = vmatpush1.msra.mxu0 %v1124
      %1232 = vmatprep.mubr.f32.mxu0 %v1157
      %1233 = vmatmul.mubr.f32.gmra.mrb[0].mxu0 %v1156
      %v1234 = vpop.f32.mrb[0].mxu0
      %v1235 = vadd.f32 %v1163, %v1234
      %v1236 = vpop.f32.mrb[0].mxu0
      %1237 = vdwg.mxu0
      %1238 = vmatprep.subr.mxu0 0.0
      %1239 = vmatpush1.msra.mxu0 %v1125
      %1240 = vmatprep.subr.mxu0 0.0
      %1241 = vmatpush1.msra.mxu0 %v1126
      %1242 = vmatprep.subr.mxu0 0.0
      %1243 = vmatpush1.msra.mxu0 %v1127
      %1244 = vmatprep.subr.mxu0 0.0
      %1245 = vmatpush1.msra.mxu0 %v1128
      %1246 = vmatprep.subr.mxu0 0.0
      %1247 = vmatpush1.msra.mxu0 %v1129
      %1248 = vmatprep.subr.mxu0 0.0
      %1249 = vmatpush1.msra.mxu0 %v1130
      %1250 = vmatprep.subr.mxu0 0.0
      %1251 = vmatpush1.msra.mxu0 %v1131
      %1252 = vmatprep.subr.mxu0 0.0
      %1253 = vmatpush1.msra.mxu0 %v1132
      %1254 = vmatprep.subr.mxu0 0.0
      %1255 = vmatpush1.msra.mxu0 0.0
      %1256 = vmatprep.subr.mxu0 0.0
      %1257 = vmatpush1.msra.mxu0 0.0
      %1258 = vmatprep.subr.mxu0 0.0
      %1259 = vmatpush1.msra.mxu0 0.0
      %1260 = vmatprep.subr.mxu0 0.0
      %1261 = vmatpush1.msra.mxu0 0.0
      %1262 = vmatprep.subr.mxu0 0.0
      %1263 = vmatpush1.msra.mxu0 0.0
      %1264 = vmatprep.subr.mxu0 0.0
      %1265 = vmatpush1.msra.mxu0 0.0
      %1266 = vmatprep.subr.mxu0 0.0
      %1267 = vmatpush1.msra.mxu0 0.0
      %1268 = vmatprep.subr.mxu0 0.0
      %1269 = vmatpush1.msra.mxu0 0.0
      %1270 = vmatprep.subr.mxu0 0.0
      %1271 = vmatpush1.msra.mxu0 0.0
      %1272 = vmatprep.subr.mxu0 0.0
      %1273 = vmatpush1.msra.mxu0 0.0
      %1274 = vmatprep.subr.mxu0 0.0
      %1275 = vmatpush1.msra.mxu0 0.0
      %1276 = vmatprep.subr.mxu0 0.0
      %1277 = vmatpush1.msra.mxu0 0.0
      %1278 = vmatprep.subr.mxu0 0.0
      %1279 = vmatpush1.msra.mxu0 0.0
      %1280 = vmatprep.subr.mxu0 0.0
      %1281 = vmatpush1.msra.mxu0 0.0
      %1282 = vmatprep.subr.mxu0 0.0
      %1283 = vmatpush1.msra.mxu0 0.0
      %1284 = vmatprep.subr.mxu0 0.0
      %1285 = vmatpush1.msra.mxu0 0.0
      %1286 = vmatprep.subr.mxu0 0.0
      %1287 = vmatpush1.msra.mxu0 0.0
      %1288 = vmatprep.subr.mxu0 0.0
      %1289 = vmatpush1.msra.mxu0 0.0
      %1290 = vmatprep.subr.mxu0 0.0
      %1291 = vmatpush1.msra.mxu0 0.0
      %1292 = vmatprep.subr.mxu0 0.0
      %1293 = vmatpush1.msra.mxu0 0.0
      %1294 = vmatprep.subr.mxu0 0.0
      %1295 = vmatpush1.msra.mxu0 0.0
      %1296 = vmatprep.subr.mxu0 0.0
      %1297 = vmatpush1.msra.mxu0 0.0
      %1298 = vmatprep.subr.mxu0 0.0
      %1299 = vmatpush1.msra.mxu0 0.0
      %1300 = vmatprep.subr.mxu0 0.0
      %1301 = vmatpush1.msra.mxu0 0.0
      %1302 = vmatprep.mubr.f32.mxu0 0.0
      %1303 = vmatmul.mubr.f32.gmra.mrb[0].mxu0 %v1166
      %v1304 = vpop.f32.mrb[0].mxu0
      %v1305 = vadd.f32 %v1235, %v1304
      %v1306 = vpop.f32.mrb[0].mxu0
      %1307 = vdwg.mxu0
      %v1308 = vmax.f32 %v1305, 0.0
      %s1309 = scalar_lea.vmem %s3, 1280
      %v1310 = vld [vmem:[%s1309] sm:$0xff]
      %v1311 = vld [vmem:[%s1309 + $0x8] sm:$0xff]
      %v1312 = vld [vmem:[%s1309 + $0x10] sm:$0xff]
      %v1313 = vld [vmem:[%s1309 + $0x18] sm:$0xff]
      %v1314 = vld [vmem:[%s1309 + $0x20] sm:$0xff]
      %v1315 = vld [vmem:[%s1309 + $0x28] sm:$0xff]
      %v1316 = vld [vmem:[%s1309 + $0x30] sm:$0xff]
      %v1317 = vld [vmem:[%s1309 + $0x38] sm:$0xff]
      %v1318 = vld [vmem:[%s1309 + $0x40] sm:$0xff]
      %v1319 = vld [vmem:[%s1309 + $0x48] sm:$0xff]
      %v1320 = vld [vmem:[%s1309 + $0x50] sm:$0xff]
      %v1321 = vld [vmem:[%s1309 + $0x58] sm:$0xff]
      %v1322 = vld [vmem:[%s1309 + $0x60] sm:$0xff]
      %v1323 = vld [vmem:[%s1309 + $0x68] sm:$0xff]
      %v1324 = vld [vmem:[%s1309 + $0x70] sm:$0xff]
      %v1325 = vld [vmem:[%s1309 + $0x78] sm:$0xff]
      %v1326 = vld [vmem:[%s1309 + $0x80] sm:$0xff]
      %v1327 = vld [vmem:[%s1309 + $0x88] sm:$0xff]
      %v1328 = vld [vmem:[%s1309 + $0x90] sm:$0xff]
      %v1329 = vld [vmem:[%s1309 + $0x98] sm:$0xff]
      %v1330 = vld [vmem:[%s1309 + $0xa0] sm:$0xff]
      %v1331 = vld [vmem:[%s1309 + $0xa8] sm:$0xff]
      %v1332 = vld [vmem:[%s1309 + $0xb0] sm:$0xff]
      %v1333 = vld [vmem:[%s1309 + $0xb8] sm:$0xff]
      %v1334 = vld [vmem:[%s1309 + $0xc0] sm:$0xff]
      %v1335 = vld [vmem:[%s1309 + $0xc8] sm:$0xff]
      %v1336 = vld [vmem:[%s1309 + $0xd0] sm:$0xff]
      %v1337 = vld [vmem:[%s1309 + $0xd8] sm:$0xff]
      %v1338 = vld [vmem:[%s1309 + $0xe0] sm:$0xff]
      %v1339 = vld [vmem:[%s1309 + $0xe8] sm:$0xff]
      %v1340 = vld [vmem:[%s1309 + $0xf0] sm:$0xff]
      %v1341 = vld [vmem:[%s1309 + $0xf8] sm:$0xff]
      %v1342 = vld [vmem:[%s1309 + $0x100] sm:$0xff]
      %v1343 = vld [vmem:[%s1309 + $0x108] sm:$0xff]
      %v1344 = vld [vmem:[%s1309 + $0x110] sm:$0xff]
      %v1345 = vld [vmem:[%s1309 + $0x118] sm:$0xff]
      %v1346 = vld [vmem:[%s1309 + $0x120] sm:$0xff]
      %v1347 = vld [vmem:[%s1309 + $0x128] sm:$0xff]
      %v1348 = vld [vmem:[%s1309 + $0x130] sm:$0xff]
      %v1349 = vld [vmem:[%s1309 + $0x138] sm:$0xff]
      %s1350 = scalar_lea.vmem %s4, 4
      %v1351 = vld [vmem:[%s1350] sm:$0x1]
      %1352 = vst.msk [vmem:[#allocation5 + $0x2] sm:$0xf] %vm1135, %v1308
      %v1353 = vld [vmem:[#allocation5] sm:$0xf]
      %1354 = vst.msk [vmem:[#allocation7] sm:$0xf] %vm1135, %v1353
      %v1355 = vld [vmem:[#allocation5 + $0x1] sm:$0xf]
      %1357 = vrot.lane.b32.xlu0 %v1355, 64
      %v1358 = vpop.permute.xlu0 %1357
      %1360 = vst.msk [vmem:[#allocation7] sm:$0xf] %vm1144, %v1358
      %v1361 = vld [vmem:[#allocation5 + $0x2] sm:$0xf]
      %1362 = vst.msk [vmem:[#allocation7 + $0x8] sm:$0xf] %vm1135, %v1361
      %v1363 = vld [vmem:[#allocation5 + $0x3] sm:$0xf]
      %1365 = vrot.lane.b32.xlu0 %v1363, 64
      %v1366 = vpop.permute.xlu0 %1365
      %1368 = vst.msk [vmem:[#allocation7 + $0x8] sm:$0xf] %vm1144, %v1366
      %v1369 = vld [vmem:[#allocation5 + $0x4] sm:$0xf]
      %1370 = vst.msk [vmem:[#allocation7 + $0x10] sm:$0xf] %vm1135, %v1369
      %v1371 = vld [vmem:[#allocation7] sm:$0xf]
      %v1372 = vld [vmem:[#allocation7 + $0x8] sm:$0xf]
      %v1373 = vld [vmem:[#allocation7 + $0x10] sm:$0xf]
      %v1375 = vlaneseq
      %v1376 = vshrl.u32 %v1375, 7
      %v1377 = vsub.s32 0, %v1376
      %v1378 = vrot.slane %v1351, %v1377
      %v1381 = vsel %vm437, %v1373, 0
      %1383 = vmatprep.subr.mxu0 0.0
      %1384 = vmatpush1.msra.mxu0 %v1310
      %1385 = vmatprep.subr.mxu0 0.0
      %1386 = vmatpush1.msra.mxu0 %v1311
      %1387 = vmatprep.subr.mxu0 0.0
      %1388 = vmatpush1.msra.mxu0 %v1312
      %1389 = vmatprep.subr.mxu0 0.0
      %1390 = vmatpush1.msra.mxu0 %v1313
      %1391 = vmatprep.subr.mxu0 0.0
      %1392 = vmatpush1.msra.mxu0 %v1314
      %1393 = vmatprep.subr.mxu0 0.0
      %1394 = vmatpush1.msra.mxu0 %v1315
      %1395 = vmatprep.subr.mxu0 0.0
      %1396 = vmatpush1.msra.mxu0 %v1316
      %1397 = vmatprep.subr.mxu0 0.0
      %1398 = vmatpush1.msra.mxu0 %v1317
      %1399 = vmatprep.subr.mxu0 0.0
      %1400 = vmatpush1.msra.mxu0 %v1318
      %1401 = vmatprep.subr.mxu0 0.0
      %1402 = vmatpush1.msra.mxu0 %v1319
      %1403 = vmatprep.subr.mxu0 0.0
      %1404 = vmatpush1.msra.mxu0 %v1320
      %1405 = vmatprep.subr.mxu0 0.0
      %1406 = vmatpush1.msra.mxu0 %v1321
      %1407 = vmatprep.subr.mxu0 0.0
      %1408 = vmatpush1.msra.mxu0 %v1322
      %1409 = vmatprep.subr.mxu0 0.0
      %1410 = vmatpush1.msra.mxu0 %v1323
      %1411 = vmatprep.subr.mxu0 0.0
      %1412 = vmatpush1.msra.mxu0 %v1324
      %1413 = vmatprep.subr.mxu0 0.0
      %1414 = vmatpush1.msra.mxu0 %v1325
      %1415 = vmatprep.subr.mxu0 0.0
      %1416 = vmatpush1.msra.mxu0 %v1326
      %1417 = vmatprep.subr.mxu0 0.0
      %1418 = vmatpush1.msra.mxu0 %v1327
      %1419 = vmatprep.subr.mxu0 0.0
      %1420 = vmatpush1.msra.mxu0 %v1328
      %1421 = vmatprep.subr.mxu0 0.0
      %1422 = vmatpush1.msra.mxu0 %v1329
      %1423 = vmatprep.subr.mxu0 0.0
      %1424 = vmatpush1.msra.mxu0 %v1330
      %1425 = vmatprep.subr.mxu0 0.0
      %1426 = vmatpush1.msra.mxu0 %v1331
      %1427 = vmatprep.subr.mxu0 0.0
      %1428 = vmatpush1.msra.mxu0 %v1332
      %1429 = vmatprep.subr.mxu0 0.0
      %1430 = vmatpush1.msra.mxu0 %v1333
      %1431 = vmatprep.subr.mxu0 0.0
      %1432 = vmatpush1.msra.mxu0 %v1334
      %1433 = vmatprep.subr.mxu0 0.0
      %1434 = vmatpush1.msra.mxu0 %v1335
      %1435 = vmatprep.subr.mxu0 0.0
      %1436 = vmatpush1.msra.mxu0 %v1336
      %1437 = vmatprep.subr.mxu0 0.0
      %1438 = vmatpush1.msra.mxu0 %v1337
      %1439 = vmatprep.subr.mxu0 0.0
      %1440 = vmatpush1.msra.mxu0 %v1338
      %1441 = vmatprep.subr.mxu0 0.0
      %1442 = vmatpush1.msra.mxu0 %v1339
      %1443 = vmatprep.subr.mxu0 0.0
      %1444 = vmatpush1.msra.mxu0 %v1340
      %1445 = vmatprep.subr.mxu0 0.0
      %1446 = vmatpush1.msra.mxu0 %v1341
      %1447 = vmatprep.mubr.f32.mxu0 %v1372
      %1448 = vmatmul.mubr.f32.gmra.mrb[0].mxu0 %v1371
      %v1449 = vpop.f32.mrb[0].mxu0
      %v1450 = vadd.f32 %v1378, %v1449
      %v1451 = vpop.f32.mrb[0].mxu0
      %1452 = vdwg.mxu0
      %1453 = vmatprep.subr.mxu0 0.0
      %1454 = vmatpush1.msra.mxu0 %v1342
      %1455 = vmatprep.subr.mxu0 0.0
      %1456 = vmatpush1.msra.mxu0 %v1343
      %1457 = vmatprep.subr.mxu0 0.0
      %1458 = vmatpush1.msra.mxu0 %v1344
      %1459 = vmatprep.subr.mxu0 0.0
      %1460 = vmatpush1.msra.mxu0 %v1345
      %1461 = vmatprep.subr.mxu0 0.0
      %1462 = vmatpush1.msra.mxu0 %v1346
      %1463 = vmatprep.subr.mxu0 0.0
      %1464 = vmatpush1.msra.mxu0 %v1347
      %1465 = vmatprep.subr.mxu0 0.0
      %1466 = vmatpush1.msra.mxu0 %v1348
      %1467 = vmatprep.subr.mxu0 0.0
      %1468 = vmatpush1.msra.mxu0 %v1349
      %1469 = vmatprep.subr.mxu0 0.0
      %1470 = vmatpush1.msra.mxu0 0.0
      %1471 = vmatprep.subr.mxu0 0.0
      %1472 = vmatpush1.msra.mxu0 0.0
      %1473 = vmatprep.subr.mxu0 0.0
      %1474 = vmatpush1.msra.mxu0 0.0
      %1475 = vmatprep.subr.mxu0 0.0
      %1476 = vmatpush1.msra.mxu0 0.0
      %1477 = vmatprep.subr.mxu0 0.0
      %1478 = vmatpush1.msra.mxu0 0.0
      %1479 = vmatprep.subr.mxu0 0.0
      %1480 = vmatpush1.msra.mxu0 0.0
      %1481 = vmatprep.subr.mxu0 0.0
      %1482 = vmatpush1.msra.mxu0 0.0
      %1483 = vmatprep.subr.mxu0 0.0
      %1484 = vmatpush1.msra.mxu0 0.0
      %1485 = vmatprep.subr.mxu0 0.0
      %1486 = vmatpush1.msra.mxu0 0.0
      %1487 = vmatprep.subr.mxu0 0.0
      %1488 = vmatpush1.msra.mxu0 0.0
      %1489 = vmatprep.subr.mxu0 0.0
      %1490 = vmatpush1.msra.mxu0 0.0
      %1491 = vmatprep.subr.mxu0 0.0
      %1492 = vmatpush1.msra.mxu0 0.0
      %1493 = vmatprep.subr.mxu0 0.0
      %1494 = vmatpush1.msra.mxu0 0.0
      %1495 = vmatprep.subr.mxu0 0.0
      %1496 = vmatpush1.msra.mxu0 0.0
      %1497 = vmatprep.subr.mxu0 0.0
      %1498 = vmatpush1.msra.mxu0 0.0
      %1499 = vmatprep.subr.mxu0 0.0
      %1500 = vmatpush1.msra.mxu0 0.0
      %1501 = vmatprep.subr.mxu0 0.0
      %1502 = vmatpush1.msra.mxu0 0.0
      %1503 = vmatprep.subr.mxu0 0.0
      %1504 = vmatpush1.msra.mxu0 0.0
      %1505 = vmatprep.subr.mxu0 0.0
      %1506 = vmatpush1.msra.mxu0 0.0
      %1507 = vmatprep.subr.mxu0 0.0
      %1508 = vmatpush1.msra.mxu0 0.0
      %1509 = vmatprep.subr.mxu0 0.0
      %1510 = vmatpush1.msra.mxu0 0.0
      %1511 = vmatprep.subr.mxu0 0.0
      %1512 = vmatpush1.msra.mxu0 0.0
      %1513 = vmatprep.subr.mxu0 0.0
      %1514 = vmatpush1.msra.mxu0 0.0
      %1515 = vmatprep.subr.mxu0 0.0
      %1516 = vmatpush1.msra.mxu0 0.0
      %1517 = vmatprep.mubr.f32.mxu0 0.0
      %1518 = vmatmul.mubr.f32.gmra.mrb[0].mxu0 %v1381
      %v1519 = vpop.f32.mrb[0].mxu0
      %v1520 = vadd.f32 %v1450, %v1519
      %v1521 = vpop.f32.mrb[0].mxu0
      %1522 = vdwg.mxu0
      %v1523 = vmax.f32 %v1520, 0.0
      %1524 = vst.msk [vmem:[#allocation8 + $0x1] sm:$0xf] %vm1135, %v1523
      %v1525 = vld [vmem:[#allocation8] ss:$2 sm:$0x3]
      %v1526 = vld [vmem:[%s650] ss:$2 sm:$0x3]
      %v1527 = vld [vmem:[%s652] ss:$2 sm:$0x3]
      %v1528 = vmax.f32 %v1525, %v1526
      %v1529 = vmax.f32 %v1528, %v1527
      %1530 = vst.msk [vmem:[%s222] sm:$0x3] %vm226, %v1529
      %p1531 = scmp.lt.s32.totalorder %s16, 1
      %s1532 = scalar_select %p1531, %s16, 1
      %s1533 = smul.addr %s1532, 2
      %s1534 = scalar_lea.vmem %s5, %s1533
      // Predicated region
      $region41: #{yaonet_forward.2} parent=39 // pred_check
        %p1535 = pneg %p144
      $region42: #{yaonet_forward.2} parent=39 // pred_check_branch
        %1537 = sbr.rel (%p1535) target = $region44
      $region43: #{yaonet_forward.2} parent=39 // pred_region
        _
      $region44: #{yaonet_forward.2} parent=39 // pred_fallthru
        _
    $region40: #{yaonet_forward.2} parent=5 // pred_fallthru
      _
    %p1538 = scmp.le.s32.totalorder 2, %s11
    // Predicated region
    $region45: #{yaonet_forward.2} parent=5 // pred_check
      %p1539 = pneg %p1538
    $region46: #{yaonet_forward.2} parent=5 // pred_check_branch
      %1541 = sbr.rel (%p1539) target = $region48
    $region47: #{yaonet_forward.2} parent=5 // pred_region
      %s1542 = ssub.s32 %s11, 2
      // Predicated region
      $region49: #{yaonet_forward.2} parent=47 // pred_check
        %p1543 = pneg %p150
      $region50: #{yaonet_forward.2} parent=47 // pred_check_branch
        %1545 = sbr.rel (%p1543) target = $region52
      $region51: #{yaonet_forward.2} parent=47 // pred_region
        %p1546 = scmp.lt.s32.totalorder %s17, 1
        %s1547 = scalar_select %p1546, %s17, 1
        %s1548 = smul.addr %s1547, 2
        %s1549 = scalar_lea.vmem %s5, %s1548
      $region52: #{yaonet_forward.2} parent=47 // pred_fallthru
        _
    $region48: #{yaonet_forward.2} parent=5 // pred_fallthru
      _
  $region6: #{yaonet_forward.2} parent=0 // loop_footer
    %s15 = sadd.s32 1, %s11
  $region7: #{yaonet_forward.2} parent=0 // loop_footer_branch
    %10 = sbr.rel target = $region3
  $region8: #{yaonet_forward.2} parent=0 // loop_exit
    _

</llo_original>
